<compile_context>
chip_gen: v5e
topology: v5e:2x2
jax: 0.10.0
libtpu: 0.0.40
codegen_flags: <defaults>
</compile_context>

<pallas_src>
import functools

import jax
import jax.numpy as jnp
from jax.experimental import pallas as pl
from jax.experimental.pallas import tpu as pltpu

EPS = 1e-5  # InstanceNorm2d default eps


def _round_up(x, m):
    return ((x + m - 1) // m) * m


def _vmem_limit_bytes():
    # ~25% headroom for compiler scratch / double buffering (review: never
    # request all of v7x's 64 MiB).  Conservative fallback if query fails.
    try:
        cap = int(pltpu.get_tpu_info().vmem_capacity_bytes)
        return min((cap * 3) // 4, 96 * 1024 * 1024)
    except Exception:
        return 48 * 1024 * 1024


VMEM_LIMIT = _vmem_limit_bytes()
PTILE_TRIGGER = VMEM_LIMIT // 2           # switch to P-tiled path above this


# ---------------------------------------------------------------------------
# Fused single-block kernel: matmul -> InstanceNorm (two-pass) -> act -> +res
# ---------------------------------------------------------------------------
def _fused_conv_kernel(p_ref, w_ref, *rest, act, has_res):
    idx = 0
    if has_res:
        r_ref = rest[idx]; idx += 1
    o_ref = rest[idx]

    # (P, KCpad)bf16 @ (KCpad, Cpad)bf16 -> f32 accumulation on the MXU.
    y = jnp.dot(p_ref[0], w_ref[...], preferred_element_type=jnp.float32)
    P = y.shape[0]

    # Two-pass InstanceNorm (affine=False): mean first, then centered variance.
    mean = jnp.sum(y, axis=0, keepdims=True) * (1.0 / P)
    d = y - mean
    var = jnp.sum(d * d, axis=0, keepdims=True) * (1.0 / P)
    out = d * jax.lax.rsqrt(var + EPS)

    if act == "relu":
        out = jnp.maximum(out, 0.0)
    if has_res:
        out = out + r_ref[0].astype(jnp.float32)

    o_ref[0] = out.astype(o_ref.dtype)          # bf16 store (half the bytes)


def fused_conv_matmul(patches, lp, residual=None):
    N, P, KCpad = patches.shape
    Cpad = lp["Cpad"]

    in_specs = [pl.BlockSpec((1, P, KCpad), lambda n: (n, 0, 0)),
                pl.BlockSpec((KCpad, Cpad), lambda n: (0, 0))]
    args = [patches, lp["w"]]

    has_res = residual is not None
    if has_res:
        in_specs.append(pl.BlockSpec((1, P, Cpad), lambda n: (n, 0, 0)))
        args.append(residual)

    kernel = functools.partial(_fused_conv_kernel, act=lp["act"], has_res=has_res)
    return pl.pallas_call(
        kernel,
        out_shape=jax.ShapeDtypeStruct((N, P, Cpad), jnp.bfloat16),
        grid=(N,),
        in_specs=in_specs,
        out_specs=pl.BlockSpec((1, P, Cpad), lambda n: (n, 0, 0)),
        compiler_params=pltpu.CompilerParams(
            dimension_semantics=("parallel",),
            vmem_limit_bytes=VMEM_LIMIT),
    )(*args)


# ---------------------------------------------------------------------------
# P-tiled path (two passes): matmul + shifted-moment accumulation, then
# normalize + act + residual.  Needed whenever a full (P, KCpad) block would
# not fit VMEM (real CycleGAN resolutions).
# ---------------------------------------------------------------------------
def _conv_stats_kernel(p_ref, w_ref, y_ref, st_ref):
    # stats rows: 0 = shift (tile-0 mean), 1 = sum(y-shift), 2 = sum((y-shift)^2)
    y = jnp.dot(p_ref[0], w_ref[...], preferred_element_type=jnp.float32)

    @pl.when(pl.program_id(1) == 0)
    def _():
        st_ref[0] = jnp.zeros(st_ref.shape[1:], st_ref.dtype)
        st_ref[0, 0:1, :] = jnp.sum(y, axis=0, keepdims=True) * (1.0 / y.shape[0])

    shift = st_ref[0, 0:1, :]
    d = y - shift
    st_ref[0, 1:2, :] += jnp.sum(d, axis=0, keepdims=True)
    st_ref[0, 2:3, :] += jnp.sum(d * d, axis=0, keepdims=True)
    y_ref[0] = y


def _conv_norm_kernel(y_ref, st_ref, *rest, act, has_res, inv_p):
    idx = 0
    if has_res:
        r_ref = rest[idx]; idx += 1
    o_ref = rest[idx]

    y = y_ref[0]                                  # (TP, Cpad) f32 (pre-norm)
    shift = st_ref[0, 0:1, :]
    m1 = st_ref[0, 1:2, :] * inv_p                # E[y - shift]
    var = jnp.maximum(st_ref[0, 2:3, :] * inv_p - m1 * m1, 0.0)
    out = (y - (shift + m1)) * jax.lax.rsqrt(var + EPS)

    if act == "relu":
        out = jnp.maximum(out, 0.0)
    if has_res:
        out = out + r_ref[0].astype(jnp.float32)
    o_ref[0] = out.astype(o_ref.dtype)


def _choose_tp(P, KCpad, Cpad, tp_max=None):
    if tp_max is None:
        per_row = 2 * (KCpad * 2) + 3 * (Cpad * 4) + 2 * (Cpad * 2)
        tp_max = max(8, (VMEM_LIMIT // 3) // per_row)
    for tp in range(min(P, tp_max), 0, -1):
        if P % tp == 0 and (tp % 8 == 0 or tp == P):
            return tp
    return P


def fused_conv_matmul_ptiled(patches, lp, residual=None, tp_max=None):
    N, P, KCpad = patches.shape
    Cpad = lp["Cpad"]
    TP = _choose_tp(P, KCpad, Cpad, tp_max=tp_max)
    PT = P // TP

    # Pass 1: matmul per tile + per-batch stats accumulation (P axis arbitrary).
    y_raw, stats = pl.pallas_call(
        _conv_stats_kernel,
        out_shape=(jax.ShapeDtypeStruct((N, P, Cpad), jnp.float32),
                   jax.ShapeDtypeStruct((N, 8, Cpad), jnp.float32)),
        grid=(N, PT),
        in_specs=[pl.BlockSpec((1, TP, KCpad), lambda n, p: (n, p, 0)),
                  pl.BlockSpec((KCpad, Cpad), lambda n, p: (0, 0))],
        out_specs=(pl.BlockSpec((1, TP, Cpad), lambda n, p: (n, p, 0)),
                   pl.BlockSpec((1, 8, Cpad), lambda n, p: (n, 0, 0))),
        compiler_params=pltpu.CompilerParams(
            dimension_semantics=("parallel", "arbitrary"),
            vmem_limit_bytes=VMEM_LIMIT),
    )(patches, lp["w"])

    # Pass 2: normalize + act + residual, fully parallel grid (v7x: 2 TCs).
    in_specs = [pl.BlockSpec((1, TP, Cpad), lambda n, p: (n, p, 0)),
                pl.BlockSpec((1, 8, Cpad), lambda n, p: (n, 0, 0))]
    args = [y_raw, stats]
    has_res = residual is not None
    if has_res:
        in_specs.append(pl.BlockSpec((1, TP, Cpad), lambda n, p: (n, p, 0)))
        args.append(residual)

    kernel = functools.partial(_conv_norm_kernel, act=lp["act"],
                               has_res=has_res, inv_p=1.0 / float(P))
    return pl.pallas_call(
        kernel,
        out_shape=jax.ShapeDtypeStruct((N, P, Cpad), jnp.bfloat16),
        grid=(N, PT),
        in_specs=in_specs,
        out_specs=pl.BlockSpec((1, TP, Cpad), lambda n, p: (n, p, 0)),
        compiler_params=pltpu.CompilerParams(
            dimension_semantics=("parallel", "parallel"),
            vmem_limit_bytes=VMEM_LIMIT),
    )(*args)


# ---------------------------------------------------------------------------
# Upsample kernel: ONE wide matmul over all 4 sub-pixel phases + IN + ReLU
# ---------------------------------------------------------------------------
def _fused_up_kernel(p_ref, w_ref, o_ref, *, cpad):
    y = jnp.dot(p_ref[0], w_ref[...], preferred_element_type=jnp.float32)  # (P, 4*Cpad)
    n = 4.0 * y.shape[0]

    def fold(v):   # (1, 4*Cpad) -> (1, Cpad): sum the 4 phase slabs per channel
        return (v[:, 0:cpad] + v[:, cpad:2 * cpad]
                + v[:, 2 * cpad:3 * cpad] + v[:, 3 * cpad:4 * cpad])

    mean_c = fold(jnp.sum(y, axis=0, keepdims=True)) * (1.0 / n)
    mean_w = jnp.concatenate([mean_c] * 4, axis=1)
    d = y - mean_w
    var_c = fold(jnp.sum(d * d, axis=0, keepdims=True)) * (1.0 / n)
    inv_w = jnp.concatenate([jax.lax.rsqrt(var_c + EPS)] * 4, axis=1)
    o_ref[0] = jnp.maximum(d * inv_w, 0.0).astype(o_ref.dtype)


def fused_up_matmul(patches, lp):
    N, P, KCpad = patches.shape
    Cpad = lp["Cpad"]
    kernel = functools.partial(_fused_up_kernel, cpad=Cpad)
    return pl.pallas_call(
        kernel,
        out_shape=jax.ShapeDtypeStruct((N, P, 4 * Cpad), jnp.bfloat16),
        grid=(N,),
        in_specs=[pl.BlockSpec((1, P, KCpad), lambda n: (n, 0, 0)),
                  pl.BlockSpec((KCpad, 4 * Cpad), lambda n: (0, 0))],
        out_specs=pl.BlockSpec((1, P, 4 * Cpad), lambda n: (n, 0, 0)),
        compiler_params=pltpu.CompilerParams(
            dimension_semantics=("parallel",),
            vmem_limit_bytes=VMEM_LIMIT),
    )(patches, lp["w4"])


# ---------------------------------------------------------------------------
# Final conv kernel: matmul + bias + tanh, stored transposed (channels, P)
# so only 8 channel rows are written and the output is NCHW directly.
# ---------------------------------------------------------------------------
def _final_conv_kernel(p_ref, w_ref, b_ref, o_ref, *, crows):
    y = jnp.dot(p_ref[0], w_ref[...], preferred_element_type=jnp.float32)
    y = y + b_ref[...]
    yt = jnp.transpose(y)                         # (Cpad, P) via XLU (free slot)
    o_ref[0] = jnp.tanh(yt[:crows, :])


def final_conv_layer(x, lp):
    """ReflectionPad(3) + Conv7x7 (+bias) + Tanh; returns NCHW f32."""
    N = x.shape[0]
    pad = lp["pad"]
    x = jnp.pad(x, ((0, 0), (pad, pad), (pad, pad), (0, 0)), mode="reflect")
    patches, Ho, Wo = _im2col(x, lp["K"], 1)
    patches = _pad_and_cast_patches(patches, lp["w"].shape[0])
    P = Ho * Wo
    crows = lp["Crows"]
    kernel = functools.partial(_final_conv_kernel, crows=crows)
    out = pl.pallas_call(
        kernel,
        out_shape=jax.ShapeDtypeStruct((N, crows, P), jnp.float32),
        grid=(N,),
        in_specs=[pl.BlockSpec((1, P, patches.shape[-1]), lambda n: (n, 0, 0)),
                  pl.BlockSpec(lp["w"].shape, lambda n: (0, 0)),
                  pl.BlockSpec((1, lp["Cpad"]), lambda n: (0, 0))],
        out_specs=pl.BlockSpec((1, crows, P), lambda n: (n, 0, 0)),
        compiler_params=pltpu.CompilerParams(
            dimension_semantics=("parallel",),
            vmem_limit_bytes=VMEM_LIMIT),
    )(patches, lp["w"], lp["b"])
    return out.reshape(N, crows, Ho, Wo)[:, :lp["Cout"]]


# ---------------------------------------------------------------------------
# JAX glue: im2col + layer wrappers
# ---------------------------------------------------------------------------
def _im2col(xp, K, stride):
    """xp: (N, Hp, Wp, C) already padded -> (N, Ho*Wo, K*K*C), tap-major."""
    N, H, W, C = xp.shape
    Ho = (H - K) // stride + 1
    Wo = (W - K) // stride + 1
    cols = []
    for kh in range(K):
        for kw in range(K):
            cols.append(
                xp[:, kh: kh + stride * Ho: stride, kw: kw + stride * Wo: stride, :])
    patches = jnp.stack(cols, axis=3)            # (N, Ho, Wo, K*K, C)
    return patches.reshape(N, Ho * Wo, K * K * C), Ho, Wo


def _pad_and_cast_patches(patches, KCpad):
    KC = patches.shape[-1]
    if KCpad > KC:
        patches = jnp.pad(patches, ((0, 0), (0, 0), (0, KCpad - KC)))
    return patches.astype(jnp.bfloat16)


def _fused_vmem_estimate(P, KCpad, Cpad, has_res):
    blocks = P * KCpad * 2 + P * Cpad * 2 * (2 if has_res else 1)
    return 2 * blocks + KCpad * Cpad * 2 + 3 * P * Cpad * 4


def conv2d_layer(x, lp, residual_flat=None, force_ptile=False):
    """x: (N,H,W,Cin) NHWC real channels -> ((N,P,Cpad) bf16 flat, Ho, Wo)."""
    K, stride, pad = lp["K"], lp["stride"], lp["pad"]
    if pad > 0:
        x = jnp.pad(x, ((0, 0), (pad, pad), (pad, pad), (0, 0)),
                    mode=lp["pad_mode"])
    patches, Ho, Wo = _im2col(x, K, stride)
    KCpad = lp["w"].shape[0]
    patches = _pad_and_cast_patches(patches, KCpad)
    P = Ho * Wo

    has_res = residual_flat is not None
    use_ptile = force_ptile or (
        _fused_vmem_estimate(P, KCpad, lp["Cpad"], has_res) > PTILE_TRIGGER)
    if use_ptile:
        out = fused_conv_matmul_ptiled(patches, lp, residual=residual_flat,
                                       tp_max=(128 if force_ptile else None))
    else:
        out = fused_conv_matmul(patches, lp, residual=residual_flat)
    return out, Ho, Wo


def unpad_nhwc(flat, Ho, Wo, Cout):
    N = flat.shape[0]
    return flat[..., :Cout].reshape(N, Ho, Wo, Cout)


def conv_transpose_layer(x, lp):
    """ConvTranspose2d(k=3, s=2, p=1, op=1) + IN + ReLU via 4-phase sub-pixel."""
    N, H, W, _ = x.shape
    xp = jnp.pad(x, ((0, 0), (0, 1), (0, 1), (0, 0)))      # zero row/col halo
    patches, _, _ = _im2col(xp, 2, 1)                       # (N, H*W, 4*Cin)
    patches = _pad_and_cast_patches(patches, lp["w4"].shape[0])
    Cout, Cpad = lp["Cout"], lp["Cpad"]
    out = fused_up_matmul(patches, lp)                      # (N, H*W, 4*Cpad) bf16
    out = out.reshape(N, H, W, 4, Cpad)[..., :Cout]         # phase p = 2*dy + dx
    out = out.reshape(N, H, W, 2, 2, Cout)
    out = jnp.transpose(out, (0, 1, 3, 2, 4, 5)).reshape(N, 2 * H, 2 * W, Cout)
    return out


# ---------------------------------------------------------------------------
# Parameter init (deterministic, PyTorch-style uniform bounds) — raw layout
# ---------------------------------------------------------------------------
def _conv_params(key, cout, cin, k):
    kw, kb = jax.random.split(key)
    bound = 1.0 / float((cin * k * k) ** 0.5)
    w = jax.random.uniform(kw, (cout, cin, k, k), jnp.float32, -bound, bound)
    b = jax.random.uniform(kb, (cout,), jnp.float32, -bound, bound)
    return w, b


def _convT_params(key, cin, cout, k):
    kw, kb = jax.random.split(key)
    bound = 1.0 / float((cin * k * k) ** 0.5)
    w = jax.random.uniform(kw, (cin, cout, k, k), jnp.float32, -bound, bound)
    b = jax.random.uniform(kb, (cout,), jnp.float32, -bound, bound)
    return w, b


def init_generator_params(key, in_channels=3, output_nc=3, n_filter=8, n_blocks=2):
    keys = jax.random.split(key, 6 + 2 * n_blocks)
    ki = iter(keys)
    params = {"stem": _conv_params(next(ki), n_filter, in_channels, 7), "down": []}
    for i in range(2):
        mult = 2 ** i
        params["down"].append(
            _conv_params(next(ki), n_filter * mult * 2, n_filter * mult, 3))
    mult = 4
    params["res"] = []
    for _ in range(n_blocks):
        c1 = _conv_params(next(ki), n_filter * mult, n_filter * mult, 3)
        c2 = _conv_params(next(ki), n_filter * mult, n_filter * mult, 3)
        params["res"].append((c1, c2))
    params["up"] = []
    for i in range(2):
        m = 2 ** (2 - i)
        params["up"].append(_convT_params(next(ki), n_filter * m, n_filter * m // 2, 3))
    params["final"] = _conv_params(next(ki), output_nc, n_filter, 7)
    return params


# ---------------------------------------------------------------------------
# One-time weight preparation: transpose / flip / pad to lane-dense bf16.
# Biases of every IN(affine=False) layer are dropped (exactly cancelled).
# ---------------------------------------------------------------------------
def _prep_conv(w, *, stride, pad, pad_mode, act):
    Cout, Cin, K, _ = w.shape
    KC = K * K * Cin
    KCpad = _round_up(KC, 128)
    Cpad = _round_up(Cout, 128)
    w_mat = jnp.transpose(w, (2, 3, 1, 0)).reshape(KC, Cout)   # (kh,kw,cin) rows
    w_mat = jnp.pad(w_mat, ((0, KCpad - KC), (0, Cpad - Cout))).astype(jnp.bfloat16)
    return dict(w=w_mat, K=K, stride=stride, pad=pad, pad_mode=pad_mode,
                act=act, Cout=Cout, Cpad=Cpad)


def _prep_up(w_t):
    """Phase-stacked weights for ConvTranspose2d(k=3,s=2,p=1,op=1).
    Phase p = 2*dy+dx occupies columns [p*Cpad, p*Cpad+Cout); tap t = 2*di+dj
    reads x[i+di, j+dj]; original kernel index (ky,kx) = (dy+1-2di, dx+1-2dj)."""
    Cin, Cout, K, _ = w_t.shape
    KCpad = _round_up(4 * Cin, 128)
    Cpad = _round_up(Cout, 128)
    w4 = jnp.zeros((KCpad, 4 * Cpad), jnp.float32)
    for p in range(4):
        dy, dx = p // 2, p % 2
        for t in range(4):
            di, dj = t // 2, t % 2
            ky, kx = dy + 1 - 2 * di, dx + 1 - 2 * dj
            if 0 <= ky < K and 0 <= kx < K:
                w4 = w4.at[t * Cin:(t + 1) * Cin,
                           p * Cpad:p * Cpad + Cout].set(w_t[:, :, ky, kx])
    return dict(w4=w4.astype(jnp.bfloat16), Cout=Cout, Cpad=Cpad)


def _prep_final(w, b):
    Cout, Cin, K, _ = w.shape
    KC = K * K * Cin
    KCpad = _round_up(KC, 128)
    Cpad = _round_up(Cout, 128)
    w_mat = jnp.transpose(w, (2, 3, 1, 0)).reshape(KC, Cout)
    w_mat = jnp.pad(w_mat, ((0, KCpad - KC), (0, Cpad - Cout))).astype(jnp.bfloat16)
    b_mat = jnp.pad(b.reshape(1, Cout), ((0, 0), (0, Cpad - Cout))).astype(jnp.float32)
    return dict(w=w_mat, b=b_mat, K=K, pad=3, Cout=Cout, Cpad=Cpad,
                Crows=_round_up(Cout, 8))


def prepare_params(raw):
    prep = {}
    w, _ = raw["stem"]
    prep["stem"] = _prep_conv(w, stride=1, pad=3, pad_mode="reflect", act="relu")
    prep["down"] = [_prep_conv(w, stride=2, pad=1, pad_mode="constant", act="relu")
                    for (w, _) in raw["down"]]
    prep["res"] = []
    for (w1, _), (w2, _) in raw["res"]:
        c1 = _prep_conv(w1, stride=1, pad=1, pad_mode="reflect", act="relu")
        c2 = _prep_conv(w2, stride=1, pad=1, pad_mode="reflect", act="none")
        prep["res"].append((c1, c2))
    prep["up"] = [_prep_up(w) for (w, _) in raw["up"]]
    w, b = raw["final"]
    prep["final"] = _prep_final(w, b)
    return prep


# ---------------------------------------------------------------------------
# Generator forward (use_dropout=False, matches default)
# ---------------------------------------------------------------------------
def generator_forward(prep, x_nchw, force_ptile=False):
    x = jnp.transpose(x_nchw, (0, 2, 3, 1))              # NCHW -> NHWC

    # stem (ReflectPad3 + Conv7 + IN + ReLU) and 2x downsampling convs
    flat = None
    for lp in [prep["stem"]] + prep["down"]:
        flat, Ho, Wo = conv2d_layer(x, lp, force_ptile=force_ptile)
        x = unpad_nhwc(flat, Ho, Wo, lp["Cout"])

    # ResNet blocks; residual fed as the previous kernel's padded bf16 output
    for c1, c2 in prep["res"]:
        h_flat, Ho, Wo = conv2d_layer(x, c1, force_ptile=force_ptile)
        h = unpad_nhwc(h_flat, Ho, Wo, c1["Cout"])
        flat, Ho, Wo = conv2d_layer(h, c2, residual_flat=flat,
                                    force_ptile=force_ptile)
        x = unpad_nhwc(flat, Ho, Wo, c2["Cout"])

    # 2x upsampling (sub-pixel ConvTranspose + IN + ReLU)
    for lp in prep["up"]:
        x = conv_transpose_layer(x, lp)

    # ReflectPad3 + Conv7 (+bias) + Tanh, NCHW out directly (transposed store)
    return final_conv_layer(x, prep["final"])


if __name__ == "__main__":
    key = jax.random.PRNGKey(0)
    kp, kx = jax.random.split(key)

    # small config: in_channels=3, output_nc=3, n_filter=8, n_blocks=2
    raw_params = init_generator_params(kp, in_channels=3, output_nc=3,
                                       n_filter=8, n_blocks=2)
    prep_params = prepare_params(raw_params)
    x = jax.random.normal(kx, (2, 3, 16, 16), jnp.float32)

    fwd = jax.jit(functools.partial(generator_forward, prep_params,
                                    force_ptile=False))
    out = jax.block_until_ready(fwd(x))
    assert out.shape == (2, 3, 16, 16), out.shape
    assert bool(jnp.all(jnp.isfinite(out)))
    assert bool(jnp.all(jnp.abs(out) <= 1.0))            # tanh output range

    # Exercise the split-InstanceNorm P-tiled path on one layer (multi-tile)
    # and compare against the fused single-block path.
    x_nhwc = jnp.transpose(x, (0, 2, 3, 1))
    f_ref, _, _ = conv2d_layer(x_nhwc, prep_params["stem"], force_ptile=False)
    f_til, _, _ = conv2d_layer(x_nhwc, prep_params["stem"], force_ptile=True)
    diff1 = jnp.max(jnp.abs(f_ref.astype(jnp.float32) - f_til.astype(jnp.float32)))
    assert bool(diff1 < 5e-2), float(diff1)

    # Full forward through the P-tiled path (exercises residual handling too).
    fwd_tiled = jax.jit(functools.partial(generator_forward, prep_params,
                                          force_ptile=True))
    out_t = jax.block_until_ready(fwd_tiled(x))
    assert bool(jnp.all(jnp.isfinite(out_t)))
    assert bool(jnp.max(jnp.abs(out_t - out)) < 1e-1)

    print("KERNEL_OK")
</pallas_src>

<mosaic_0001>
module attributes {stable_mosaic.version = 11 : i64} {
  func.func @_fused_conv_kernel(%arg0: i32, %arg1: memref<1x256x256xbf16, #tpu.memory_space<vmem>>, %arg2: memref<256x128xbf16, #tpu.memory_space<vmem>>, %arg3: memref<1x256x128xbf16, #tpu.memory_space<vmem>>) attributes {dimension_semantics = [#tpu.dimension_semantics<parallel>], iteration_bounds = array<i64: 2>, scalar_prefetch = 0 : i64, scratch_operands = 0 : i64, tpu.core_type = #tpu.core_type<tc>, window_params = [{transform_indices = @transform_0, window_bounds = array<i64: 1, 256, 256>}, {pipeline_mode = #tpu.pipeline_mode<synchronous>, transform_indices = @transform_1, window_bounds = array<i64: 256, 128>}, {transform_indices = @transform_2, window_bounds = array<i64: 1, 256, 128>}]} {
    %c0 = arith.constant 0 : index
    %c0_0 = arith.constant 0 : index
    %c0_1 = arith.constant 0 : index
    %0 = vector.load %arg1[%c0, %c0_0, %c0_1] : memref<1x256x256xbf16, #tpu.memory_space<vmem>>, vector<1x256x256xbf16>
    %1 = vector.shape_cast %0 : vector<1x256x256xbf16> to vector<256x256xbf16>
    %c0_2 = arith.constant 0 : index
    %c0_3 = arith.constant 0 : index
    %2 = vector.load %arg2[%c0_2, %c0_3] : memref<256x128xbf16, #tpu.memory_space<vmem>>, vector<256x128xbf16>
    %cst = arith.constant dense<0.000000e+00> : vector<256x128xf32>
    %3 = tpu.matmul %1, %2, %cst {dimension_numbers = #tpu.dot_dimension_numbers<[1], [0], [0], [1], [0, 0, 1, 1], [], []>} : vector<256x256xbf16>, vector<256x128xbf16>, vector<256x128xf32> -> vector<256x128xf32>
    %cst_4 = arith.constant dense<0.000000e+00> : vector<128xf32>
    %4 = vector.multi_reduction <add>, %3, %cst_4 [0] : vector<256x128xf32> to vector<128xf32>
    %5 = vector.shape_cast %4 : vector<128xf32> to vector<1x128xf32>
    %cst_5 = arith.constant 3.906250e-03 : f32
    %6 = vector.broadcast %cst_5 : f32 to vector<1x128xf32>
    %7 = arith.mulf %5, %6 : vector<1x128xf32>
    %8 = vector.broadcast %7 : vector<1x128xf32> to vector<256x128xf32>
    %9 = arith.subf %3, %8 : vector<256x128xf32>
    %10 = arith.mulf %9, %9 : vector<256x128xf32>
    %cst_6 = arith.constant dense<0.000000e+00> : vector<128xf32>
    %11 = vector.multi_reduction <add>, %10, %cst_6 [0] : vector<256x128xf32> to vector<128xf32>
    %12 = vector.shape_cast %11 : vector<128xf32> to vector<1x128xf32>
    %cst_7 = arith.constant 3.906250e-03 : f32
    %13 = vector.broadcast %cst_7 : f32 to vector<1x128xf32>
    %14 = arith.mulf %12, %13 : vector<1x128xf32>
    %cst_8 = arith.constant 9.99999974E-6 : f32
    %15 = vector.broadcast %cst_8 : f32 to vector<1x128xf32>
    %16 = arith.addf %14, %15 : vector<1x128xf32>
    %17 = math.rsqrt %16 : vector<1x128xf32>
    %18 = vector.broadcast %17 : vector<1x128xf32> to vector<256x128xf32>
    %19 = arith.mulf %9, %18 : vector<256x128xf32>
    %cst_9 = arith.constant 0.000000e+00 : f32
    %20 = vector.broadcast %cst_9 : f32 to vector<256x128xf32>
    %21 = arith.maximumf %19, %20 : vector<256x128xf32>
    %22 = arith.truncf %21 : vector<256x128xf32> to vector<256x128xbf16>
    %c0_10 = arith.constant 0 : index
    %c0_11 = arith.constant 0 : index
    %c0_12 = arith.constant 0 : index
    %23 = vector.load %arg3[%c0_10, %c0_11, %c0_12] : memref<1x256x128xbf16, #tpu.memory_space<vmem>>, vector<1x256x128xbf16>
    %24 = vector.shape_cast %23 : vector<1x256x128xbf16> to vector<256x128xbf16>
    %25 = vector.shape_cast %22 : vector<256x128xbf16> to vector<1x256x128xbf16>
    tpu.vector_store %arg3[%c0_10, %c0_11, %c0_12], %25 {strides = array<i32>} : memref<1x256x128xbf16, #tpu.memory_space<vmem>>, vector<1x256x128xbf16>,
    return
  }
  func.func @transform_0(%arg0: i32) -> (i32, i32, i32) {
    %c0_i32 = arith.constant 0 : i32
    %c0_i32_0 = arith.constant 0 : i32
    %c0_i32_1 = arith.constant 0 : i32
    return %arg0, %c0_i32, %c0_i32_0 : i32, i32, i32
  }
  func.func @transform_1(%arg0: i32) -> (i32, i32) {
    %c0_i32 = arith.constant 0 : i32
    %c0_i32_0 = arith.constant 0 : i32
    %c0_i32_1 = arith.constant 0 : i32
    return %c0_i32, %c0_i32_0 : i32, i32
  }
  func.func @transform_2(%arg0: i32) -> (i32, i32, i32) {
    %c0_i32 = arith.constant 0 : i32
    %c0_i32_0 = arith.constant 0 : i32
    %c0_i32_1 = arith.constant 0 : i32
    return %arg0, %c0_i32, %c0_i32_0 : i32, i32, i32
  }
}

module attributes {stable_mosaic.version = 11 : i64} {
  func.func @_fused_conv_kernel(%arg0: i32, %arg1: memref<1x64x128xbf16, #tpu.memory_space<vmem>>, %arg2: memref<128x128xbf16, #tpu.memory_space<vmem>>, %arg3: memref<1x64x128xbf16, #tpu.memory_space<vmem>>) attributes {dimension_semantics = [#tpu.dimension_semantics<parallel>], iteration_bounds = array<i64: 2>, scalar_prefetch = 0 : i64, scratch_operands = 0 : i64, tpu.core_type = #tpu.core_type<tc>, window_params = [{transform_indices = @transform_0, window_bounds = array<i64: 1, 64, 128>}, {pipeline_mode = #tpu.pipeline_mode<synchronous>, transform_indices = @transform_1, window_bounds = array<i64: 128, 128>}, {transform_indices = @transform_2, window_bounds = array<i64: 1, 64, 128>}]} {
    %c0 = arith.constant 0 : index
    %c0_0 = arith.constant 0 : index
    %c0_1 = arith.constant 0 : index
    %0 = vector.load %arg1[%c0, %c0_0, %c0_1] : memref<1x64x128xbf16, #tpu.memory_space<vmem>>, vector<1x64x128xbf16>
    %1 = vector.shape_cast %0 : vector<1x64x128xbf16> to vector<64x128xbf16>
    %c0_2 = arith.constant 0 : index
    %c0_3 = arith.constant 0 : index
    %2 = vector.load %arg2[%c0_2, %c0_3] : memref<128x128xbf16, #tpu.memory_space<vmem>>, vector<128x128xbf16>
    %cst = arith.constant dense<0.000000e+00> : vector<64x128xf32>
    %3 = tpu.matmul %1, %2, %cst {dimension_numbers = #tpu.dot_dimension_numbers<[1], [0], [0], [1], [0, 0, 1, 1], [], []>} : vector<64x128xbf16>, vector<128x128xbf16>, vector<64x128xf32> -> vector<64x128xf32>
    %cst_4 = arith.constant dense<0.000000e+00> : vector<128xf32>
    %4 = vector.multi_reduction <add>, %3, %cst_4 [0] : vector<64x128xf32> to vector<128xf32>
    %5 = vector.shape_cast %4 : vector<128xf32> to vector<1x128xf32>
    %cst_5 = arith.constant 1.562500e-02 : f32
    %6 = vector.broadcast %cst_5 : f32 to vector<1x128xf32>
    %7 = arith.mulf %5, %6 : vector<1x128xf32>
    %8 = vector.broadcast %7 : vector<1x128xf32> to vector<64x128xf32>
    %9 = arith.subf %3, %8 : vector<64x128xf32>
    %10 = arith.mulf %9, %9 : vector<64x128xf32>
    %cst_6 = arith.constant dense<0.000000e+00> : vector<128xf32>
    %11 = vector.multi_reduction <add>, %10, %cst_6 [0] : vector<64x128xf32> to vector<128xf32>
    %12 = vector.shape_cast %11 : vector<128xf32> to vector<1x128xf32>
    %cst_7 = arith.constant 1.562500e-02 : f32
    %13 = vector.broadcast %cst_7 : f32 to vector<1x128xf32>
    %14 = arith.mulf %12, %13 : vector<1x128xf32>
    %cst_8 = arith.constant 9.99999974E-6 : f32
    %15 = vector.broadcast %cst_8 : f32 to vector<1x128xf32>
    %16 = arith.addf %14, %15 : vector<1x128xf32>
    %17 = math.rsqrt %16 : vector<1x128xf32>
    %18 = vector.broadcast %17 : vector<1x128xf32> to vector<64x128xf32>
    %19 = arith.mulf %9, %18 : vector<64x128xf32>
    %cst_9 = arith.constant 0.000000e+00 : f32
    %20 = vector.broadcast %cst_9 : f32 to vector<64x128xf32>
    %21 = arith.maximumf %19, %20 : vector<64x128xf32>
    %22 = arith.truncf %21 : vector<64x128xf32> to vector<64x128xbf16>
    %c0_10 = arith.constant 0 : index
    %c0_11 = arith.constant 0 : index
    %c0_12 = arith.constant 0 : index
    %23 = vector.load %arg3[%c0_10, %c0_11, %c0_12] : memref<1x64x128xbf16, #tpu.memory_space<vmem>>, vector<1x64x128xbf16>
    %24 = vector.shape_cast %23 : vector<1x64x128xbf16> to vector<64x128xbf16>
    %25 = vector.shape_cast %22 : vector<64x128xbf16> to vector<1x64x128xbf16>
    tpu.vector_store %arg3[%c0_10, %c0_11, %c0_12], %25 {strides = array<i32>} : memref<1x64x128xbf16, #tpu.memory_space<vmem>>, vector<1x64x128xbf16>,
    return
  }
  func.func @transform_0(%arg0: i32) -> (i32, i32, i32) {
    %c0_i32 = arith.constant 0 : i32
    %c0_i32_0 = arith.constant 0 : i32
    %c0_i32_1 = arith.constant 0 : i32
    return %arg0, %c0_i32, %c0_i32_0 : i32, i32, i32
  }
  func.func @transform_1(%arg0: i32) -> (i32, i32) {
    %c0_i32 = arith.constant 0 : i32
    %c0_i32_0 = arith.constant 0 : i32
    %c0_i32_1 = arith.constant 0 : i32
    return %c0_i32, %c0_i32_0 : i32, i32
  }
  func.func @transform_2(%arg0: i32) -> (i32, i32, i32) {
    %c0_i32 = arith.constant 0 : i32
    %c0_i32_0 = arith.constant 0 : i32
    %c0_i32_1 = arith.constant 0 : i32
    return %arg0, %c0_i32, %c0_i32_0 : i32, i32, i32
  }
}

module attributes {stable_mosaic.version = 11 : i64} {
  func.func @_fused_conv_kernel(%arg0: i32, %arg1: memref<1x16x256xbf16, #tpu.memory_space<vmem>>, %arg2: memref<256x128xbf16, #tpu.memory_space<vmem>>, %arg3: memref<1x16x128xbf16, #tpu.memory_space<vmem>>) attributes {dimension_semantics = [#tpu.dimension_semantics<parallel>], iteration_bounds = array<i64: 2>, scalar_prefetch = 0 : i64, scratch_operands = 0 : i64, tpu.core_type = #tpu.core_type<tc>, window_params = [{transform_indices = @transform_0, window_bounds = array<i64: 1, 16, 256>}, {pipeline_mode = #tpu.pipeline_mode<synchronous>, transform_indices = @transform_1, window_bounds = array<i64: 256, 128>}, {transform_indices = @transform_2, window_bounds = array<i64: 1, 16, 128>}]} {
    %c0 = arith.constant 0 : index
    %c0_0 = arith.constant 0 : index
    %c0_1 = arith.constant 0 : index
    %0 = vector.load %arg1[%c0, %c0_0, %c0_1] : memref<1x16x256xbf16, #tpu.memory_space<vmem>>, vector<1x16x256xbf16>
    %1 = vector.shape_cast %0 : vector<1x16x256xbf16> to vector<16x256xbf16>
    %c0_2 = arith.constant 0 : index
    %c0_3 = arith.constant 0 : index
    %2 = vector.load %arg2[%c0_2, %c0_3] : memref<256x128xbf16, #tpu.memory_space<vmem>>, vector<256x128xbf16>
    %cst = arith.constant dense<0.000000e+00> : vector<16x128xf32>
    %3 = tpu.matmul %1, %2, %cst {dimension_numbers = #tpu.dot_dimension_numbers<[1], [0], [0], [1], [0, 0, 1, 1], [], []>} : vector<16x256xbf16>, vector<256x128xbf16>, vector<16x128xf32> -> vector<16x128xf32>
    %cst_4 = arith.constant dense<0.000000e+00> : vector<128xf32>
    %4 = vector.multi_reduction <add>, %3, %cst_4 [0] : vector<16x128xf32> to vector<128xf32>
    %5 = vector.shape_cast %4 : vector<128xf32> to vector<1x128xf32>
    %cst_5 = arith.constant 6.250000e-02 : f32
    %6 = vector.broadcast %cst_5 : f32 to vector<1x128xf32>
    %7 = arith.mulf %5, %6 : vector<1x128xf32>
    %8 = vector.broadcast %7 : vector<1x128xf32> to vector<16x128xf32>
    %9 = arith.subf %3, %8 : vector<16x128xf32>
    %10 = arith.mulf %9, %9 : vector<16x128xf32>
    %cst_6 = arith.constant dense<0.000000e+00> : vector<128xf32>
    %11 = vector.multi_reduction <add>, %10, %cst_6 [0] : vector<16x128xf32> to vector<128xf32>
    %12 = vector.shape_cast %11 : vector<128xf32> to vector<1x128xf32>
    %cst_7 = arith.constant 6.250000e-02 : f32
    %13 = vector.broadcast %cst_7 : f32 to vector<1x128xf32>
    %14 = arith.mulf %12, %13 : vector<1x128xf32>
    %cst_8 = arith.constant 9.99999974E-6 : f32
    %15 = vector.broadcast %cst_8 : f32 to vector<1x128xf32>
    %16 = arith.addf %14, %15 : vector<1x128xf32>
    %17 = math.rsqrt %16 : vector<1x128xf32>
    %18 = vector.broadcast %17 : vector<1x128xf32> to vector<16x128xf32>
    %19 = arith.mulf %9, %18 : vector<16x128xf32>
    %cst_9 = arith.constant 0.000000e+00 : f32
    %20 = vector.broadcast %cst_9 : f32 to vector<16x128xf32>
    %21 = arith.maximumf %19, %20 : vector<16x128xf32>
    %22 = arith.truncf %21 : vector<16x128xf32> to vector<16x128xbf16>
    %c0_10 = arith.constant 0 : index
    %c0_11 = arith.constant 0 : index
    %c0_12 = arith.constant 0 : index
    %23 = vector.load %arg3[%c0_10, %c0_11, %c0_12] : memref<1x16x128xbf16, #tpu.memory_space<vmem>>, vector<1x16x128xbf16>
    %24 = vector.shape_cast %23 : vector<1x16x128xbf16> to vector<16x128xbf16>
    %25 = vector.shape_cast %22 : vector<16x128xbf16> to vector<1x16x128xbf16>
    tpu.vector_store %arg3[%c0_10, %c0_11, %c0_12], %25 {strides = array<i32>} : memref<1x16x128xbf16, #tpu.memory_space<vmem>>, vector<1x16x128xbf16>,
    return
  }
  func.func @transform_0(%arg0: i32) -> (i32, i32, i32) {
    %c0_i32 = arith.constant 0 : i32
    %c0_i32_0 = arith.constant 0 : i32
    %c0_i32_1 = arith.constant 0 : i32
    return %arg0, %c0_i32, %c0_i32_0 : i32, i32, i32
  }
  func.func @transform_1(%arg0: i32) -> (i32, i32) {
    %c0_i32 = arith.constant 0 : i32
    %c0_i32_0 = arith.constant 0 : i32
    %c0_i32_1 = arith.constant 0 : i32
    return %c0_i32, %c0_i32_0 : i32, i32
  }
  func.func @transform_2(%arg0: i32) -> (i32, i32, i32) {
    %c0_i32 = arith.constant 0 : i32
    %c0_i32_0 = arith.constant 0 : i32
    %c0_i32_1 = arith.constant 0 : i32
    return %arg0, %c0_i32, %c0_i32_0 : i32, i32, i32
  }
}

module attributes {stable_mosaic.version = 11 : i64} {
  func.func @_fused_conv_kernel(%arg0: i32, %arg1: memref<1x16x384xbf16, #tpu.memory_space<vmem>>, %arg2: memref<384x128xbf16, #tpu.memory_space<vmem>>, %arg3: memref<1x16x128xbf16, #tpu.memory_space<vmem>>) attributes {dimension_semantics = [#tpu.dimension_semantics<parallel>], iteration_bounds = array<i64: 2>, scalar_prefetch = 0 : i64, scratch_operands = 0 : i64, tpu.core_type = #tpu.core_type<tc>, window_params = [{transform_indices = @transform_0, window_bounds = array<i64: 1, 16, 384>}, {pipeline_mode = #tpu.pipeline_mode<synchronous>, transform_indices = @transform_1, window_bounds = array<i64: 384, 128>}, {transform_indices = @transform_2, window_bounds = array<i64: 1, 16, 128>}]} {
    %c0 = arith.constant 0 : index
    %c0_0 = arith.constant 0 : index
    %c0_1 = arith.constant 0 : index
    %0 = vector.load %arg1[%c0, %c0_0, %c0_1] : memref<1x16x384xbf16, #tpu.memory_space<vmem>>, vector<1x16x384xbf16>
    %1 = vector.shape_cast %0 : vector<1x16x384xbf16> to vector<16x384xbf16>
    %c0_2 = arith.constant 0 : index
    %c0_3 = arith.constant 0 : index
    %2 = vector.load %arg2[%c0_2, %c0_3] : memref<384x128xbf16, #tpu.memory_space<vmem>>, vector<384x128xbf16>
    %cst = arith.constant dense<0.000000e+00> : vector<16x128xf32>
    %3 = tpu.matmul %1, %2, %cst {dimension_numbers = #tpu.dot_dimension_numbers<[1], [0], [0], [1], [0, 0, 1, 1], [], []>} : vector<16x384xbf16>, vector<384x128xbf16>, vector<16x128xf32> -> vector<16x128xf32>
    %cst_4 = arith.constant dense<0.000000e+00> : vector<128xf32>
    %4 = vector.multi_reduction <add>, %3, %cst_4 [0] : vector<16x128xf32> to vector<128xf32>
    %5 = vector.shape_cast %4 : vector<128xf32> to vector<1x128xf32>
    %cst_5 = arith.constant 6.250000e-02 : f32
    %6 = vector.broadcast %cst_5 : f32 to vector<1x128xf32>
    %7 = arith.mulf %5, %6 : vector<1x128xf32>
    %8 = vector.broadcast %7 : vector<1x128xf32> to vector<16x128xf32>
    %9 = arith.subf %3, %8 : vector<16x128xf32>
    %10 = arith.mulf %9, %9 : vector<16x128xf32>
    %cst_6 = arith.constant dense<0.000000e+00> : vector<128xf32>
    %11 = vector.multi_reduction <add>, %10, %cst_6 [0] : vector<16x128xf32> to vector<128xf32>
    %12 = vector.shape_cast %11 : vector<128xf32> to vector<1x128xf32>
    %cst_7 = arith.constant 6.250000e-02 : f32
    %13 = vector.broadcast %cst_7 : f32 to vector<1x128xf32>
    %14 = arith.mulf %12, %13 : vector<1x128xf32>
    %cst_8 = arith.constant 9.99999974E-6 : f32
    %15 = vector.broadcast %cst_8 : f32 to vector<1x128xf32>
    %16 = arith.addf %14, %15 : vector<1x128xf32>
    %17 = math.rsqrt %16 : vector<1x128xf32>
    %18 = vector.broadcast %17 : vector<1x128xf32> to vector<16x128xf32>
    %19 = arith.mulf %9, %18 : vector<16x128xf32>
    %cst_9 = arith.constant 0.000000e+00 : f32
    %20 = vector.broadcast %cst_9 : f32 to vector<16x128xf32>
    %21 = arith.maximumf %19, %20 : vector<16x128xf32>
    %22 = arith.truncf %21 : vector<16x128xf32> to vector<16x128xbf16>
    %c0_10 = arith.constant 0 : index
    %c0_11 = arith.constant 0 : index
    %c0_12 = arith.constant 0 : index
    %23 = vector.load %arg3[%c0_10, %c0_11, %c0_12] : memref<1x16x128xbf16, #tpu.memory_space<vmem>>, vector<1x16x128xbf16>
    %24 = vector.shape_cast %23 : vector<1x16x128xbf16> to vector<16x128xbf16>
    %25 = vector.shape_cast %22 : vector<16x128xbf16> to vector<1x16x128xbf16>
    tpu.vector_store %arg3[%c0_10, %c0_11, %c0_12], %25 {strides = array<i32>} : memref<1x16x128xbf16, #tpu.memory_space<vmem>>, vector<1x16x128xbf16>,
    return
  }
  func.func @transform_0(%arg0: i32) -> (i32, i32, i32) {
    %c0_i32 = arith.constant 0 : i32
    %c0_i32_0 = arith.constant 0 : i32
    %c0_i32_1 = arith.constant 0 : i32
    return %arg0, %c0_i32, %c0_i32_0 : i32, i32, i32
  }
  func.func @transform_1(%arg0: i32) -> (i32, i32) {
    %c0_i32 = arith.constant 0 : i32
    %c0_i32_0 = arith.constant 0 : i32
    %c0_i32_1 = arith.constant 0 : i32
    return %c0_i32, %c0_i32_0 : i32, i32
  }
  func.func @transform_2(%arg0: i32) -> (i32, i32, i32) {
    %c0_i32 = arith.constant 0 : i32
    %c0_i32_0 = arith.constant 0 : i32
    %c0_i32_1 = arith.constant 0 : i32
    return %arg0, %c0_i32, %c0_i32_0 : i32, i32, i32
  }
}

module attributes {stable_mosaic.version = 11 : i64} {
  func.func @_fused_conv_kernel(%arg0: i32, %arg1: memref<1x16x384xbf16, #tpu.memory_space<vmem>>, %arg2: memref<384x128xbf16, #tpu.memory_space<vmem>>, %arg3: memref<1x16x128xbf16, #tpu.memory_space<vmem>>, %arg4: memref<1x16x128xbf16, #tpu.memory_space<vmem>>) attributes {dimension_semantics = [#tpu.dimension_semantics<parallel>], iteration_bounds = array<i64: 2>, scalar_prefetch = 0 : i64, scratch_operands = 0 : i64, tpu.core_type = #tpu.core_type<tc>, window_params = [{transform_indices = @transform_0, window_bounds = array<i64: 1, 16, 384>}, {pipeline_mode = #tpu.pipeline_mode<synchronous>, transform_indices = @transform_1, window_bounds = array<i64: 384, 128>}, {transform_indices = @transform_2, window_bounds = array<i64: 1, 16, 128>}, {transform_indices = @transform_3, window_bounds = array<i64: 1, 16, 128>}]} {
    %c0 = arith.constant 0 : index
    %c0_0 = arith.constant 0 : index
    %c0_1 = arith.constant 0 : index
    %0 = vector.load %arg1[%c0, %c0_0, %c0_1] : memref<1x16x384xbf16, #tpu.memory_space<vmem>>, vector<1x16x384xbf16>
    %1 = vector.shape_cast %0 : vector<1x16x384xbf16> to vector<16x384xbf16>
    %c0_2 = arith.constant 0 : index
    %c0_3 = arith.constant 0 : index
    %2 = vector.load %arg2[%c0_2, %c0_3] : memref<384x128xbf16, #tpu.memory_space<vmem>>, vector<384x128xbf16>
    %cst = arith.constant dense<0.000000e+00> : vector<16x128xf32>
    %3 = tpu.matmul %1, %2, %cst {dimension_numbers = #tpu.dot_dimension_numbers<[1], [0], [0], [1], [0, 0, 1, 1], [], []>} : vector<16x384xbf16>, vector<384x128xbf16>, vector<16x128xf32> -> vector<16x128xf32>
    %cst_4 = arith.constant dense<0.000000e+00> : vector<128xf32>
    %4 = vector.multi_reduction <add>, %3, %cst_4 [0] : vector<16x128xf32> to vector<128xf32>
    %5 = vector.shape_cast %4 : vector<128xf32> to vector<1x128xf32>
    %cst_5 = arith.constant 6.250000e-02 : f32
    %6 = vector.broadcast %cst_5 : f32 to vector<1x128xf32>
    %7 = arith.mulf %5, %6 : vector<1x128xf32>
    %8 = vector.broadcast %7 : vector<1x128xf32> to vector<16x128xf32>
    %9 = arith.subf %3, %8 : vector<16x128xf32>
    %10 = arith.mulf %9, %9 : vector<16x128xf32>
    %cst_6 = arith.constant dense<0.000000e+00> : vector<128xf32>
    %11 = vector.multi_reduction <add>, %10, %cst_6 [0] : vector<16x128xf32> to vector<128xf32>
    %12 = vector.shape_cast %11 : vector<128xf32> to vector<1x128xf32>
    %cst_7 = arith.constant 6.250000e-02 : f32
    %13 = vector.broadcast %cst_7 : f32 to vector<1x128xf32>
    %14 = arith.mulf %12, %13 : vector<1x128xf32>
    %cst_8 = arith.constant 9.99999974E-6 : f32
    %15 = vector.broadcast %cst_8 : f32 to vector<1x128xf32>
    %16 = arith.addf %14, %15 : vector<1x128xf32>
    %17 = math.rsqrt %16 : vector<1x128xf32>
    %18 = vector.broadcast %17 : vector<1x128xf32> to vector<16x128xf32>
    %19 = arith.mulf %9, %18 : vector<16x128xf32>
    %c0_9 = arith.constant 0 : index
    %c0_10 = arith.constant 0 : index
    %c0_11 = arith.constant 0 : index
    %20 = vector.load %arg3[%c0_9, %c0_10, %c0_11] : memref<1x16x128xbf16, #tpu.memory_space<vmem>>, vector<1x16x128xbf16>
    %21 = vector.shape_cast %20 : vector<1x16x128xbf16> to vector<16x128xbf16>
    %22 = arith.extf %21 : vector<16x128xbf16> to vector<16x128xf32>
    %23 = arith.addf %19, %22 : vector<16x128xf32>
    %24 = arith.truncf %23 : vector<16x128xf32> to vector<16x128xbf16>
    %c0_12 = arith.constant 0 : index
    %c0_13 = arith.constant 0 : index
    %c0_14 = arith.constant 0 : index
    %25 = vector.load %arg4[%c0_12, %c0_13, %c0_14] : memref<1x16x128xbf16, #tpu.memory_space<vmem>>, vector<1x16x128xbf16>
    %26 = vector.shape_cast %25 : vector<1x16x128xbf16> to vector<16x128xbf16>
    %27 = vector.shape_cast %24 : vector<16x128xbf16> to vector<1x16x128xbf16>
    tpu.vector_store %arg4[%c0_12, %c0_13, %c0_14], %27 {strides = array<i32>} : memref<1x16x128xbf16, #tpu.memory_space<vmem>>, vector<1x16x128xbf16>,
    return
  }
  func.func @transform_0(%arg0: i32) -> (i32, i32, i32) {
    %c0_i32 = arith.constant 0 : i32
    %c0_i32_0 = arith.constant 0 : i32
    %c0_i32_1 = arith.constant 0 : i32
    return %arg0, %c0_i32, %c0_i32_0 : i32, i32, i32
  }
  func.func @transform_1(%arg0: i32) -> (i32, i32) {
    %c0_i32 = arith.constant 0 : i32
    %c0_i32_0 = arith.constant 0 : i32
    %c0_i32_1 = arith.constant 0 : i32
    return %c0_i32, %c0_i32_0 : i32, i32
  }
  func.func @transform_2(%arg0: i32) -> (i32, i32, i32) {
    %c0_i32 = arith.constant 0 : i32
    %c0_i32_0 = arith.constant 0 : i32
    %c0_i32_1 = arith.constant 0 : i32
    return %arg0, %c0_i32, %c0_i32_0 : i32, i32, i32
  }
  func.func @transform_3(%arg0: i32) -> (i32, i32, i32) {
    %c0_i32 = arith.constant 0 : i32
    %c0_i32_0 = arith.constant 0 : i32
    %c0_i32_1 = arith.constant 0 : i32
    return %arg0, %c0_i32, %c0_i32_0 : i32, i32, i32
  }
}

module attributes {stable_mosaic.version = 11 : i64} {
  func.func @_fused_up_kernel(%arg0: i32, %arg1: memref<1x16x128xbf16, #tpu.memory_space<vmem>>, %arg2: memref<128x512xbf16, #tpu.memory_space<vmem>>, %arg3: memref<1x16x512xbf16, #tpu.memory_space<vmem>>) attributes {dimension_semantics = [#tpu.dimension_semantics<parallel>], iteration_bounds = array<i64: 2>, scalar_prefetch = 0 : i64, scratch_operands = 0 : i64, tpu.core_type = #tpu.core_type<tc>, window_params = [{transform_indices = @transform_0, window_bounds = array<i64: 1, 16, 128>}, {pipeline_mode = #tpu.pipeline_mode<synchronous>, transform_indices = @transform_1, window_bounds = array<i64: 128, 512>}, {transform_indices = @transform_2, window_bounds = array<i64: 1, 16, 512>}]} {
    %c0 = arith.constant 0 : index
    %c0_0 = arith.constant 0 : index
    %c0_1 = arith.constant 0 : index
    %0 = vector.load %arg1[%c0, %c0_0, %c0_1] : memref<1x16x128xbf16, #tpu.memory_space<vmem>>, vector<1x16x128xbf16>
    %1 = vector.shape_cast %0 : vector<1x16x128xbf16> to vector<16x128xbf16>
    %c0_2 = arith.constant 0 : index
    %c0_3 = arith.constant 0 : index
    %2 = vector.load %arg2[%c0_2, %c0_3] : memref<128x512xbf16, #tpu.memory_space<vmem>>, vector<128x512xbf16>
    %cst = arith.constant dense<0.000000e+00> : vector<16x512xf32>
    %3 = tpu.matmul %1, %2, %cst {dimension_numbers = #tpu.dot_dimension_numbers<[1], [0], [0], [1], [0, 0, 1, 1], [], []>} : vector<16x128xbf16>, vector<128x512xbf16>, vector<16x512xf32> -> vector<16x512xf32>
    %cst_4 = arith.constant dense<0.000000e+00> : vector<512xf32>
    %4 = vector.multi_reduction <add>, %3, %cst_4 [0] : vector<16x512xf32> to vector<512xf32>
    %5 = vector.shape_cast %4 : vector<512xf32> to vector<1x512xf32>
    %6 = vector.extract_strided_slice %5 {offsets = [0, 0], sizes = [1, 128], strides = [1, 1]} : vector<1x512xf32> to vector<1x128xf32>
    %7 = vector.extract_strided_slice %5 {offsets = [0, 128], sizes = [1, 128], strides = [1, 1]} : vector<1x512xf32> to vector<1x128xf32>
    %8 = arith.addf %6, %7 : vector<1x128xf32>
    %9 = vector.extract_strided_slice %5 {offsets = [0, 256], sizes = [1, 128], strides = [1, 1]} : vector<1x512xf32> to vector<1x128xf32>
    %10 = arith.addf %8, %9 : vector<1x128xf32>
    %11 = vector.extract_strided_slice %5 {offsets = [0, 384], sizes = [1, 128], strides = [1, 1]} : vector<1x512xf32> to vector<1x128xf32>
    %12 = arith.addf %10, %11 : vector<1x128xf32>
    %cst_5 = arith.constant 1.562500e-02 : f32
    %13 = vector.broadcast %cst_5 : f32 to vector<1x128xf32>
    %14 = arith.mulf %12, %13 : vector<1x128xf32>
    %15 = tpu.concatenate %14, %14, %14, %14 in 1 : vector<1x128xf32>, vector<1x128xf32>, vector<1x128xf32>, vector<1x128xf32> -> vector<1x512xf32>
    %16 = vector.broadcast %15 : vector<1x512xf32> to vector<16x512xf32>
    %17 = arith.subf %3, %16 : vector<16x512xf32>
    %18 = arith.mulf %17, %17 : vector<16x512xf32>
    %cst_6 = arith.constant dense<0.000000e+00> : vector<512xf32>
    %19 = vector.multi_reduction <add>, %18, %cst_6 [0] : vector<16x512xf32> to vector<512xf32>
    %20 = vector.shape_cast %19 : vector<512xf32> to vector<1x512xf32>
    %21 = vector.extract_strided_slice %20 {offsets = [0, 0], sizes = [1, 128], strides = [1, 1]} : vector<1x512xf32> to vector<1x128xf32>
    %22 = vector.extract_strided_slice %20 {offsets = [0, 128], sizes = [1, 128], strides = [1, 1]} : vector<1x512xf32> to vector<1x128xf32>
    %23 = arith.addf %21, %22 : vector<1x128xf32>
    %24 = vector.extract_strided_slice %20 {offsets = [0, 256], sizes = [1, 128], strides = [1, 1]} : vector<1x512xf32> to vector<1x128xf32>
    %25 = arith.addf %23, %24 : vector<1x128xf32>
    %26 = vector.extract_strided_slice %20 {offsets = [0, 384], sizes = [1, 128], strides = [1, 1]} : vector<1x512xf32> to vector<1x128xf32>
    %27 = arith.addf %25, %26 : vector<1x128xf32>
    %cst_7 = arith.constant 1.562500e-02 : f32
    %28 = vector.broadcast %cst_7 : f32 to vector<1x128xf32>
    %29 = arith.mulf %27, %28 : vector<1x128xf32>
    %cst_8 = arith.constant 9.99999974E-6 : f32
    %30 = vector.broadcast %cst_8 : f32 to vector<1x128xf32>
    %31 = arith.addf %29, %30 : vector<1x128xf32>
    %32 = math.rsqrt %31 : vector<1x128xf32>
    %33 = tpu.concatenate %32, %32, %32, %32 in 1 : vector<1x128xf32>, vector<1x128xf32>, vector<1x128xf32>, vector<1x128xf32> -> vector<1x512xf32>
    %34 = vector.broadcast %33 : vector<1x512xf32> to vector<16x512xf32>
    %35 = arith.mulf %17, %34 : vector<16x512xf32>
    %cst_9 = arith.constant 0.000000e+00 : f32
    %36 = vector.broadcast %cst_9 : f32 to vector<16x512xf32>
    %37 = arith.maximumf %35, %36 : vector<16x512xf32>
    %38 = arith.truncf %37 : vector<16x512xf32> to vector<16x512xbf16>
    %c0_10 = arith.constant 0 : index
    %c0_11 = arith.constant 0 : index
    %c0_12 = arith.constant 0 : index
    %39 = vector.load %arg3[%c0_10, %c0_11, %c0_12] : memref<1x16x512xbf16, #tpu.memory_space<vmem>>, vector<1x16x512xbf16>
    %40 = vector.shape_cast %39 : vector<1x16x512xbf16> to vector<16x512xbf16>
    %41 = vector.shape_cast %38 : vector<16x512xbf16> to vector<1x16x512xbf16>
    tpu.vector_store %arg3[%c0_10, %c0_11, %c0_12], %41 {strides = array<i32>} : memref<1x16x512xbf16, #tpu.memory_space<vmem>>, vector<1x16x512xbf16>,
    return
  }
  func.func @transform_0(%arg0: i32) -> (i32, i32, i32) {
    %c0_i32 = arith.constant 0 : i32
    %c0_i32_0 = arith.constant 0 : i32
    %c0_i32_1 = arith.constant 0 : i32
    return %arg0, %c0_i32, %c0_i32_0 : i32, i32, i32
  }
  func.func @transform_1(%arg0: i32) -> (i32, i32) {
    %c0_i32 = arith.constant 0 : i32
    %c0_i32_0 = arith.constant 0 : i32
    %c0_i32_1 = arith.constant 0 : i32
    return %c0_i32, %c0_i32_0 : i32, i32
  }
  func.func @transform_2(%arg0: i32) -> (i32, i32, i32) {
    %c0_i32 = arith.constant 0 : i32
    %c0_i32_0 = arith.constant 0 : i32
    %c0_i32_1 = arith.constant 0 : i32
    return %arg0, %c0_i32, %c0_i32_0 : i32, i32, i32
  }
}

module attributes {stable_mosaic.version = 11 : i64} {
  func.func @_fused_up_kernel(%arg0: i32, %arg1: memref<1x64x128xbf16, #tpu.memory_space<vmem>>, %arg2: memref<128x512xbf16, #tpu.memory_space<vmem>>, %arg3: memref<1x64x512xbf16, #tpu.memory_space<vmem>>) attributes {dimension_semantics = [#tpu.dimension_semantics<parallel>], iteration_bounds = array<i64: 2>, scalar_prefetch = 0 : i64, scratch_operands = 0 : i64, tpu.core_type = #tpu.core_type<tc>, window_params = [{transform_indices = @transform_0, window_bounds = array<i64: 1, 64, 128>}, {pipeline_mode = #tpu.pipeline_mode<synchronous>, transform_indices = @transform_1, window_bounds = array<i64: 128, 512>}, {transform_indices = @transform_2, window_bounds = array<i64: 1, 64, 512>}]} {
    %c0 = arith.constant 0 : index
    %c0_0 = arith.constant 0 : index
    %c0_1 = arith.constant 0 : index
    %0 = vector.load %arg1[%c0, %c0_0, %c0_1] : memref<1x64x128xbf16, #tpu.memory_space<vmem>>, vector<1x64x128xbf16>
    %1 = vector.shape_cast %0 : vector<1x64x128xbf16> to vector<64x128xbf16>
    %c0_2 = arith.constant 0 : index
    %c0_3 = arith.constant 0 : index
    %2 = vector.load %arg2[%c0_2, %c0_3] : memref<128x512xbf16, #tpu.memory_space<vmem>>, vector<128x512xbf16>
    %cst = arith.constant dense<0.000000e+00> : vector<64x512xf32>
    %3 = tpu.matmul %1, %2, %cst {dimension_numbers = #tpu.dot_dimension_numbers<[1], [0], [0], [1], [0, 0, 1, 1], [], []>} : vector<64x128xbf16>, vector<128x512xbf16>, vector<64x512xf32> -> vector<64x512xf32>
    %cst_4 = arith.constant dense<0.000000e+00> : vector<512xf32>
    %4 = vector.multi_reduction <add>, %3, %cst_4 [0] : vector<64x512xf32> to vector<512xf32>
    %5 = vector.shape_cast %4 : vector<512xf32> to vector<1x512xf32>
    %6 = vector.extract_strided_slice %5 {offsets = [0, 0], sizes = [1, 128], strides = [1, 1]} : vector<1x512xf32> to vector<1x128xf32>
    %7 = vector.extract_strided_slice %5 {offsets = [0, 128], sizes = [1, 128], strides = [1, 1]} : vector<1x512xf32> to vector<1x128xf32>
    %8 = arith.addf %6, %7 : vector<1x128xf32>
    %9 = vector.extract_strided_slice %5 {offsets = [0, 256], sizes = [1, 128], strides = [1, 1]} : vector<1x512xf32> to vector<1x128xf32>
    %10 = arith.addf %8, %9 : vector<1x128xf32>
    %11 = vector.extract_strided_slice %5 {offsets = [0, 384], sizes = [1, 128], strides = [1, 1]} : vector<1x512xf32> to vector<1x128xf32>
    %12 = arith.addf %10, %11 : vector<1x128xf32>
    %cst_5 = arith.constant 3.906250e-03 : f32
    %13 = vector.broadcast %cst_5 : f32 to vector<1x128xf32>
    %14 = arith.mulf %12, %13 : vector<1x128xf32>
    %15 = tpu.concatenate %14, %14, %14, %14 in 1 : vector<1x128xf32>, vector<1x128xf32>, vector<1x128xf32>, vector<1x128xf32> -> vector<1x512xf32>
    %16 = vector.broadcast %15 : vector<1x512xf32> to vector<64x512xf32>
    %17 = arith.subf %3, %16 : vector<64x512xf32>
    %18 = arith.mulf %17, %17 : vector<64x512xf32>
    %cst_6 = arith.constant dense<0.000000e+00> : vector<512xf32>
    %19 = vector.multi_reduction <add>, %18, %cst_6 [0] : vector<64x512xf32> to vector<512xf32>
    %20 = vector.shape_cast %19 : vector<512xf32> to vector<1x512xf32>
    %21 = vector.extract_strided_slice %20 {offsets = [0, 0], sizes = [1, 128], strides = [1, 1]} : vector<1x512xf32> to vector<1x128xf32>
    %22 = vector.extract_strided_slice %20 {offsets = [0, 128], sizes = [1, 128], strides = [1, 1]} : vector<1x512xf32> to vector<1x128xf32>
    %23 = arith.addf %21, %22 : vector<1x128xf32>
    %24 = vector.extract_strided_slice %20 {offsets = [0, 256], sizes = [1, 128], strides = [1, 1]} : vector<1x512xf32> to vector<1x128xf32>
    %25 = arith.addf %23, %24 : vector<1x128xf32>
    %26 = vector.extract_strided_slice %20 {offsets = [0, 384], sizes = [1, 128], strides = [1, 1]} : vector<1x512xf32> to vector<1x128xf32>
    %27 = arith.addf %25, %26 : vector<1x128xf32>
    %cst_7 = arith.constant 3.906250e-03 : f32
    %28 = vector.broadcast %cst_7 : f32 to vector<1x128xf32>
    %29 = arith.mulf %27, %28 : vector<1x128xf32>
    %cst_8 = arith.constant 9.99999974E-6 : f32
    %30 = vector.broadcast %cst_8 : f32 to vector<1x128xf32>
    %31 = arith.addf %29, %30 : vector<1x128xf32>
    %32 = math.rsqrt %31 : vector<1x128xf32>
    %33 = tpu.concatenate %32, %32, %32, %32 in 1 : vector<1x128xf32>, vector<1x128xf32>, vector<1x128xf32>, vector<1x128xf32> -> vector<1x512xf32>
    %34 = vector.broadcast %33 : vector<1x512xf32> to vector<64x512xf32>
    %35 = arith.mulf %17, %34 : vector<64x512xf32>
    %cst_9 = arith.constant 0.000000e+00 : f32
    %36 = vector.broadcast %cst_9 : f32 to vector<64x512xf32>
    %37 = arith.maximumf %35, %36 : vector<64x512xf32>
    %38 = arith.truncf %37 : vector<64x512xf32> to vector<64x512xbf16>
    %c0_10 = arith.constant 0 : index
    %c0_11 = arith.constant 0 : index
    %c0_12 = arith.constant 0 : index
    %39 = vector.load %arg3[%c0_10, %c0_11, %c0_12] : memref<1x64x512xbf16, #tpu.memory_space<vmem>>, vector<1x64x512xbf16>
    %40 = vector.shape_cast %39 : vector<1x64x512xbf16> to vector<64x512xbf16>
    %41 = vector.shape_cast %38 : vector<64x512xbf16> to vector<1x64x512xbf16>
    tpu.vector_store %arg3[%c0_10, %c0_11, %c0_12], %41 {strides = array<i32>} : memref<1x64x512xbf16, #tpu.memory_space<vmem>>, vector<1x64x512xbf16>,
    return
  }
  func.func @transform_0(%arg0: i32) -> (i32, i32, i32) {
    %c0_i32 = arith.constant 0 : i32
    %c0_i32_0 = arith.constant 0 : i32
    %c0_i32_1 = arith.constant 0 : i32
    return %arg0, %c0_i32, %c0_i32_0 : i32, i32, i32
  }
  func.func @transform_1(%arg0: i32) -> (i32, i32) {
    %c0_i32 = arith.constant 0 : i32
    %c0_i32_0 = arith.constant 0 : i32
    %c0_i32_1 = arith.constant 0 : i32
    return %c0_i32, %c0_i32_0 : i32, i32
  }
  func.func @transform_2(%arg0: i32) -> (i32, i32, i32) {
    %c0_i32 = arith.constant 0 : i32
    %c0_i32_0 = arith.constant 0 : i32
    %c0_i32_1 = arith.constant 0 : i32
    return %arg0, %c0_i32, %c0_i32_0 : i32, i32, i32
  }
}

module attributes {stable_mosaic.version = 11 : i64} {
  func.func @_final_conv_kernel(%arg0: i32, %arg1: memref<1x256x512xbf16, #tpu.memory_space<vmem>>, %arg2: memref<512x128xbf16, #tpu.memory_space<vmem>>, %arg3: memref<1x128xf32, #tpu.memory_space<vmem>>, %arg4: memref<1x8x256xf32, #tpu.memory_space<vmem>>) attributes {dimension_semantics = [#tpu.dimension_semantics<parallel>], iteration_bounds = array<i64: 2>, scalar_prefetch = 0 : i64, scratch_operands = 0 : i64, tpu.core_type = #tpu.core_type<tc>, window_params = [{transform_indices = @transform_0, window_bounds = array<i64: 1, 256, 512>}, {pipeline_mode = #tpu.pipeline_mode<synchronous>, transform_indices = @transform_1, window_bounds = array<i64: 512, 128>}, {pipeline_mode = #tpu.pipeline_mode<synchronous>, transform_indices = @transform_2, window_bounds = array<i64: 1, 128>}, {transform_indices = @transform_3, window_bounds = array<i64: 1, 8, 256>}]} {
    %c0 = arith.constant 0 : index
    %c0_0 = arith.constant 0 : index
    %c0_1 = arith.constant 0 : index
    %0 = vector.load %arg1[%c0, %c0_0, %c0_1] : memref<1x256x512xbf16, #tpu.memory_space<vmem>>, vector<1x256x512xbf16>
    %1 = vector.shape_cast %0 : vector<1x256x512xbf16> to vector<256x512xbf16>
    %c0_2 = arith.constant 0 : index
    %c0_3 = arith.constant 0 : index
    %2 = vector.load %arg2[%c0_2, %c0_3] : memref<512x128xbf16, #tpu.memory_space<vmem>>, vector<512x128xbf16>
    %cst = arith.constant dense<0.000000e+00> : vector<256x128xf32>
    %3 = tpu.matmul %1, %2, %cst {dimension_numbers = #tpu.dot_dimension_numbers<[1], [0], [0], [1], [0, 0, 1, 1], [], []>} : vector<256x512xbf16>, vector<512x128xbf16>, vector<256x128xf32> -> vector<256x128xf32>
    %c0_4 = arith.constant 0 : index
    %c0_5 = arith.constant 0 : index
    %4 = vector.load %arg3[%c0_4, %c0_5] : memref<1x128xf32, #tpu.memory_space<vmem>>, vector<1x128xf32>
    %5 = vector.broadcast %4 : vector<1x128xf32> to vector<256x128xf32>
    %6 = arith.addf %3, %5 : vector<256x128xf32>
    %7 = tpu.transpose %6, [1, 0] : vector<256x128xf32> -> vector<128x256xf32>
    %8 = vector.extract_strided_slice %7 {offsets = [0, 0], sizes = [8, 256], strides = [1, 1]} : vector<128x256xf32> to vector<8x256xf32>
    %9 = math.tanh %8 : vector<8x256xf32>
    %c0_6 = arith.constant 0 : index
    %c0_7 = arith.constant 0 : index
    %c0_8 = arith.constant 0 : index
    %10 = vector.load %arg4[%c0_6, %c0_7, %c0_8] : memref<1x8x256xf32, #tpu.memory_space<vmem>>, vector<1x8x256xf32>
    %11 = vector.shape_cast %10 : vector<1x8x256xf32> to vector<8x256xf32>
    %12 = vector.shape_cast %9 : vector<8x256xf32> to vector<1x8x256xf32>
    tpu.vector_store %arg4[%c0_6, %c0_7, %c0_8], %12 {strides = array<i32>} : memref<1x8x256xf32, #tpu.memory_space<vmem>>, vector<1x8x256xf32>,
    return
  }
  func.func @transform_0(%arg0: i32) -> (i32, i32, i32) {
    %c0_i32 = arith.constant 0 : i32
    %c0_i32_0 = arith.constant 0 : i32
    %c0_i32_1 = arith.constant 0 : i32
    return %arg0, %c0_i32, %c0_i32_0 : i32, i32, i32
  }
  func.func @transform_1(%arg0: i32) -> (i32, i32) {
    %c0_i32 = arith.constant 0 : i32
    %c0_i32_0 = arith.constant 0 : i32
    %c0_i32_1 = arith.constant 0 : i32
    return %c0_i32, %c0_i32_0 : i32, i32
  }
  func.func @transform_2(%arg0: i32) -> (i32, i32) {
    %c0_i32 = arith.constant 0 : i32
    %c0_i32_0 = arith.constant 0 : i32
    %c0_i32_1 = arith.constant 0 : i32
    return %c0_i32, %c0_i32_0 : i32, i32
  }
  func.func @transform_3(%arg0: i32) -> (i32, i32, i32) {
    %c0_i32 = arith.constant 0 : i32
    %c0_i32_0 = arith.constant 0 : i32
    %c0_i32_1 = arith.constant 0 : i32
    return %arg0, %c0_i32, %c0_i32_0 : i32, i32, i32
  }
}

</mosaic_0001>

<llo_original>
// kernel: generator_forward.10
$region0: #{generator_forward.10}
  #allocation0 [shape = 'u32[]', space=smem, size = 0x4, offset = 0x4, fixed_abs, tag = 'smem constant byte address 0x4 - core index']
  #allocation1 [shape = 'u32[72,128]{1,0:T(1,128)}', space=vmem, size = 0x9000, scoped, tag = 'internal scratch']
  %s0 = inlined_call_operand.vmem [shape: bf16[2,256,256], index: 0, kind: input, shape index: {}]
  %s1 = inlined_call_operand.vmem [shape: bf16[256,128], index: 1, kind: input, shape index: {}]
  %s2 = inlined_call_operand.vmem [shape: bf16[2,256,128], index: 2, kind: output, shape index: {}]
  %s3 = sld [smem:[#allocation0]]
  $region41: #{generator_forward.10} parent=0
    _
  %s5 = ssub.s32 1, %s3
  %s6 = scalar_select 0, %s5, %s3
  loop: start=0, step=1, limit=4
  $region2: #{generator_forward.10} parent=0 // loop_pre_header
    _
  $region3: #{generator_forward.10} parent=0 // loop_header
    %s8 = sphi 0, %s12
    %p9 = scmp.ge.s32.totalorder %s8, 4
    %s18 = sphi 0, %s20
    %s21 = sphi 0, %s18
    %s22 = sphi 0, %s21
    %s38 = sphi 0, %s22
    %s42 = sphi 0, %s42
    %s44 = sphi 0, %s42
    %s45 = sphi 0, %s44
    %s59 = sphi 0, %s45
    %s65 = sphi 0, %s67
    %s68 = sphi 0, %s65
    %s69 = sphi 0, %s68
    %s85 = sphi 0, %s69
  $region4: #{generator_forward.10} parent=0 // loop_header_branch
    %11 = sbr.rel (%p9) target = $region8
  $region5: #{generator_forward.10} parent=0 // loop_body
    %s13 = ssub.s32 %s8, 1
    %s14 = ssub.s32 %s8, 2
    %s15 = sadd.s32 %s8, 1
    %s16 = ssub.s32 %s8, %s15
    %p17 = scmp.eq.s32.totalorder %s16, 0
    %s19 = sadd.s32 %s18, 1
    %s20 = scalar_select %p17, %s18, %s19
    %p23 = pneg %p17
    %p24 = scmp.eq.s32.totalorder %s8, 1
    %p25 = por %p23, %p24
    %p26 = scmp.ne.s32.totalorder %s18, %s21
    %p27 = scmp.eq.s32.totalorder %s8, 0
    %p28 = por %p26, %p27
    %p29 = scmp.ne.s32.totalorder %s18, %s21
    %p30 = scmp.eq.s32.totalorder %s13, 1
    %p31 = por %p29, %p30
    %p32 = scmp.ne.s32.totalorder %s21, %s22
    %p33 = scmp.eq.s32.totalorder %s13, 0
    %p34 = por %p32, %p33
    %p35 = scmp.ne.s32.totalorder %s21, %s22
    %p36 = scmp.eq.s32.totalorder %s14, 1
    %p37 = por %p35, %p36
    %p39 = scmp.ne.s32.totalorder %s22, %s38
    %p40 = scmp.eq.s32.totalorder %s14, 0
    %p41 = por %p39, %p40
    %s43 = sadd.s32 %s42, 1
    %p46 = scmp.eq.s32.totalorder %s8, 1
    %p47 = scmp.ne.s32.totalorder %s42, %s44
    %p48 = scmp.eq.s32.totalorder %s8, 0
    %p49 = por %p47, %p48
    %p50 = scmp.ne.s32.totalorder %s42, %s44
    %p51 = scmp.eq.s32.totalorder %s13, 1
    %p52 = por %p50, %p51
    %p53 = scmp.ne.s32.totalorder %s44, %s45
    %p54 = scmp.eq.s32.totalorder %s13, 0
    %p55 = por %p53, %p54
    %p56 = scmp.ne.s32.totalorder %s44, %s45
    %p57 = scmp.eq.s32.totalorder %s14, 1
    %p58 = por %p56, %p57
    %p60 = scmp.ne.s32.totalorder %s45, %s59
    %p61 = scmp.eq.s32.totalorder %s14, 0
    %p62 = por %p60, %p61
    %s63 = ssub.s32 %s8, %s15
    %p64 = scmp.eq.s32.totalorder %s63, 0
    %s66 = sadd.s32 %s65, 1
    %s67 = scalar_select %p64, %s65, %s66
    %p70 = pneg %p64
    %p71 = scmp.eq.s32.totalorder %s8, 1
    %p72 = por %p70, %p71
    %p73 = scmp.ne.s32.totalorder %s65, %s68
    %p74 = scmp.eq.s32.totalorder %s8, 0
    %p75 = por %p73, %p74
    %p76 = scmp.ne.s32.totalorder %s65, %s68
    %p77 = scmp.eq.s32.totalorder %s13, 1
    %p78 = por %p76, %p77
    %p79 = scmp.ne.s32.totalorder %s68, %s69
    %p80 = scmp.eq.s32.totalorder %s13, 0
    %p81 = por %p79, %p80
    %p82 = scmp.ne.s32.totalorder %s68, %s69
    %p83 = scmp.eq.s32.totalorder %s14, 1
    %p84 = por %p82, %p83
    %p86 = scmp.ne.s32.totalorder %s69, %s85
    %p87 = scmp.eq.s32.totalorder %s14, 0
    %p88 = por %p86, %p87
    %p89 = scmp.le.s32.totalorder 1, %s8
    %p90 = scmp.lt.s32.totalorder %s8, 3
    %p91 = pnand %p89, %p90
    %p92 = pneg %p91
    // Predicated region
    $region9: #{generator_forward.10} parent=5 // pred_check
      _
    $region10: #{generator_forward.10} parent=5 // pred_check_branch
      %94 = sbr.rel (%p91) target = $region12
    $region11: #{generator_forward.10} parent=5 // pred_region
      %s95 = ssub.s32 %s8, 1
      // Predicated region
      $region13: #{generator_forward.10} parent=11 // pred_check
        %p96 = pneg %p55
      $region14: #{generator_forward.10} parent=11 // pred_check_branch
        %98 = sbr.rel (%p96) target = $region16
      $region15: #{generator_forward.10} parent=11 // pred_region
        _
      $region16: #{generator_forward.10} parent=11 // pred_fallthru
        _
    $region12: #{generator_forward.10} parent=5 // pred_fallthru
      _
    %p99 = scmp.lt.s32.totalorder %s8, 2
    // Predicated region
    $region17: #{generator_forward.10} parent=5 // pred_check
      %p100 = pneg %p99
    $region18: #{generator_forward.10} parent=5 // pred_check_branch
      %102 = sbr.rel (%p100) target = $region20
    $region19: #{generator_forward.10} parent=5 // pred_region
      // Predicated region
      $region21: #{generator_forward.10} parent=19 // pred_check
        %p103 = pneg %p28
      $region22: #{generator_forward.10} parent=19 // pred_check_branch
        %105 = sbr.rel (%p103) target = $region24
      $region23: #{generator_forward.10} parent=19 // pred_region
        %p106 = scmp.lt.s32.totalorder %s8, 1
        %s107 = scalar_select %p106, %s8, 1
        %s108 = smul.addr %s107, 64
        %s109 = smul.addr %s108, 4
        %s110 = scalar_lea.vmem %s0, %s109
      $region24: #{generator_forward.10} parent=19 // pred_fallthru
        _
    $region20: #{generator_forward.10} parent=5 // pred_fallthru
      _
    %p111 = scmp.le.s32.totalorder 1, %s8
    %p112 = scmp.lt.s32.totalorder %s8, 3
    %p113 = pnand %p111, %p112
    %p114 = pneg %p113
    // Predicated region
    $region25: #{generator_forward.10} parent=5 // pred_check
      _
    $region26: #{generator_forward.10} parent=5 // pred_check_branch
      %116 = sbr.rel (%p113) target = $region28
    $region27: #{generator_forward.10} parent=5 // pred_region
      %s117 = ssub.s32 %s8, 1
      %p118 = scmp.lt.s32.totalorder %s13, 1
      %s119 = scalar_select %p118, %s13, 1
      %s120 = smul.addr %s119, 64
      %s121 = smul.addr %s120, 4
      %s122 = scalar_lea.vmem %s0, %s121
      %p123 = pneg %p34
      %p124 = pneg %p31
      %p125 = pneg %p55
      %p126 = pneg %p52
      %p127 = pneg %p81
      %p128 = pneg %p78
      %p129 = scmp.lt.s32.totalorder %s13, 1
      %s130 = scalar_select %p129, %s13, 1
      %s131 = smul.addr %s130, 32
      %s132 = smul.addr %s131, 4
      %s133 = scalar_lea.vmem %s2, %s132
      %p134 = scmp.lt.s32.totalorder %s13, 1
      %s135 = scalar_select %p134, %s13, 1
      %s136 = smul.addr %s135, 64
      %s137 = smul.addr %s136, 4
      %s138 = scalar_lea.vmem %s0, %s137
      %p139 = scmp.lt.s32.totalorder %s13, 1
      %s140 = scalar_select %p139, %s13, 1
      %s141 = smul.addr %s140, 32
      %s142 = smul.addr %s141, 4
      %s143 = scalar_lea.vmem %s2, %s142
      %v144 = vld [vmem:[%s138] sm:$0xff]
      %v145 = vld [vmem:[%s138 + $0x8] sm:$0xff]
      %v146 = vld [vmem:[%s138 + $0x10] sm:$0xff]
      %v147 = vld [vmem:[%s138 + $0x18] sm:$0xff]
      %v148 = vld [vmem:[%s138 + $0x20] sm:$0xff]
      %v149 = vld [vmem:[%s138 + $0x28] sm:$0xff]
      %v150 = vld [vmem:[%s138 + $0x30] sm:$0xff]
      %v151 = vld [vmem:[%s138 + $0x38] sm:$0xff]
      %v152 = vld [vmem:[%s138 + $0x40] sm:$0xff]
      %v153 = vld [vmem:[%s138 + $0x48] sm:$0xff]
      %v154 = vld [vmem:[%s138 + $0x50] sm:$0xff]
      %v155 = vld [vmem:[%s138 + $0x58] sm:$0xff]
      %v156 = vld [vmem:[%s138 + $0x60] sm:$0xff]
      %v157 = vld [vmem:[%s138 + $0x68] sm:$0xff]
      %v158 = vld [vmem:[%s138 + $0x70] sm:$0xff]
      %v159 = vld [vmem:[%s138 + $0x78] sm:$0xff]
      %v160 = vld [vmem:[%s138 + $0x80] sm:$0xff]
      %v161 = vld [vmem:[%s138 + $0x88] sm:$0xff]
      %v162 = vld [vmem:[%s138 + $0x90] sm:$0xff]
      %v163 = vld [vmem:[%s138 + $0x98] sm:$0xff]
      %v164 = vld [vmem:[%s138 + $0xa0] sm:$0xff]
      %v165 = vld [vmem:[%s138 + $0xa8] sm:$0xff]
      %v166 = vld [vmem:[%s138 + $0xb0] sm:$0xff]
      %v167 = vld [vmem:[%s138 + $0xb8] sm:$0xff]
      %v168 = vld [vmem:[%s138 + $0xc0] sm:$0xff]
      %v169 = vld [vmem:[%s138 + $0xc8] sm:$0xff]
      %v170 = vld [vmem:[%s138 + $0xd0] sm:$0xff]
      %v171 = vld [vmem:[%s138 + $0xd8] sm:$0xff]
      %v172 = vld [vmem:[%s138 + $0xe0] sm:$0xff]
      %v173 = vld [vmem:[%s138 + $0xe8] sm:$0xff]
      %v174 = vld [vmem:[%s138 + $0xf0] sm:$0xff]
      %v175 = vld [vmem:[%s138 + $0xf8] sm:$0xff]
      %v176 = vld [vmem:[%s1] sm:$0xf]
      %v177 = vld [vmem:[%s1 + $0x4] sm:$0xf]
      %v178 = vld [vmem:[%s1 + $0x8] sm:$0xf]
      %v179 = vld [vmem:[%s1 + $0xc] sm:$0xf]
      %v180 = vld [vmem:[%s1 + $0x10] sm:$0xf]
      %v181 = vld [vmem:[%s1 + $0x14] sm:$0xf]
      %v182 = vld [vmem:[%s1 + $0x18] sm:$0xf]
      %v183 = vld [vmem:[%s1 + $0x1c] sm:$0xf]
      %v184 = vld [vmem:[%s1 + $0x20] sm:$0xf]
      %v185 = vld [vmem:[%s1 + $0x24] sm:$0xf]
      %v186 = vld [vmem:[%s1 + $0x28] sm:$0xf]
      %v187 = vld [vmem:[%s1 + $0x2c] sm:$0xf]
      %v188 = vld [vmem:[%s1 + $0x30] sm:$0xf]
      %v189 = vld [vmem:[%s1 + $0x34] sm:$0xf]
      %v190 = vld [vmem:[%s1 + $0x38] sm:$0xf]
      %v191 = vld [vmem:[%s1 + $0x3c] sm:$0xf]
      %v192 = vld [vmem:[%s1 + $0x40] sm:$0xf]
      %v193 = vld [vmem:[%s1 + $0x44] sm:$0xf]
      %v194 = vld [vmem:[%s1 + $0x48] sm:$0xf]
      %v195 = vld [vmem:[%s1 + $0x4c] sm:$0xf]
      %v196 = vld [vmem:[%s1 + $0x50] sm:$0xf]
      %v197 = vld [vmem:[%s1 + $0x54] sm:$0xf]
      %v198 = vld [vmem:[%s1 + $0x58] sm:$0xf]
      %v199 = vld [vmem:[%s1 + $0x5c] sm:$0xf]
      %v200 = vld [vmem:[%s1 + $0x60] sm:$0xf]
      %v201 = vld [vmem:[%s1 + $0x64] sm:$0xf]
      %v202 = vld [vmem:[%s1 + $0x68] sm:$0xf]
      %v203 = vld [vmem:[%s1 + $0x6c] sm:$0xf]
      %v204 = vld [vmem:[%s1 + $0x70] sm:$0xf]
      %v205 = vld [vmem:[%s1 + $0x74] sm:$0xf]
      %v206 = vld [vmem:[%s1 + $0x78] sm:$0xf]
      %v207 = vld [vmem:[%s1 + $0x7c] sm:$0xf]
      %v240 = vunpack.c.l.b16 %v144
      %v241 = vunpack.c.h.b16 %v144
      %v242 = vunpack.c.l.b16 %v145
      %v243 = vunpack.c.h.b16 %v145
      %v244 = vunpack.c.l.b16 %v146
      %v245 = vunpack.c.h.b16 %v146
      %v246 = vunpack.c.l.b16 %v147
      %v247 = vunpack.c.h.b16 %v147
      %v248 = vunpack.c.l.b16 %v148
      %v249 = vunpack.c.h.b16 %v148
      %v250 = vunpack.c.l.b16 %v149
      %v251 = vunpack.c.h.b16 %v149
      %v252 = vunpack.c.l.b16 %v150
      %v253 = vunpack.c.h.b16 %v150
      %v254 = vunpack.c.l.b16 %v151
      %v255 = vunpack.c.h.b16 %v151
      %v256 = vunpack.c.l.b16 %v152
      %v257 = vunpack.c.h.b16 %v152
      %v258 = vunpack.c.l.b16 %v153
      %v259 = vunpack.c.h.b16 %v153
      %v260 = vunpack.c.l.b16 %v154
      %v261 = vunpack.c.h.b16 %v154
      %v262 = vunpack.c.l.b16 %v155
      %v263 = vunpack.c.h.b16 %v155
      %v264 = vunpack.c.l.b16 %v156
      %v265 = vunpack.c.h.b16 %v156
      %v266 = vunpack.c.l.b16 %v157
      %v267 = vunpack.c.h.b16 %v157
      %v268 = vunpack.c.l.b16 %v158
      %v269 = vunpack.c.h.b16 %v158
      %v270 = vunpack.c.l.b16 %v159
      %v271 = vunpack.c.h.b16 %v159
      %v272 = vunpack.c.l.b16 %v160
      %v273 = vunpack.c.h.b16 %v160
      %v274 = vunpack.c.l.b16 %v161
      %v275 = vunpack.c.h.b16 %v161
      %v276 = vunpack.c.l.b16 %v162
      %v277 = vunpack.c.h.b16 %v162
      %v278 = vunpack.c.l.b16 %v163
      %v279 = vunpack.c.h.b16 %v163
      %v280 = vunpack.c.l.b16 %v164
      %v281 = vunpack.c.h.b16 %v164
      %v282 = vunpack.c.l.b16 %v165
      %v283 = vunpack.c.h.b16 %v165
      %v284 = vunpack.c.l.b16 %v166
      %v285 = vunpack.c.h.b16 %v166
      %v286 = vunpack.c.l.b16 %v167
      %v287 = vunpack.c.h.b16 %v167
      %v288 = vunpack.c.l.b16 %v168
      %v289 = vunpack.c.h.b16 %v168
      %v290 = vunpack.c.l.b16 %v169
      %v291 = vunpack.c.h.b16 %v169
      %v292 = vunpack.c.l.b16 %v170
      %v293 = vunpack.c.h.b16 %v170
      %v294 = vunpack.c.l.b16 %v171
      %v295 = vunpack.c.h.b16 %v171
      %v296 = vunpack.c.l.b16 %v172
      %v297 = vunpack.c.h.b16 %v172
      %v298 = vunpack.c.l.b16 %v173
      %v299 = vunpack.c.h.b16 %v173
      %v300 = vunpack.c.l.b16 %v174
      %v301 = vunpack.c.h.b16 %v174
      %v302 = vunpack.c.l.b16 %v175
      %v303 = vunpack.c.h.b16 %v175
      %v304 = vpack.c.b16 %v242, %v240
      %v305 = vpack.c.b16 %v243, %v241
      %v306 = vpack.c.b16 %v246, %v244
      %v307 = vpack.c.b16 %v247, %v245
      %v308 = vpack.c.b16 %v250, %v248
      %v309 = vpack.c.b16 %v251, %v249
      %v310 = vpack.c.b16 %v254, %v252
      %v311 = vpack.c.b16 %v255, %v253
      %v312 = vpack.c.b16 %v258, %v256
      %v313 = vpack.c.b16 %v259, %v257
      %v314 = vpack.c.b16 %v262, %v260
      %v315 = vpack.c.b16 %v263, %v261
      %v316 = vpack.c.b16 %v266, %v264
      %v317 = vpack.c.b16 %v267, %v265
      %v318 = vpack.c.b16 %v270, %v268
      %v319 = vpack.c.b16 %v271, %v269
      %v320 = vpack.c.b16 %v274, %v272
      %v321 = vpack.c.b16 %v275, %v273
      %v322 = vpack.c.b16 %v278, %v276
      %v323 = vpack.c.b16 %v279, %v277
      %v324 = vpack.c.b16 %v282, %v280
      %v325 = vpack.c.b16 %v283, %v281
      %v326 = vpack.c.b16 %v286, %v284
      %v327 = vpack.c.b16 %v287, %v285
      %v328 = vpack.c.b16 %v290, %v288
      %v329 = vpack.c.b16 %v291, %v289
      %v330 = vpack.c.b16 %v294, %v292
      %v331 = vpack.c.b16 %v295, %v293
      %v332 = vpack.c.b16 %v298, %v296
      %v333 = vpack.c.b16 %v299, %v297
      %v334 = vpack.c.b16 %v302, %v300
      %v335 = vpack.c.b16 %v303, %v301
      %v400 = vunpack.c.l.b16 %v176
      %v401 = vunpack.c.l.b16 %v177
      %v402 = vunpack.c.l.b16 %v178
      %v403 = vunpack.c.l.b16 %v179
      %v404 = vunpack.c.l.b16 %v180
      %v405 = vunpack.c.l.b16 %v181
      %v406 = vunpack.c.l.b16 %v182
      %v407 = vunpack.c.l.b16 %v183
      %v408 = vunpack.c.l.b16 %v184
      %v409 = vunpack.c.l.b16 %v185
      %v410 = vunpack.c.l.b16 %v186
      %v411 = vunpack.c.l.b16 %v187
      %v412 = vunpack.c.l.b16 %v188
      %v413 = vunpack.c.l.b16 %v189
      %v414 = vunpack.c.l.b16 %v190
      %v415 = vunpack.c.l.b16 %v191
      %v416 = vunpack.c.l.b16 %v192
      %v417 = vunpack.c.l.b16 %v193
      %v418 = vunpack.c.l.b16 %v194
      %v419 = vunpack.c.l.b16 %v195
      %v420 = vunpack.c.l.b16 %v196
      %v421 = vunpack.c.l.b16 %v197
      %v422 = vunpack.c.l.b16 %v198
      %v423 = vunpack.c.l.b16 %v199
      %v424 = vunpack.c.l.b16 %v200
      %v425 = vunpack.c.l.b16 %v201
      %v426 = vunpack.c.l.b16 %v202
      %v427 = vunpack.c.l.b16 %v203
      %v428 = vunpack.c.l.b16 %v204
      %v429 = vunpack.c.l.b16 %v205
      %v430 = vunpack.c.l.b16 %v206
      %v431 = vunpack.c.l.b16 %v207
      %v432 = vpack.c.b16 %v401, %v400
      %v433 = vpack.c.b16 %v403, %v402
      %v434 = vpack.c.b16 %v405, %v404
      %v435 = vpack.c.b16 %v407, %v406
      %v436 = vpack.c.b16 %v409, %v408
      %v437 = vpack.c.b16 %v411, %v410
      %v438 = vpack.c.b16 %v413, %v412
      %v439 = vpack.c.b16 %v415, %v414
      %v440 = vpack.c.b16 %v417, %v416
      %v441 = vpack.c.b16 %v419, %v418
      %v442 = vpack.c.b16 %v421, %v420
      %v443 = vpack.c.b16 %v423, %v422
      %v444 = vpack.c.b16 %v425, %v424
      %v445 = vpack.c.b16 %v427, %v426
      %v446 = vpack.c.b16 %v429, %v428
      %v447 = vpack.c.b16 %v431, %v430
      %464 = vmatpush.bf16.msra.mxu0 %v439
      %465 = vmatpush.bf16.msra.mxu0 %v438
      %466 = vmatpush.bf16.msra.mxu0 %v437
      %467 = vmatpush.bf16.msra.mxu0 %v436
      %468 = vmatpush.bf16.msra.mxu0 %v435
      %469 = vmatpush.bf16.msra.mxu0 %v434
      %470 = vmatpush.bf16.msra.mxu0 %v433
      %471 = vmatpush.bf16.msra.mxu0 %v432
      %472 = vmatmul.bf16.gmra.mxu0 %v304
      %v473 = vpop.f32.mrf.mxu0
      %v474 = vadd.f32 0.0, %v473
      %v475 = vpop.f32.mrf.mxu0
      %v476 = vadd.f32 0.0, %v475
      %477 = vmatmul.bf16.gmra.mxu0 %v306
      %v478 = vpop.f32.mrf.mxu0
      %v479 = vadd.f32 0.0, %v478
      %v480 = vpop.f32.mrf.mxu0
      %v481 = vadd.f32 0.0, %v480
      %482 = vmatmul.bf16.gmra.mxu0 %v308
      %v483 = vpop.f32.mrf.mxu0
      %v484 = vadd.f32 0.0, %v483
      %v485 = vpop.f32.mrf.mxu0
      %v486 = vadd.f32 0.0, %v485
      %487 = vmatmul.bf16.gmra.mxu0 %v310
      %v488 = vpop.f32.mrf.mxu0
      %v489 = vadd.f32 0.0, %v488
      %v490 = vpop.f32.mrf.mxu0
      %v491 = vadd.f32 0.0, %v490
      %492 = vmatmul.bf16.gmra.mxu0 %v312
      %v493 = vpop.f32.mrf.mxu0
      %v494 = vadd.f32 0.0, %v493
      %v495 = vpop.f32.mrf.mxu0
      %v496 = vadd.f32 0.0, %v495
      %497 = vmatmul.bf16.gmra.mxu0 %v314
      %v498 = vpop.f32.mrf.mxu0
      %v499 = vadd.f32 0.0, %v498
      %v500 = vpop.f32.mrf.mxu0
      %v501 = vadd.f32 0.0, %v500
      %502 = vmatmul.bf16.gmra.mxu0 %v316
      %v503 = vpop.f32.mrf.mxu0
      %v504 = vadd.f32 0.0, %v503
      %v505 = vpop.f32.mrf.mxu0
      %v506 = vadd.f32 0.0, %v505
      %507 = vmatmul.bf16.gmra.mxu0 %v318
      %v508 = vpop.f32.mrf.mxu0
      %v509 = vadd.f32 0.0, %v508
      %v510 = vpop.f32.mrf.mxu0
      %v511 = vadd.f32 0.0, %v510
      %512 = vmatmul.bf16.gmra.mxu0 %v320
      %v513 = vpop.f32.mrf.mxu0
      %v514 = vadd.f32 0.0, %v513
      %v515 = vpop.f32.mrf.mxu0
      %v516 = vadd.f32 0.0, %v515
      %517 = vmatmul.bf16.gmra.mxu0 %v322
      %v518 = vpop.f32.mrf.mxu0
      %v519 = vadd.f32 0.0, %v518
      %v520 = vpop.f32.mrf.mxu0
      %v521 = vadd.f32 0.0, %v520
      %522 = vmatmul.bf16.gmra.mxu0 %v324
      %v523 = vpop.f32.mrf.mxu0
      %v524 = vadd.f32 0.0, %v523
      %v525 = vpop.f32.mrf.mxu0
      %v526 = vadd.f32 0.0, %v525
      %527 = vmatmul.bf16.gmra.mxu0 %v326
      %v528 = vpop.f32.mrf.mxu0
      %v529 = vadd.f32 0.0, %v528
      %v530 = vpop.f32.mrf.mxu0
      %v531 = vadd.f32 0.0, %v530
      %532 = vmatmul.bf16.gmra.mxu0 %v328
      %v533 = vpop.f32.mrf.mxu0
      %v534 = vadd.f32 0.0, %v533
      %v535 = vpop.f32.mrf.mxu0
      %v536 = vadd.f32 0.0, %v535
      %537 = vmatmul.bf16.gmra.mxu0 %v330
      %v538 = vpop.f32.mrf.mxu0
      %v539 = vadd.f32 0.0, %v538
      %v540 = vpop.f32.mrf.mxu0
      %v541 = vadd.f32 0.0, %v540
      %542 = vmatmul.bf16.gmra.mxu0 %v332
      %v543 = vpop.f32.mrf.mxu0
      %v544 = vadd.f32 0.0, %v543
      %v545 = vpop.f32.mrf.mxu0
      %v546 = vadd.f32 0.0, %v545
      %547 = vmatmul.bf16.gmra.mxu0 %v334
      %v548 = vpop.f32.mrf.mxu0
      %v549 = vadd.f32 0.0, %v548
      %v550 = vpop.f32.mrf.mxu0
      %v551 = vadd.f32 0.0, %v550
      %552 = vdwg.mxu0
      %553 = vmatpush.bf16.msra.mxu0 %v447
      %554 = vmatpush.bf16.msra.mxu0 %v446
      %555 = vmatpush.bf16.msra.mxu0 %v445
      %556 = vmatpush.bf16.msra.mxu0 %v444
      %557 = vmatpush.bf16.msra.mxu0 %v443
      %558 = vmatpush.bf16.msra.mxu0 %v442
      %559 = vmatpush.bf16.msra.mxu0 %v441
      %560 = vmatpush.bf16.msra.mxu0 %v440
      %561 = vmatmul.bf16.gmra.mxu0 %v305
      %v562 = vpop.f32.mrf.mxu0
      %v563 = vadd.f32 %v474, %v562
      %v564 = vpop.f32.mrf.mxu0
      %v565 = vadd.f32 %v476, %v564
      %566 = vmatmul.bf16.gmra.mxu0 %v307
      %v567 = vpop.f32.mrf.mxu0
      %v568 = vadd.f32 %v479, %v567
      %v569 = vpop.f32.mrf.mxu0
      %v570 = vadd.f32 %v481, %v569
      %571 = vmatmul.bf16.gmra.mxu0 %v309
      %v572 = vpop.f32.mrf.mxu0
      %v573 = vadd.f32 %v484, %v572
      %v574 = vpop.f32.mrf.mxu0
      %v575 = vadd.f32 %v486, %v574
      %576 = vmatmul.bf16.gmra.mxu0 %v311
      %v577 = vpop.f32.mrf.mxu0
      %v578 = vadd.f32 %v489, %v577
      %v579 = vpop.f32.mrf.mxu0
      %v580 = vadd.f32 %v491, %v579
      %581 = vmatmul.bf16.gmra.mxu0 %v313
      %v582 = vpop.f32.mrf.mxu0
      %v583 = vadd.f32 %v494, %v582
      %v584 = vpop.f32.mrf.mxu0
      %v585 = vadd.f32 %v496, %v584
      %586 = vmatmul.bf16.gmra.mxu0 %v315
      %v587 = vpop.f32.mrf.mxu0
      %v588 = vadd.f32 %v499, %v587
      %v589 = vpop.f32.mrf.mxu0
      %v590 = vadd.f32 %v501, %v589
      %591 = vmatmul.bf16.gmra.mxu0 %v317
      %v592 = vpop.f32.mrf.mxu0
      %v593 = vadd.f32 %v504, %v592
      %v594 = vpop.f32.mrf.mxu0
      %v595 = vadd.f32 %v506, %v594
      %596 = vmatmul.bf16.gmra.mxu0 %v319
      %v597 = vpop.f32.mrf.mxu0
      %v598 = vadd.f32 %v509, %v597
      %v599 = vpop.f32.mrf.mxu0
      %v600 = vadd.f32 %v511, %v599
      %601 = vmatmul.bf16.gmra.mxu0 %v321
      %v602 = vpop.f32.mrf.mxu0
      %v603 = vadd.f32 %v514, %v602
      %v604 = vpop.f32.mrf.mxu0
      %v605 = vadd.f32 %v516, %v604
      %606 = vmatmul.bf16.gmra.mxu0 %v323
      %v607 = vpop.f32.mrf.mxu0
      %v608 = vadd.f32 %v519, %v607
      %v609 = vpop.f32.mrf.mxu0
      %v610 = vadd.f32 %v521, %v609
      %611 = vmatmul.bf16.gmra.mxu0 %v325
      %v612 = vpop.f32.mrf.mxu0
      %v613 = vadd.f32 %v524, %v612
      %v614 = vpop.f32.mrf.mxu0
      %v615 = vadd.f32 %v526, %v614
      %616 = vmatmul.bf16.gmra.mxu0 %v327
      %v617 = vpop.f32.mrf.mxu0
      %v618 = vadd.f32 %v529, %v617
      %v619 = vpop.f32.mrf.mxu0
      %v620 = vadd.f32 %v531, %v619
      %621 = vmatmul.bf16.gmra.mxu0 %v329
      %v622 = vpop.f32.mrf.mxu0
      %v623 = vadd.f32 %v534, %v622
      %v624 = vpop.f32.mrf.mxu0
      %v625 = vadd.f32 %v536, %v624
      %626 = vmatmul.bf16.gmra.mxu0 %v331
      %v627 = vpop.f32.mrf.mxu0
      %v628 = vadd.f32 %v539, %v627
      %v629 = vpop.f32.mrf.mxu0
      %v630 = vadd.f32 %v541, %v629
      %631 = vmatmul.bf16.gmra.mxu0 %v333
      %v632 = vpop.f32.mrf.mxu0
      %v633 = vadd.f32 %v544, %v632
      %v634 = vpop.f32.mrf.mxu0
      %v635 = vadd.f32 %v546, %v634
      %636 = vmatmul.bf16.gmra.mxu0 %v335
      %v637 = vpop.f32.mrf.mxu0
      %v638 = vadd.f32 %v549, %v637
      %v639 = vpop.f32.mrf.mxu0
      %v640 = vadd.f32 %v551, %v639
      %641 = vdwg.mxu0
      %v642 = vadd.f32 %v563, %v565
      %v643 = vadd.f32 %v642, %v568
      %v644 = vadd.f32 %v643, %v570
      %v645 = vadd.f32 %v644, %v573
      %v646 = vadd.f32 %v645, %v575
      %v647 = vadd.f32 %v646, %v578
      %v648 = vadd.f32 %v647, %v580
      %v649 = vadd.f32 %v648, %v583
      %v650 = vadd.f32 %v649, %v585
      %v651 = vadd.f32 %v650, %v588
      %v652 = vadd.f32 %v651, %v590
      %v653 = vadd.f32 %v652, %v593
      %v654 = vadd.f32 %v653, %v595
      %v655 = vadd.f32 %v654, %v598
      %v656 = vadd.f32 %v655, %v600
      %v657 = vadd.f32 %v656, %v603
      %v658 = vadd.f32 %v657, %v605
      %v659 = vadd.f32 %v658, %v608
      %v660 = vadd.f32 %v659, %v610
      %v661 = vadd.f32 %v660, %v613
      %v662 = vadd.f32 %v661, %v615
      %v663 = vadd.f32 %v662, %v618
      %v664 = vadd.f32 %v663, %v620
      %v665 = vadd.f32 %v664, %v623
      %v666 = vadd.f32 %v665, %v625
      %v667 = vadd.f32 %v666, %v628
      %v668 = vadd.f32 %v667, %v630
      %v669 = vadd.f32 %v668, %v633
      %v670 = vadd.f32 %v669, %v635
      %v671 = vadd.f32 %v670, %v638
      %v672 = vadd.f32 %v671, %v640
      %v673 = vrot.slane %v672, 4
      %v674 = vadd.f32 %v672, %v673
      %v675 = vrot.slane %v674, 2
      %v676 = vadd.f32 %v674, %v675
      %v677 = vrot.slane %v676, 1
      %v678 = vadd.f32 %v676, %v677
      %v679 = vmul.f32 %v678, 0.00390625
      %v680 = vsub.f32 %v563, %v679
      %v681 = vsub.f32 %v565, %v679
      %v682 = vsub.f32 %v568, %v679
      %v683 = vsub.f32 %v570, %v679
      %v684 = vsub.f32 %v573, %v679
      %v685 = vsub.f32 %v575, %v679
      %v686 = vsub.f32 %v578, %v679
      %v687 = vsub.f32 %v580, %v679
      %v688 = vsub.f32 %v583, %v679
      %v689 = vsub.f32 %v585, %v679
      %v690 = vsub.f32 %v588, %v679
      %v691 = vsub.f32 %v590, %v679
      %v692 = vsub.f32 %v593, %v679
      %v693 = vsub.f32 %v595, %v679
      %v694 = vsub.f32 %v598, %v679
      %v695 = vsub.f32 %v600, %v679
      %v696 = vsub.f32 %v603, %v679
      %v697 = vsub.f32 %v605, %v679
      %v698 = vsub.f32 %v608, %v679
      %v699 = vsub.f32 %v610, %v679
      %v700 = vsub.f32 %v613, %v679
      %v701 = vsub.f32 %v615, %v679
      %v702 = vsub.f32 %v618, %v679
      %v703 = vsub.f32 %v620, %v679
      %v704 = vsub.f32 %v623, %v679
      %v705 = vsub.f32 %v625, %v679
      %v706 = vsub.f32 %v628, %v679
      %v707 = vsub.f32 %v630, %v679
      %v708 = vsub.f32 %v633, %v679
      %v709 = vsub.f32 %v635, %v679
      %v710 = vsub.f32 %v638, %v679
      %v711 = vsub.f32 %v640, %v679
      %v712 = vmul.f32 %v680, %v680
      %v713 = vmul.f32 %v681, %v681
      %v714 = vmul.f32 %v682, %v682
      %v715 = vmul.f32 %v683, %v683
      %v716 = vmul.f32 %v684, %v684
      %v717 = vmul.f32 %v685, %v685
      %v718 = vmul.f32 %v686, %v686
      %v719 = vmul.f32 %v687, %v687
      %v720 = vmul.f32 %v688, %v688
      %v721 = vmul.f32 %v689, %v689
      %v722 = vmul.f32 %v690, %v690
      %v723 = vmul.f32 %v691, %v691
      %v724 = vmul.f32 %v692, %v692
      %v725 = vmul.f32 %v693, %v693
      %v726 = vmul.f32 %v694, %v694
      %v727 = vmul.f32 %v695, %v695
      %v728 = vmul.f32 %v696, %v696
      %v729 = vmul.f32 %v697, %v697
      %v730 = vmul.f32 %v698, %v698
      %v731 = vmul.f32 %v699, %v699
      %v732 = vmul.f32 %v700, %v700
      %v733 = vmul.f32 %v701, %v701
      %v734 = vmul.f32 %v702, %v702
      %v735 = vmul.f32 %v703, %v703
      %v736 = vmul.f32 %v704, %v704
      %v737 = vmul.f32 %v705, %v705
      %v738 = vmul.f32 %v706, %v706
      %v739 = vmul.f32 %v707, %v707
      %v740 = vmul.f32 %v708, %v708
      %v741 = vmul.f32 %v709, %v709
      %v742 = vmul.f32 %v710, %v710
      %v743 = vmul.f32 %v711, %v711
      %v744 = vadd.f32 %v712, %v713
      %v745 = vadd.f32 %v744, %v714
      %v746 = vadd.f32 %v745, %v715
      %v747 = vadd.f32 %v746, %v716
      %v748 = vadd.f32 %v747, %v717
      %v749 = vadd.f32 %v748, %v718
      %v750 = vadd.f32 %v749, %v719
      %v751 = vadd.f32 %v750, %v720
      %v752 = vadd.f32 %v751, %v721
      %v753 = vadd.f32 %v752, %v722
      %v754 = vadd.f32 %v753, %v723
      %v755 = vadd.f32 %v754, %v724
      %v756 = vadd.f32 %v755, %v725
      %v757 = vadd.f32 %v756, %v726
      %v758 = vadd.f32 %v757, %v727
      %v759 = vadd.f32 %v758, %v728
      %v760 = vadd.f32 %v759, %v729
      %v761 = vadd.f32 %v760, %v730
      %v762 = vadd.f32 %v761, %v731
      %v763 = vadd.f32 %v762, %v732
      %v764 = vadd.f32 %v763, %v733
      %v765 = vadd.f32 %v764, %v734
      %v766 = vadd.f32 %v765, %v735
      %v767 = vadd.f32 %v766, %v736
      %v768 = vadd.f32 %v767, %v737
      %v769 = vadd.f32 %v768, %v738
      %v770 = vadd.f32 %v769, %v739
      %v771 = vadd.f32 %v770, %v740
      %v772 = vadd.f32 %v771, %v741
      %v773 = vadd.f32 %v772, %v742
      %v774 = vadd.f32 %v773, %v743
      %v775 = vrot.slane %v774, 4
      %v776 = vadd.f32 %v774, %v775
      %v777 = vrot.slane %v776, 2
      %v778 = vadd.f32 %v776, %v777
      %v779 = vrot.slane %v778, 1
      %v780 = vadd.f32 %v778, %v779
      %v781 = vmul.f32 %v780, 0.00390625
      %v782 = vadd.f32 %v781, 1e-05
      %v783 = vrsqrt.pop %v782
      %v784 = vmul.f32 %v783, %v782
      %v785 = vmul.f32 %v784, %v783
      %v786 = vmul.f32 0.5, %v785
      %v787 = vsub.f32 1.5, %v786
      %v788 = vmul.f32 %v783, %v787
      %vm789 = vweird.f32 %v782
      %vm790 = vweird.f32 %v783
      %vm791 = vmor %vm789, %vm790
      %v792 = vsel %vm791, %v783, %v788
      %v793 = vmul.f32 %v680, %v792
      %v794 = vmul.f32 %v681, %v792
      %v795 = vmul.f32 %v682, %v792
      %v796 = vmul.f32 %v683, %v792
      %v797 = vmul.f32 %v684, %v792
      %v798 = vmul.f32 %v685, %v792
      %v799 = vmul.f32 %v686, %v792
      %v800 = vmul.f32 %v687, %v792
      %v801 = vmul.f32 %v688, %v792
      %v802 = vmul.f32 %v689, %v792
      %v803 = vmul.f32 %v690, %v792
      %v804 = vmul.f32 %v691, %v792
      %v805 = vmul.f32 %v692, %v792
      %v806 = vmul.f32 %v693, %v792
      %v807 = vmul.f32 %v694, %v792
      %v808 = vmul.f32 %v695, %v792
      %v809 = vmul.f32 %v696, %v792
      %v810 = vmul.f32 %v697, %v792
      %v811 = vmul.f32 %v698, %v792
      %v812 = vmul.f32 %v699, %v792
      %v813 = vmul.f32 %v700, %v792
      %v814 = vmul.f32 %v701, %v792
      %v815 = vmul.f32 %v702, %v792
      %v816 = vmul.f32 %v703, %v792
      %v817 = vmul.f32 %v704, %v792
      %v818 = vmul.f32 %v705, %v792
      %v819 = vmul.f32 %v706, %v792
      %v820 = vmul.f32 %v707, %v792
      %v821 = vmul.f32 %v708, %v792
      %v822 = vmul.f32 %v709, %v792
      %v823 = vmul.f32 %v710, %v792
      %v824 = vmul.f32 %v711, %v792
      %v825 = vmax.f32 %v793, 0.0
      %v826 = vmax.f32 %v794, 0.0
      %v827 = vmax.f32 %v795, 0.0
      %v828 = vmax.f32 %v796, 0.0
      %v829 = vmax.f32 %v797, 0.0
      %v830 = vmax.f32 %v798, 0.0
      %v831 = vmax.f32 %v799, 0.0
      %v832 = vmax.f32 %v800, 0.0
      %v833 = vmax.f32 %v801, 0.0
      %v834 = vmax.f32 %v802, 0.0
      %v835 = vmax.f32 %v803, 0.0
      %v836 = vmax.f32 %v804, 0.0
      %v837 = vmax.f32 %v805, 0.0
      %v838 = vmax.f32 %v806, 0.0
      %v839 = vmax.f32 %v807, 0.0
      %v840 = vmax.f32 %v808, 0.0
      %v841 = vmax.f32 %v809, 0.0
      %v842 = vmax.f32 %v810, 0.0
      %v843 = vmax.f32 %v811, 0.0
      %v844 = vmax.f32 %v812, 0.0
      %v845 = vmax.f32 %v813, 0.0
      %v846 = vmax.f32 %v814, 0.0
      %v847 = vmax.f32 %v815, 0.0
      %v848 = vmax.f32 %v816, 0.0
      %v849 = vmax.f32 %v817, 0.0
      %v850 = vmax.f32 %v818, 0.0
      %v851 = vmax.f32 %v819, 0.0
      %v852 = vmax.f32 %v820, 0.0
      %v853 = vmax.f32 %v821, 0.0
      %v854 = vmax.f32 %v822, 0.0
      %v855 = vmax.f32 %v823, 0.0
      %v856 = vmax.f32 %v824, 0.0
      %v857 = vpack.c.bf16 %v825, %v825
      %v858 = vpack.c.bf16 %v826, %v826
      %v859 = vpack.c.bf16 %v827, %v827
      %v860 = vpack.c.bf16 %v828, %v828
      %v861 = vpack.c.bf16 %v829, %v829
      %v862 = vpack.c.bf16 %v830, %v830
      %v863 = vpack.c.bf16 %v831, %v831
      %v864 = vpack.c.bf16 %v832, %v832
      %v865 = vpack.c.bf16 %v833, %v833
      %v866 = vpack.c.bf16 %v834, %v834
      %v867 = vpack.c.bf16 %v835, %v835
      %v868 = vpack.c.bf16 %v836, %v836
      %v869 = vpack.c.bf16 %v837, %v837
      %v870 = vpack.c.bf16 %v838, %v838
      %v871 = vpack.c.bf16 %v839, %v839
      %v872 = vpack.c.bf16 %v840, %v840
      %v873 = vpack.c.bf16 %v841, %v841
      %v874 = vpack.c.bf16 %v842, %v842
      %v875 = vpack.c.bf16 %v843, %v843
      %v876 = vpack.c.bf16 %v844, %v844
      %v877 = vpack.c.bf16 %v845, %v845
      %v878 = vpack.c.bf16 %v846, %v846
      %v879 = vpack.c.bf16 %v847, %v847
      %v880 = vpack.c.bf16 %v848, %v848
      %v881 = vpack.c.bf16 %v849, %v849
      %v882 = vpack.c.bf16 %v850, %v850
      %v883 = vpack.c.bf16 %v851, %v851
      %v884 = vpack.c.bf16 %v852, %v852
      %v885 = vpack.c.bf16 %v853, %v853
      %v886 = vpack.c.bf16 %v854, %v854
      %v887 = vpack.c.bf16 %v855, %v855
      %v888 = vpack.c.bf16 %v856, %v856
      %889 = vst [vmem:[%s143] sm:$0xf] %v857
      %890 = vst [vmem:[%s143 + $0x4] sm:$0xf] %v858
      %891 = vst [vmem:[%s143 + $0x8] sm:$0xf] %v859
      %892 = vst [vmem:[%s143 + $0xc] sm:$0xf] %v860
      %893 = vst [vmem:[%s143 + $0x10] sm:$0xf] %v861
      %894 = vst [vmem:[%s143 + $0x14] sm:$0xf] %v862
      %895 = vst [vmem:[%s143 + $0x18] sm:$0xf] %v863
      %896 = vst [vmem:[%s143 + $0x1c] sm:$0xf] %v864
      %897 = vst [vmem:[%s143 + $0x20] sm:$0xf] %v865
      %898 = vst [vmem:[%s143 + $0x24] sm:$0xf] %v866
      %899 = vst [vmem:[%s143 + $0x28] sm:$0xf] %v867
      %900 = vst [vmem:[%s143 + $0x2c] sm:$0xf] %v868
      %901 = vst [vmem:[%s143 + $0x30] sm:$0xf] %v869
      %902 = vst [vmem:[%s143 + $0x34] sm:$0xf] %v870
      %903 = vst [vmem:[%s143 + $0x38] sm:$0xf] %v871
      %904 = vst [vmem:[%s143 + $0x3c] sm:$0xf] %v872
      %905 = vst [vmem:[%s143 + $0x40] sm:$0xf] %v873
      %906 = vst [vmem:[%s143 + $0x44] sm:$0xf] %v874
      %907 = vst [vmem:[%s143 + $0x48] sm:$0xf] %v875
      %908 = vst [vmem:[%s143 + $0x4c] sm:$0xf] %v876
      %909 = vst [vmem:[%s143 + $0x50] sm:$0xf] %v877
      %910 = vst [vmem:[%s143 + $0x54] sm:$0xf] %v878
      %911 = vst [vmem:[%s143 + $0x58] sm:$0xf] %v879
      %912 = vst [vmem:[%s143 + $0x5c] sm:$0xf] %v880
      %913 = vst [vmem:[%s143 + $0x60] sm:$0xf] %v881
      %914 = vst [vmem:[%s143 + $0x64] sm:$0xf] %v882
      %915 = vst [vmem:[%s143 + $0x68] sm:$0xf] %v883
      %916 = vst [vmem:[%s143 + $0x6c] sm:$0xf] %v884
      %917 = vst [vmem:[%s143 + $0x70] sm:$0xf] %v885
      %918 = vst [vmem:[%s143 + $0x74] sm:$0xf] %v886
      %919 = vst [vmem:[%s143 + $0x78] sm:$0xf] %v887
      %920 = vst [vmem:[%s143 + $0x7c] sm:$0xf] %v888
      %p921 = scmp.lt.s32.totalorder %s13, 1
      %s922 = scalar_select %p921, %s13, 1
      %s923 = smul.addr %s922, 32
      %s924 = smul.addr %s923, 4
      %s925 = scalar_lea.vmem %s2, %s924
      // Predicated region
      $region29: #{generator_forward.10} parent=27 // pred_check
        %p926 = pneg %p78
      $region30: #{generator_forward.10} parent=27 // pred_check_branch
        %928 = sbr.rel (%p926) target = $region32
      $region31: #{generator_forward.10} parent=27 // pred_region
        _
      $region32: #{generator_forward.10} parent=27 // pred_fallthru
        _
    $region28: #{generator_forward.10} parent=5 // pred_fallthru
      _
    %p929 = scmp.le.s32.totalorder 2, %s8
    // Predicated region
    $region33: #{generator_forward.10} parent=5 // pred_check
      %p930 = pneg %p929
    $region34: #{generator_forward.10} parent=5 // pred_check_branch
      %932 = sbr.rel (%p930) target = $region36
    $region35: #{generator_forward.10} parent=5 // pred_region
      %s933 = ssub.s32 %s8, 2
      // Predicated region
      $region37: #{generator_forward.10} parent=35 // pred_check
        %p934 = pneg %p84
      $region38: #{generator_forward.10} parent=35 // pred_check_branch
        %936 = sbr.rel (%p934) target = $region40
      $region39: #{generator_forward.10} parent=35 // pred_region
        %p937 = scmp.lt.s32.totalorder %s14, 1
        %s938 = scalar_select %p937, %s14, 1
        %s939 = smul.addr %s938, 32
        %s940 = smul.addr %s939, 4
        %s941 = scalar_lea.vmem %s2, %s940
      $region40: #{generator_forward.10} parent=35 // pred_fallthru
        _
    $region36: #{generator_forward.10} parent=5 // pred_fallthru
      _
  $region6: #{generator_forward.10} parent=0 // loop_footer
    %s12 = sadd.s32 1, %s8
  $region7: #{generator_forward.10} parent=0 // loop_footer_branch
    %7 = sbr.rel target = $region3
  $region8: #{generator_forward.10} parent=0 // loop_exit
    _

// kernel: generator_forward.11
$region0: #{generator_forward.11}
  #allocation0 [shape = 'u32[]', space=smem, size = 0x4, offset = 0x4, fixed_abs, tag = 'smem constant byte address 0x4 - core index']
  #allocation1 [shape = 'u32[72,128]{1,0:T(1,128)}', space=vmem, size = 0x9000, scoped, tag = 'internal scratch']
  %s0 = inlined_call_operand.vmem [shape: bf16[2,64,128], index: 0, kind: input, shape index: {}]
  %s1 = inlined_call_operand.vmem [shape: bf16[128,128], index: 1, kind: input, shape index: {}]
  %s2 = inlined_call_operand.vmem [shape: bf16[2,64,128], index: 2, kind: output, shape index: {}]
  %s3 = sld [smem:[#allocation0]]
  $region41: #{generator_forward.11} parent=0
    _
  %s5 = ssub.s32 1, %s3
  %s6 = scalar_select 0, %s5, %s3
  loop: start=0, step=1, limit=4
  $region2: #{generator_forward.11} parent=0 // loop_pre_header
    _
  $region3: #{generator_forward.11} parent=0 // loop_header
    %s8 = sphi 0, %s12
    %p9 = scmp.ge.s32.totalorder %s8, 4
    %s18 = sphi 0, %s20
    %s21 = sphi 0, %s18
    %s22 = sphi 0, %s21
    %s38 = sphi 0, %s22
    %s42 = sphi 0, %s42
    %s44 = sphi 0, %s42
    %s45 = sphi 0, %s44
    %s59 = sphi 0, %s45
    %s65 = sphi 0, %s67
    %s68 = sphi 0, %s65
    %s69 = sphi 0, %s68
    %s85 = sphi 0, %s69
  $region4: #{generator_forward.11} parent=0 // loop_header_branch
    %11 = sbr.rel (%p9) target = $region8
  $region5: #{generator_forward.11} parent=0 // loop_body
    %s13 = ssub.s32 %s8, 1
    %s14 = ssub.s32 %s8, 2
    %s15 = sadd.s32 %s8, 1
    %s16 = ssub.s32 %s8, %s15
    %p17 = scmp.eq.s32.totalorder %s16, 0
    %s19 = sadd.s32 %s18, 1
    %s20 = scalar_select %p17, %s18, %s19
    %p23 = pneg %p17
    %p24 = scmp.eq.s32.totalorder %s8, 1
    %p25 = por %p23, %p24
    %p26 = scmp.ne.s32.totalorder %s18, %s21
    %p27 = scmp.eq.s32.totalorder %s8, 0
    %p28 = por %p26, %p27
    %p29 = scmp.ne.s32.totalorder %s18, %s21
    %p30 = scmp.eq.s32.totalorder %s13, 1
    %p31 = por %p29, %p30
    %p32 = scmp.ne.s32.totalorder %s21, %s22
    %p33 = scmp.eq.s32.totalorder %s13, 0
    %p34 = por %p32, %p33
    %p35 = scmp.ne.s32.totalorder %s21, %s22
    %p36 = scmp.eq.s32.totalorder %s14, 1
    %p37 = por %p35, %p36
    %p39 = scmp.ne.s32.totalorder %s22, %s38
    %p40 = scmp.eq.s32.totalorder %s14, 0
    %p41 = por %p39, %p40
    %s43 = sadd.s32 %s42, 1
    %p46 = scmp.eq.s32.totalorder %s8, 1
    %p47 = scmp.ne.s32.totalorder %s42, %s44
    %p48 = scmp.eq.s32.totalorder %s8, 0
    %p49 = por %p47, %p48
    %p50 = scmp.ne.s32.totalorder %s42, %s44
    %p51 = scmp.eq.s32.totalorder %s13, 1
    %p52 = por %p50, %p51
    %p53 = scmp.ne.s32.totalorder %s44, %s45
    %p54 = scmp.eq.s32.totalorder %s13, 0
    %p55 = por %p53, %p54
    %p56 = scmp.ne.s32.totalorder %s44, %s45
    %p57 = scmp.eq.s32.totalorder %s14, 1
    %p58 = por %p56, %p57
    %p60 = scmp.ne.s32.totalorder %s45, %s59
    %p61 = scmp.eq.s32.totalorder %s14, 0
    %p62 = por %p60, %p61
    %s63 = ssub.s32 %s8, %s15
    %p64 = scmp.eq.s32.totalorder %s63, 0
    %s66 = sadd.s32 %s65, 1
    %s67 = scalar_select %p64, %s65, %s66
    %p70 = pneg %p64
    %p71 = scmp.eq.s32.totalorder %s8, 1
    %p72 = por %p70, %p71
    %p73 = scmp.ne.s32.totalorder %s65, %s68
    %p74 = scmp.eq.s32.totalorder %s8, 0
    %p75 = por %p73, %p74
    %p76 = scmp.ne.s32.totalorder %s65, %s68
    %p77 = scmp.eq.s32.totalorder %s13, 1
    %p78 = por %p76, %p77
    %p79 = scmp.ne.s32.totalorder %s68, %s69
    %p80 = scmp.eq.s32.totalorder %s13, 0
    %p81 = por %p79, %p80
    %p82 = scmp.ne.s32.totalorder %s68, %s69
    %p83 = scmp.eq.s32.totalorder %s14, 1
    %p84 = por %p82, %p83
    %p86 = scmp.ne.s32.totalorder %s69, %s85
    %p87 = scmp.eq.s32.totalorder %s14, 0
    %p88 = por %p86, %p87
    %p89 = scmp.le.s32.totalorder 1, %s8
    %p90 = scmp.lt.s32.totalorder %s8, 3
    %p91 = pnand %p89, %p90
    %p92 = pneg %p91
    // Predicated region
    $region9: #{generator_forward.11} parent=5 // pred_check
      _
    $region10: #{generator_forward.11} parent=5 // pred_check_branch
      %94 = sbr.rel (%p91) target = $region12
    $region11: #{generator_forward.11} parent=5 // pred_region
      %s95 = ssub.s32 %s8, 1
      // Predicated region
      $region13: #{generator_forward.11} parent=11 // pred_check
        %p96 = pneg %p55
      $region14: #{generator_forward.11} parent=11 // pred_check_branch
        %98 = sbr.rel (%p96) target = $region16
      $region15: #{generator_forward.11} parent=11 // pred_region
        _
      $region16: #{generator_forward.11} parent=11 // pred_fallthru
        _
    $region12: #{generator_forward.11} parent=5 // pred_fallthru
      _
    %p99 = scmp.lt.s32.totalorder %s8, 2
    // Predicated region
    $region17: #{generator_forward.11} parent=5 // pred_check
      %p100 = pneg %p99
    $region18: #{generator_forward.11} parent=5 // pred_check_branch
      %102 = sbr.rel (%p100) target = $region20
    $region19: #{generator_forward.11} parent=5 // pred_region
      // Predicated region
      $region21: #{generator_forward.11} parent=19 // pred_check
        %p103 = pneg %p28
      $region22: #{generator_forward.11} parent=19 // pred_check_branch
        %105 = sbr.rel (%p103) target = $region24
      $region23: #{generator_forward.11} parent=19 // pred_region
        %p106 = scmp.lt.s32.totalorder %s8, 1
        %s107 = scalar_select %p106, %s8, 1
        %s108 = smul.addr %s107, 8
        %s109 = smul.addr %s108, 4
        %s110 = scalar_lea.vmem %s0, %s109
      $region24: #{generator_forward.11} parent=19 // pred_fallthru
        _
    $region20: #{generator_forward.11} parent=5 // pred_fallthru
      _
    %p111 = scmp.le.s32.totalorder 1, %s8
    %p112 = scmp.lt.s32.totalorder %s8, 3
    %p113 = pnand %p111, %p112
    %p114 = pneg %p113
    // Predicated region
    $region25: #{generator_forward.11} parent=5 // pred_check
      _
    $region26: #{generator_forward.11} parent=5 // pred_check_branch
      %116 = sbr.rel (%p113) target = $region28
    $region27: #{generator_forward.11} parent=5 // pred_region
      %s117 = ssub.s32 %s8, 1
      %p118 = scmp.lt.s32.totalorder %s13, 1
      %s119 = scalar_select %p118, %s13, 1
      %s120 = smul.addr %s119, 8
      %s121 = smul.addr %s120, 4
      %s122 = scalar_lea.vmem %s0, %s121
      %p123 = pneg %p34
      %p124 = pneg %p31
      %p125 = pneg %p55
      %p126 = pneg %p52
      %p127 = pneg %p81
      %p128 = pneg %p78
      %p129 = scmp.lt.s32.totalorder %s13, 1
      %s130 = scalar_select %p129, %s13, 1
      %s131 = smul.addr %s130, 8
      %s132 = smul.addr %s131, 4
      %s133 = scalar_lea.vmem %s2, %s132
      %p134 = scmp.lt.s32.totalorder %s13, 1
      %s135 = scalar_select %p134, %s13, 1
      %s136 = smul.addr %s135, 8
      %s137 = smul.addr %s136, 4
      %s138 = scalar_lea.vmem %s0, %s137
      %p139 = scmp.lt.s32.totalorder %s13, 1
      %s140 = scalar_select %p139, %s13, 1
      %s141 = smul.addr %s140, 8
      %s142 = smul.addr %s141, 4
      %s143 = scalar_lea.vmem %s2, %s142
      %v144 = vld [vmem:[%s138] sm:$0xf]
      %v145 = vld [vmem:[%s138 + $0x4] sm:$0xf]
      %v146 = vld [vmem:[%s138 + $0x8] sm:$0xf]
      %v147 = vld [vmem:[%s138 + $0xc] sm:$0xf]
      %v148 = vld [vmem:[%s138 + $0x10] sm:$0xf]
      %v149 = vld [vmem:[%s138 + $0x14] sm:$0xf]
      %v150 = vld [vmem:[%s138 + $0x18] sm:$0xf]
      %v151 = vld [vmem:[%s138 + $0x1c] sm:$0xf]
      %v152 = vld [vmem:[%s1] sm:$0xf]
      %v153 = vld [vmem:[%s1 + $0x4] sm:$0xf]
      %v154 = vld [vmem:[%s1 + $0x8] sm:$0xf]
      %v155 = vld [vmem:[%s1 + $0xc] sm:$0xf]
      %v156 = vld [vmem:[%s1 + $0x10] sm:$0xf]
      %v157 = vld [vmem:[%s1 + $0x14] sm:$0xf]
      %v158 = vld [vmem:[%s1 + $0x18] sm:$0xf]
      %v159 = vld [vmem:[%s1 + $0x1c] sm:$0xf]
      %v160 = vld [vmem:[%s1 + $0x20] sm:$0xf]
      %v161 = vld [vmem:[%s1 + $0x24] sm:$0xf]
      %v162 = vld [vmem:[%s1 + $0x28] sm:$0xf]
      %v163 = vld [vmem:[%s1 + $0x2c] sm:$0xf]
      %v164 = vld [vmem:[%s1 + $0x30] sm:$0xf]
      %v165 = vld [vmem:[%s1 + $0x34] sm:$0xf]
      %v166 = vld [vmem:[%s1 + $0x38] sm:$0xf]
      %v167 = vld [vmem:[%s1 + $0x3c] sm:$0xf]
      %v176 = vunpack.c.l.b16 %v144
      %v177 = vunpack.c.l.b16 %v145
      %v178 = vunpack.c.l.b16 %v146
      %v179 = vunpack.c.l.b16 %v147
      %v180 = vunpack.c.l.b16 %v148
      %v181 = vunpack.c.l.b16 %v149
      %v182 = vunpack.c.l.b16 %v150
      %v183 = vunpack.c.l.b16 %v151
      %v184 = vpack.c.b16 %v177, %v176
      %v185 = vpack.c.b16 %v179, %v178
      %v186 = vpack.c.b16 %v181, %v180
      %v187 = vpack.c.b16 %v183, %v182
      %v208 = vunpack.c.l.b16 %v152
      %v209 = vunpack.c.l.b16 %v153
      %v210 = vunpack.c.l.b16 %v154
      %v211 = vunpack.c.l.b16 %v155
      %v212 = vunpack.c.l.b16 %v156
      %v213 = vunpack.c.l.b16 %v157
      %v214 = vunpack.c.l.b16 %v158
      %v215 = vunpack.c.l.b16 %v159
      %v216 = vunpack.c.l.b16 %v160
      %v217 = vunpack.c.l.b16 %v161
      %v218 = vunpack.c.l.b16 %v162
      %v219 = vunpack.c.l.b16 %v163
      %v220 = vunpack.c.l.b16 %v164
      %v221 = vunpack.c.l.b16 %v165
      %v222 = vunpack.c.l.b16 %v166
      %v223 = vunpack.c.l.b16 %v167
      %v224 = vpack.c.b16 %v209, %v208
      %v225 = vpack.c.b16 %v211, %v210
      %v226 = vpack.c.b16 %v213, %v212
      %v227 = vpack.c.b16 %v215, %v214
      %v228 = vpack.c.b16 %v217, %v216
      %v229 = vpack.c.b16 %v219, %v218
      %v230 = vpack.c.b16 %v221, %v220
      %v231 = vpack.c.b16 %v223, %v222
      %240 = vmatpush.bf16.msra.mxu0 %v231
      %241 = vmatpush.bf16.msra.mxu0 %v230
      %242 = vmatpush.bf16.msra.mxu0 %v229
      %243 = vmatpush.bf16.msra.mxu0 %v228
      %244 = vmatpush.bf16.msra.mxu0 %v227
      %245 = vmatpush.bf16.msra.mxu0 %v226
      %246 = vmatpush.bf16.msra.mxu0 %v225
      %247 = vmatpush.bf16.msra.mxu0 %v224
      %248 = vmatmul.bf16.gmra.mxu0 %v184
      %v249 = vpop.f32.mrf.mxu0
      %v250 = vadd.f32 0.0, %v249
      %v251 = vpop.f32.mrf.mxu0
      %v252 = vadd.f32 0.0, %v251
      %253 = vmatmul.bf16.gmra.mxu0 %v185
      %v254 = vpop.f32.mrf.mxu0
      %v255 = vadd.f32 0.0, %v254
      %v256 = vpop.f32.mrf.mxu0
      %v257 = vadd.f32 0.0, %v256
      %258 = vmatmul.bf16.gmra.mxu0 %v186
      %v259 = vpop.f32.mrf.mxu0
      %v260 = vadd.f32 0.0, %v259
      %v261 = vpop.f32.mrf.mxu0
      %v262 = vadd.f32 0.0, %v261
      %263 = vmatmul.bf16.gmra.mxu0 %v187
      %v264 = vpop.f32.mrf.mxu0
      %v265 = vadd.f32 0.0, %v264
      %v266 = vpop.f32.mrf.mxu0
      %v267 = vadd.f32 0.0, %v266
      %268 = vdwg.mxu0
      %v269 = vadd.f32 %v250, %v252
      %v270 = vadd.f32 %v269, %v255
      %v271 = vadd.f32 %v270, %v257
      %v272 = vadd.f32 %v271, %v260
      %v273 = vadd.f32 %v272, %v262
      %v274 = vadd.f32 %v273, %v265
      %v275 = vadd.f32 %v274, %v267
      %v276 = vrot.slane %v275, 4
      %v277 = vadd.f32 %v275, %v276
      %v278 = vrot.slane %v277, 2
      %v279 = vadd.f32 %v277, %v278
      %v280 = vrot.slane %v279, 1
      %v281 = vadd.f32 %v279, %v280
      %v282 = vmul.f32 %v281, 0.015625
      %v283 = vsub.f32 %v250, %v282
      %v284 = vsub.f32 %v252, %v282
      %v285 = vsub.f32 %v255, %v282
      %v286 = vsub.f32 %v257, %v282
      %v287 = vsub.f32 %v260, %v282
      %v288 = vsub.f32 %v262, %v282
      %v289 = vsub.f32 %v265, %v282
      %v290 = vsub.f32 %v267, %v282
      %v291 = vmul.f32 %v283, %v283
      %v292 = vmul.f32 %v284, %v284
      %v293 = vmul.f32 %v285, %v285
      %v294 = vmul.f32 %v286, %v286
      %v295 = vmul.f32 %v287, %v287
      %v296 = vmul.f32 %v288, %v288
      %v297 = vmul.f32 %v289, %v289
      %v298 = vmul.f32 %v290, %v290
      %v299 = vadd.f32 %v291, %v292
      %v300 = vadd.f32 %v299, %v293
      %v301 = vadd.f32 %v300, %v294
      %v302 = vadd.f32 %v301, %v295
      %v303 = vadd.f32 %v302, %v296
      %v304 = vadd.f32 %v303, %v297
      %v305 = vadd.f32 %v304, %v298
      %v306 = vrot.slane %v305, 4
      %v307 = vadd.f32 %v305, %v306
      %v308 = vrot.slane %v307, 2
      %v309 = vadd.f32 %v307, %v308
      %v310 = vrot.slane %v309, 1
      %v311 = vadd.f32 %v309, %v310
      %v312 = vmul.f32 %v311, 0.015625
      %v313 = vadd.f32 %v312, 1e-05
      %v314 = vrsqrt.pop %v313
      %v315 = vmul.f32 %v314, %v313
      %v316 = vmul.f32 %v315, %v314
      %v317 = vmul.f32 0.5, %v316
      %v318 = vsub.f32 1.5, %v317
      %v319 = vmul.f32 %v314, %v318
      %vm320 = vweird.f32 %v313
      %vm321 = vweird.f32 %v314
      %vm322 = vmor %vm320, %vm321
      %v323 = vsel %vm322, %v314, %v319
      %v324 = vmul.f32 %v283, %v323
      %v325 = vmul.f32 %v284, %v323
      %v326 = vmul.f32 %v285, %v323
      %v327 = vmul.f32 %v286, %v323
      %v328 = vmul.f32 %v287, %v323
      %v329 = vmul.f32 %v288, %v323
      %v330 = vmul.f32 %v289, %v323
      %v331 = vmul.f32 %v290, %v323
      %v332 = vmax.f32 %v324, 0.0
      %v333 = vmax.f32 %v325, 0.0
      %v334 = vmax.f32 %v326, 0.0
      %v335 = vmax.f32 %v327, 0.0
      %v336 = vmax.f32 %v328, 0.0
      %v337 = vmax.f32 %v329, 0.0
      %v338 = vmax.f32 %v330, 0.0
      %v339 = vmax.f32 %v331, 0.0
      %v340 = vpack.c.bf16 %v332, %v332
      %v341 = vpack.c.bf16 %v333, %v333
      %v342 = vpack.c.bf16 %v334, %v334
      %v343 = vpack.c.bf16 %v335, %v335
      %v344 = vpack.c.bf16 %v336, %v336
      %v345 = vpack.c.bf16 %v337, %v337
      %v346 = vpack.c.bf16 %v338, %v338
      %v347 = vpack.c.bf16 %v339, %v339
      %348 = vst [vmem:[%s143] sm:$0xf] %v340
      %349 = vst [vmem:[%s143 + $0x4] sm:$0xf] %v341
      %350 = vst [vmem:[%s143 + $0x8] sm:$0xf] %v342
      %351 = vst [vmem:[%s143 + $0xc] sm:$0xf] %v343
      %352 = vst [vmem:[%s143 + $0x10] sm:$0xf] %v344
      %353 = vst [vmem:[%s143 + $0x14] sm:$0xf] %v345
      %354 = vst [vmem:[%s143 + $0x18] sm:$0xf] %v346
      %355 = vst [vmem:[%s143 + $0x1c] sm:$0xf] %v347
      %p356 = scmp.lt.s32.totalorder %s13, 1
      %s357 = scalar_select %p356, %s13, 1
      %s358 = smul.addr %s357, 8
      %s359 = smul.addr %s358, 4
      %s360 = scalar_lea.vmem %s2, %s359
      // Predicated region
      $region29: #{generator_forward.11} parent=27 // pred_check
        %p361 = pneg %p78
      $region30: #{generator_forward.11} parent=27 // pred_check_branch
        %363 = sbr.rel (%p361) target = $region32
      $region31: #{generator_forward.11} parent=27 // pred_region
        _
      $region32: #{generator_forward.11} parent=27 // pred_fallthru
        _
    $region28: #{generator_forward.11} parent=5 // pred_fallthru
      _
    %p364 = scmp.le.s32.totalorder 2, %s8
    // Predicated region
    $region33: #{generator_forward.11} parent=5 // pred_check
      %p365 = pneg %p364
    $region34: #{generator_forward.11} parent=5 // pred_check_branch
      %367 = sbr.rel (%p365) target = $region36
    $region35: #{generator_forward.11} parent=5 // pred_region
      %s368 = ssub.s32 %s8, 2
      // Predicated region
      $region37: #{generator_forward.11} parent=35 // pred_check
        %p369 = pneg %p84
      $region38: #{generator_forward.11} parent=35 // pred_check_branch
        %371 = sbr.rel (%p369) target = $region40
      $region39: #{generator_forward.11} parent=35 // pred_region
        %p372 = scmp.lt.s32.totalorder %s14, 1
        %s373 = scalar_select %p372, %s14, 1
        %s374 = smul.addr %s373, 8
        %s375 = smul.addr %s374, 4
        %s376 = scalar_lea.vmem %s2, %s375
      $region40: #{generator_forward.11} parent=35 // pred_fallthru
        _
    $region36: #{generator_forward.11} parent=5 // pred_fallthru
      _
  $region6: #{generator_forward.11} parent=0 // loop_footer
    %s12 = sadd.s32 1, %s8
  $region7: #{generator_forward.11} parent=0 // loop_footer_branch
    %7 = sbr.rel target = $region3
  $region8: #{generator_forward.11} parent=0 // loop_exit
    _

// kernel: generator_forward.12
$region0: #{generator_forward.12}
  #allocation0 [shape = 'u32[]', space=smem, size = 0x4, offset = 0x4, fixed_abs, tag = 'smem constant byte address 0x4 - core index']
  #allocation1 [shape = 'u32[72,128]{1,0:T(1,128)}', space=vmem, size = 0x9000, scoped, tag = 'internal scratch']
  %s0 = inlined_call_operand.vmem [shape: bf16[2,16,256], index: 0, kind: input, shape index: {}]
  %s1 = inlined_call_operand.vmem [shape: bf16[256,128], index: 1, kind: input, shape index: {}]
  %s2 = inlined_call_operand.vmem [shape: bf16[2,16,128], index: 2, kind: output, shape index: {}]
  %s3 = sld [smem:[#allocation0]]
  $region41: #{generator_forward.12} parent=0
    _
  %s5 = ssub.s32 1, %s3
  %s6 = scalar_select 0, %s5, %s3
  loop: start=0, step=1, limit=4
  $region2: #{generator_forward.12} parent=0 // loop_pre_header
    _
  $region3: #{generator_forward.12} parent=0 // loop_header
    %s8 = sphi 0, %s12
    %p9 = scmp.ge.s32.totalorder %s8, 4
    %s18 = sphi 0, %s20
    %s21 = sphi 0, %s18
    %s22 = sphi 0, %s21
    %s38 = sphi 0, %s22
    %s42 = sphi 0, %s42
    %s44 = sphi 0, %s42
    %s45 = sphi 0, %s44
    %s59 = sphi 0, %s45
    %s65 = sphi 0, %s67
    %s68 = sphi 0, %s65
    %s69 = sphi 0, %s68
    %s85 = sphi 0, %s69
  $region4: #{generator_forward.12} parent=0 // loop_header_branch
    %11 = sbr.rel (%p9) target = $region8
  $region5: #{generator_forward.12} parent=0 // loop_body
    %s13 = ssub.s32 %s8, 1
    %s14 = ssub.s32 %s8, 2
    %s15 = sadd.s32 %s8, 1
    %s16 = ssub.s32 %s8, %s15
    %p17 = scmp.eq.s32.totalorder %s16, 0
    %s19 = sadd.s32 %s18, 1
    %s20 = scalar_select %p17, %s18, %s19
    %p23 = pneg %p17
    %p24 = scmp.eq.s32.totalorder %s8, 1
    %p25 = por %p23, %p24
    %p26 = scmp.ne.s32.totalorder %s18, %s21
    %p27 = scmp.eq.s32.totalorder %s8, 0
    %p28 = por %p26, %p27
    %p29 = scmp.ne.s32.totalorder %s18, %s21
    %p30 = scmp.eq.s32.totalorder %s13, 1
    %p31 = por %p29, %p30
    %p32 = scmp.ne.s32.totalorder %s21, %s22
    %p33 = scmp.eq.s32.totalorder %s13, 0
    %p34 = por %p32, %p33
    %p35 = scmp.ne.s32.totalorder %s21, %s22
    %p36 = scmp.eq.s32.totalorder %s14, 1
    %p37 = por %p35, %p36
    %p39 = scmp.ne.s32.totalorder %s22, %s38
    %p40 = scmp.eq.s32.totalorder %s14, 0
    %p41 = por %p39, %p40
    %s43 = sadd.s32 %s42, 1
    %p46 = scmp.eq.s32.totalorder %s8, 1
    %p47 = scmp.ne.s32.totalorder %s42, %s44
    %p48 = scmp.eq.s32.totalorder %s8, 0
    %p49 = por %p47, %p48
    %p50 = scmp.ne.s32.totalorder %s42, %s44
    %p51 = scmp.eq.s32.totalorder %s13, 1
    %p52 = por %p50, %p51
    %p53 = scmp.ne.s32.totalorder %s44, %s45
    %p54 = scmp.eq.s32.totalorder %s13, 0
    %p55 = por %p53, %p54
    %p56 = scmp.ne.s32.totalorder %s44, %s45
    %p57 = scmp.eq.s32.totalorder %s14, 1
    %p58 = por %p56, %p57
    %p60 = scmp.ne.s32.totalorder %s45, %s59
    %p61 = scmp.eq.s32.totalorder %s14, 0
    %p62 = por %p60, %p61
    %s63 = ssub.s32 %s8, %s15
    %p64 = scmp.eq.s32.totalorder %s63, 0
    %s66 = sadd.s32 %s65, 1
    %s67 = scalar_select %p64, %s65, %s66
    %p70 = pneg %p64
    %p71 = scmp.eq.s32.totalorder %s8, 1
    %p72 = por %p70, %p71
    %p73 = scmp.ne.s32.totalorder %s65, %s68
    %p74 = scmp.eq.s32.totalorder %s8, 0
    %p75 = por %p73, %p74
    %p76 = scmp.ne.s32.totalorder %s65, %s68
    %p77 = scmp.eq.s32.totalorder %s13, 1
    %p78 = por %p76, %p77
    %p79 = scmp.ne.s32.totalorder %s68, %s69
    %p80 = scmp.eq.s32.totalorder %s13, 0
    %p81 = por %p79, %p80
    %p82 = scmp.ne.s32.totalorder %s68, %s69
    %p83 = scmp.eq.s32.totalorder %s14, 1
    %p84 = por %p82, %p83
    %p86 = scmp.ne.s32.totalorder %s69, %s85
    %p87 = scmp.eq.s32.totalorder %s14, 0
    %p88 = por %p86, %p87
    %p89 = scmp.le.s32.totalorder 1, %s8
    %p90 = scmp.lt.s32.totalorder %s8, 3
    %p91 = pnand %p89, %p90
    %p92 = pneg %p91
    // Predicated region
    $region9: #{generator_forward.12} parent=5 // pred_check
      _
    $region10: #{generator_forward.12} parent=5 // pred_check_branch
      %94 = sbr.rel (%p91) target = $region12
    $region11: #{generator_forward.12} parent=5 // pred_region
      %s95 = ssub.s32 %s8, 1
      // Predicated region
      $region13: #{generator_forward.12} parent=11 // pred_check
        %p96 = pneg %p55
      $region14: #{generator_forward.12} parent=11 // pred_check_branch
        %98 = sbr.rel (%p96) target = $region16
      $region15: #{generator_forward.12} parent=11 // pred_region
        _
      $region16: #{generator_forward.12} parent=11 // pred_fallthru
        _
    $region12: #{generator_forward.12} parent=5 // pred_fallthru
      _
    %p99 = scmp.lt.s32.totalorder %s8, 2
    // Predicated region
    $region17: #{generator_forward.12} parent=5 // pred_check
      %p100 = pneg %p99
    $region18: #{generator_forward.12} parent=5 // pred_check_branch
      %102 = sbr.rel (%p100) target = $region20
    $region19: #{generator_forward.12} parent=5 // pred_region
      // Predicated region
      $region21: #{generator_forward.12} parent=19 // pred_check
        %p103 = pneg %p28
      $region22: #{generator_forward.12} parent=19 // pred_check_branch
        %105 = sbr.rel (%p103) target = $region24
      $region23: #{generator_forward.12} parent=19 // pred_region
        %p106 = scmp.lt.s32.totalorder %s8, 1
        %s107 = scalar_select %p106, %s8, 1
        %s108 = smul.addr %s107, 4
        %s109 = smul.addr %s108, 4
        %s110 = scalar_lea.vmem %s0, %s109
      $region24: #{generator_forward.12} parent=19 // pred_fallthru
        _
    $region20: #{generator_forward.12} parent=5 // pred_fallthru
      _
    %p111 = scmp.le.s32.totalorder 1, %s8
    %p112 = scmp.lt.s32.totalorder %s8, 3
    %p113 = pnand %p111, %p112
    %p114 = pneg %p113
    // Predicated region
    $region25: #{generator_forward.12} parent=5 // pred_check
      _
    $region26: #{generator_forward.12} parent=5 // pred_check_branch
      %116 = sbr.rel (%p113) target = $region28
    $region27: #{generator_forward.12} parent=5 // pred_region
      %s117 = ssub.s32 %s8, 1
      %p118 = scmp.lt.s32.totalorder %s13, 1
      %s119 = scalar_select %p118, %s13, 1
      %s120 = smul.addr %s119, 4
      %s121 = smul.addr %s120, 4
      %s122 = scalar_lea.vmem %s0, %s121
      %p123 = pneg %p34
      %p124 = pneg %p31
      %p125 = pneg %p55
      %p126 = pneg %p52
      %p127 = pneg %p81
      %p128 = pneg %p78
      %p129 = scmp.lt.s32.totalorder %s13, 1
      %s130 = scalar_select %p129, %s13, 1
      %s131 = smul.addr %s130, 2
      %s132 = smul.addr %s131, 4
      %s133 = scalar_lea.vmem %s2, %s132
      %p134 = scmp.lt.s32.totalorder %s13, 1
      %s135 = scalar_select %p134, %s13, 1
      %s136 = smul.addr %s135, 4
      %s137 = smul.addr %s136, 4
      %s138 = scalar_lea.vmem %s0, %s137
      %p139 = scmp.lt.s32.totalorder %s13, 1
      %s140 = scalar_select %p139, %s13, 1
      %s141 = smul.addr %s140, 2
      %s142 = smul.addr %s141, 4
      %s143 = scalar_lea.vmem %s2, %s142
      %v144 = vld [vmem:[%s138] sm:$0xff]
      %v145 = vld [vmem:[%s138 + $0x8] sm:$0xff]
      %v146 = vld [vmem:[%s1] sm:$0xf]
      %v147 = vld [vmem:[%s1 + $0x4] sm:$0xf]
      %v148 = vld [vmem:[%s1 + $0x8] sm:$0xf]
      %v149 = vld [vmem:[%s1 + $0xc] sm:$0xf]
      %v150 = vld [vmem:[%s1 + $0x10] sm:$0xf]
      %v151 = vld [vmem:[%s1 + $0x14] sm:$0xf]
      %v152 = vld [vmem:[%s1 + $0x18] sm:$0xf]
      %v153 = vld [vmem:[%s1 + $0x1c] sm:$0xf]
      %v154 = vld [vmem:[%s1 + $0x20] sm:$0xf]
      %v155 = vld [vmem:[%s1 + $0x24] sm:$0xf]
      %v156 = vld [vmem:[%s1 + $0x28] sm:$0xf]
      %v157 = vld [vmem:[%s1 + $0x2c] sm:$0xf]
      %v158 = vld [vmem:[%s1 + $0x30] sm:$0xf]
      %v159 = vld [vmem:[%s1 + $0x34] sm:$0xf]
      %v160 = vld [vmem:[%s1 + $0x38] sm:$0xf]
      %v161 = vld [vmem:[%s1 + $0x3c] sm:$0xf]
      %v162 = vld [vmem:[%s1 + $0x40] sm:$0xf]
      %v163 = vld [vmem:[%s1 + $0x44] sm:$0xf]
      %v164 = vld [vmem:[%s1 + $0x48] sm:$0xf]
      %v165 = vld [vmem:[%s1 + $0x4c] sm:$0xf]
      %v166 = vld [vmem:[%s1 + $0x50] sm:$0xf]
      %v167 = vld [vmem:[%s1 + $0x54] sm:$0xf]
      %v168 = vld [vmem:[%s1 + $0x58] sm:$0xf]
      %v169 = vld [vmem:[%s1 + $0x5c] sm:$0xf]
      %v170 = vld [vmem:[%s1 + $0x60] sm:$0xf]
      %v171 = vld [vmem:[%s1 + $0x64] sm:$0xf]
      %v172 = vld [vmem:[%s1 + $0x68] sm:$0xf]
      %v173 = vld [vmem:[%s1 + $0x6c] sm:$0xf]
      %v174 = vld [vmem:[%s1 + $0x70] sm:$0xf]
      %v175 = vld [vmem:[%s1 + $0x74] sm:$0xf]
      %v176 = vld [vmem:[%s1 + $0x78] sm:$0xf]
      %v177 = vld [vmem:[%s1 + $0x7c] sm:$0xf]
      %v180 = vunpack.c.l.b16 %v144
      %v181 = vunpack.c.h.b16 %v144
      %v182 = vunpack.c.l.b16 %v145
      %v183 = vunpack.c.h.b16 %v145
      %v184 = vpack.c.b16 %v182, %v180
      %v185 = vpack.c.b16 %v183, %v181
      %v220 = vunpack.c.l.b16 %v146
      %v221 = vunpack.c.l.b16 %v147
      %v222 = vunpack.c.l.b16 %v148
      %v223 = vunpack.c.l.b16 %v149
      %v224 = vunpack.c.l.b16 %v150
      %v225 = vunpack.c.l.b16 %v151
      %v226 = vunpack.c.l.b16 %v152
      %v227 = vunpack.c.l.b16 %v153
      %v228 = vunpack.c.l.b16 %v154
      %v229 = vunpack.c.l.b16 %v155
      %v230 = vunpack.c.l.b16 %v156
      %v231 = vunpack.c.l.b16 %v157
      %v232 = vunpack.c.l.b16 %v158
      %v233 = vunpack.c.l.b16 %v159
      %v234 = vunpack.c.l.b16 %v160
      %v235 = vunpack.c.l.b16 %v161
      %v236 = vunpack.c.l.b16 %v162
      %v237 = vunpack.c.l.b16 %v163
      %v238 = vunpack.c.l.b16 %v164
      %v239 = vunpack.c.l.b16 %v165
      %v240 = vunpack.c.l.b16 %v166
      %v241 = vunpack.c.l.b16 %v167
      %v242 = vunpack.c.l.b16 %v168
      %v243 = vunpack.c.l.b16 %v169
      %v244 = vunpack.c.l.b16 %v170
      %v245 = vunpack.c.l.b16 %v171
      %v246 = vunpack.c.l.b16 %v172
      %v247 = vunpack.c.l.b16 %v173
      %v248 = vunpack.c.l.b16 %v174
      %v249 = vunpack.c.l.b16 %v175
      %v250 = vunpack.c.l.b16 %v176
      %v251 = vunpack.c.l.b16 %v177
      %v252 = vpack.c.b16 %v221, %v220
      %v253 = vpack.c.b16 %v223, %v222
      %v254 = vpack.c.b16 %v225, %v224
      %v255 = vpack.c.b16 %v227, %v226
      %v256 = vpack.c.b16 %v229, %v228
      %v257 = vpack.c.b16 %v231, %v230
      %v258 = vpack.c.b16 %v233, %v232
      %v259 = vpack.c.b16 %v235, %v234
      %v260 = vpack.c.b16 %v237, %v236
      %v261 = vpack.c.b16 %v239, %v238
      %v262 = vpack.c.b16 %v241, %v240
      %v263 = vpack.c.b16 %v243, %v242
      %v264 = vpack.c.b16 %v245, %v244
      %v265 = vpack.c.b16 %v247, %v246
      %v266 = vpack.c.b16 %v249, %v248
      %v267 = vpack.c.b16 %v251, %v250
      %284 = vmatpush.bf16.msra.mxu0 %v259
      %285 = vmatpush.bf16.msra.mxu0 %v258
      %286 = vmatpush.bf16.msra.mxu0 %v257
      %287 = vmatpush.bf16.msra.mxu0 %v256
      %288 = vmatpush.bf16.msra.mxu0 %v255
      %289 = vmatpush.bf16.msra.mxu0 %v254
      %290 = vmatpush.bf16.msra.mxu0 %v253
      %291 = vmatpush.bf16.msra.mxu0 %v252
      %292 = vmatmul.bf16.gmra.mxu0 %v184
      %v293 = vpop.f32.mrf.mxu0
      %v294 = vadd.f32 0.0, %v293
      %v295 = vpop.f32.mrf.mxu0
      %v296 = vadd.f32 0.0, %v295
      %297 = vdwg.mxu0
      %298 = vmatpush.bf16.msra.mxu0 %v267
      %299 = vmatpush.bf16.msra.mxu0 %v266
      %300 = vmatpush.bf16.msra.mxu0 %v265
      %301 = vmatpush.bf16.msra.mxu0 %v264
      %302 = vmatpush.bf16.msra.mxu0 %v263
      %303 = vmatpush.bf16.msra.mxu0 %v262
      %304 = vmatpush.bf16.msra.mxu0 %v261
      %305 = vmatpush.bf16.msra.mxu0 %v260
      %306 = vmatmul.bf16.gmra.mxu0 %v185
      %v307 = vpop.f32.mrf.mxu0
      %v308 = vadd.f32 %v294, %v307
      %v309 = vpop.f32.mrf.mxu0
      %v310 = vadd.f32 %v296, %v309
      %311 = vdwg.mxu0
      %v312 = vadd.f32 %v308, %v310
      %v313 = vrot.slane %v312, 4
      %v314 = vadd.f32 %v312, %v313
      %v315 = vrot.slane %v314, 2
      %v316 = vadd.f32 %v314, %v315
      %v317 = vrot.slane %v316, 1
      %v318 = vadd.f32 %v316, %v317
      %v319 = vmul.f32 %v318, 0.0625
      %v320 = vsub.f32 %v308, %v319
      %v321 = vsub.f32 %v310, %v319
      %v322 = vmul.f32 %v320, %v320
      %v323 = vmul.f32 %v321, %v321
      %v324 = vadd.f32 %v322, %v323
      %v325 = vrot.slane %v324, 4
      %v326 = vadd.f32 %v324, %v325
      %v327 = vrot.slane %v326, 2
      %v328 = vadd.f32 %v326, %v327
      %v329 = vrot.slane %v328, 1
      %v330 = vadd.f32 %v328, %v329
      %v331 = vmul.f32 %v330, 0.0625
      %v332 = vadd.f32 %v331, 1e-05
      %v333 = vrsqrt.pop %v332
      %v334 = vmul.f32 %v333, %v332
      %v335 = vmul.f32 %v334, %v333
      %v336 = vmul.f32 0.5, %v335
      %v337 = vsub.f32 1.5, %v336
      %v338 = vmul.f32 %v333, %v337
      %vm339 = vweird.f32 %v332
      %vm340 = vweird.f32 %v333
      %vm341 = vmor %vm339, %vm340
      %v342 = vsel %vm341, %v333, %v338
      %v343 = vmul.f32 %v320, %v342
      %v344 = vmul.f32 %v321, %v342
      %v345 = vmax.f32 %v343, 0.0
      %v346 = vmax.f32 %v344, 0.0
      %v347 = vpack.c.bf16 %v345, %v345
      %v348 = vpack.c.bf16 %v346, %v346
      %349 = vst [vmem:[%s143] sm:$0xf] %v347
      %350 = vst [vmem:[%s143 + $0x4] sm:$0xf] %v348
      %p351 = scmp.lt.s32.totalorder %s13, 1
      %s352 = scalar_select %p351, %s13, 1
      %s353 = smul.addr %s352, 2
      %s354 = smul.addr %s353, 4
      %s355 = scalar_lea.vmem %s2, %s354
      // Predicated region
      $region29: #{generator_forward.12} parent=27 // pred_check
        %p356 = pneg %p78
      $region30: #{generator_forward.12} parent=27 // pred_check_branch
        %358 = sbr.rel (%p356) target = $region32
      $region31: #{generator_forward.12} parent=27 // pred_region
        _
      $region32: #{generator_forward.12} parent=27 // pred_fallthru
        _
    $region28: #{generator_forward.12} parent=5 // pred_fallthru
      _
    %p359 = scmp.le.s32.totalorder 2, %s8
    // Predicated region
    $region33: #{generator_forward.12} parent=5 // pred_check
      %p360 = pneg %p359
    $region34: #{generator_forward.12} parent=5 // pred_check_branch
      %362 = sbr.rel (%p360) target = $region36
    $region35: #{generator_forward.12} parent=5 // pred_region
      %s363 = ssub.s32 %s8, 2
      // Predicated region
      $region37: #{generator_forward.12} parent=35 // pred_check
        %p364 = pneg %p84
      $region38: #{generator_forward.12} parent=35 // pred_check_branch
        %366 = sbr.rel (%p364) target = $region40
      $region39: #{generator_forward.12} parent=35 // pred_region
        %p367 = scmp.lt.s32.totalorder %s14, 1
        %s368 = scalar_select %p367, %s14, 1
        %s369 = smul.addr %s368, 2
        %s370 = smul.addr %s369, 4
        %s371 = scalar_lea.vmem %s2, %s370
      $region40: #{generator_forward.12} parent=35 // pred_fallthru
        _
    $region36: #{generator_forward.12} parent=5 // pred_fallthru
      _
  $region6: #{generator_forward.12} parent=0 // loop_footer
    %s12 = sadd.s32 1, %s8
  $region7: #{generator_forward.12} parent=0 // loop_footer_branch
    %7 = sbr.rel target = $region3
  $region8: #{generator_forward.12} parent=0 // loop_exit
    _

// kernel: generator_forward.13
$region0: #{generator_forward.13}
  #allocation0 [shape = 'u32[]', space=smem, size = 0x4, offset = 0x4, fixed_abs, tag = 'smem constant byte address 0x4 - core index']
  #allocation1 [shape = 'u32[72,128]{1,0:T(1,128)}', space=vmem, size = 0x9000, scoped, tag = 'internal scratch']
  %s0 = inlined_call_operand.vmem [shape: bf16[2,16,384], index: 0, kind: input, shape index: {}]
  %s1 = inlined_call_operand.vmem [shape: bf16[384,128], index: 1, kind: input, shape index: {}]
  %s2 = inlined_call_operand.vmem [shape: bf16[2,16,128], index: 2, kind: output, shape index: {}]
  %s3 = sld [smem:[#allocation0]]
  $region41: #{generator_forward.13} parent=0
    _
  %s5 = ssub.s32 1, %s3
  %s6 = scalar_select 0, %s5, %s3
  loop: start=0, step=1, limit=4
  $region2: #{generator_forward.13} parent=0 // loop_pre_header
    _
  $region3: #{generator_forward.13} parent=0 // loop_header
    %s8 = sphi 0, %s12
    %p9 = scmp.ge.s32.totalorder %s8, 4
    %s18 = sphi 0, %s20
    %s21 = sphi 0, %s18
    %s22 = sphi 0, %s21
    %s38 = sphi 0, %s22
    %s42 = sphi 0, %s42
    %s44 = sphi 0, %s42
    %s45 = sphi 0, %s44
    %s59 = sphi 0, %s45
    %s65 = sphi 0, %s67
    %s68 = sphi 0, %s65
    %s69 = sphi 0, %s68
    %s85 = sphi 0, %s69
  $region4: #{generator_forward.13} parent=0 // loop_header_branch
    %11 = sbr.rel (%p9) target = $region8
  $region5: #{generator_forward.13} parent=0 // loop_body
    %s13 = ssub.s32 %s8, 1
    %s14 = ssub.s32 %s8, 2
    %s15 = sadd.s32 %s8, 1
    %s16 = ssub.s32 %s8, %s15
    %p17 = scmp.eq.s32.totalorder %s16, 0
    %s19 = sadd.s32 %s18, 1
    %s20 = scalar_select %p17, %s18, %s19
    %p23 = pneg %p17
    %p24 = scmp.eq.s32.totalorder %s8, 1
    %p25 = por %p23, %p24
    %p26 = scmp.ne.s32.totalorder %s18, %s21
    %p27 = scmp.eq.s32.totalorder %s8, 0
    %p28 = por %p26, %p27
    %p29 = scmp.ne.s32.totalorder %s18, %s21
    %p30 = scmp.eq.s32.totalorder %s13, 1
    %p31 = por %p29, %p30
    %p32 = scmp.ne.s32.totalorder %s21, %s22
    %p33 = scmp.eq.s32.totalorder %s13, 0
    %p34 = por %p32, %p33
    %p35 = scmp.ne.s32.totalorder %s21, %s22
    %p36 = scmp.eq.s32.totalorder %s14, 1
    %p37 = por %p35, %p36
    %p39 = scmp.ne.s32.totalorder %s22, %s38
    %p40 = scmp.eq.s32.totalorder %s14, 0
    %p41 = por %p39, %p40
    %s43 = sadd.s32 %s42, 1
    %p46 = scmp.eq.s32.totalorder %s8, 1
    %p47 = scmp.ne.s32.totalorder %s42, %s44
    %p48 = scmp.eq.s32.totalorder %s8, 0
    %p49 = por %p47, %p48
    %p50 = scmp.ne.s32.totalorder %s42, %s44
    %p51 = scmp.eq.s32.totalorder %s13, 1
    %p52 = por %p50, %p51
    %p53 = scmp.ne.s32.totalorder %s44, %s45
    %p54 = scmp.eq.s32.totalorder %s13, 0
    %p55 = por %p53, %p54
    %p56 = scmp.ne.s32.totalorder %s44, %s45
    %p57 = scmp.eq.s32.totalorder %s14, 1
    %p58 = por %p56, %p57
    %p60 = scmp.ne.s32.totalorder %s45, %s59
    %p61 = scmp.eq.s32.totalorder %s14, 0
    %p62 = por %p60, %p61
    %s63 = ssub.s32 %s8, %s15
    %p64 = scmp.eq.s32.totalorder %s63, 0
    %s66 = sadd.s32 %s65, 1
    %s67 = scalar_select %p64, %s65, %s66
    %p70 = pneg %p64
    %p71 = scmp.eq.s32.totalorder %s8, 1
    %p72 = por %p70, %p71
    %p73 = scmp.ne.s32.totalorder %s65, %s68
    %p74 = scmp.eq.s32.totalorder %s8, 0
    %p75 = por %p73, %p74
    %p76 = scmp.ne.s32.totalorder %s65, %s68
    %p77 = scmp.eq.s32.totalorder %s13, 1
    %p78 = por %p76, %p77
    %p79 = scmp.ne.s32.totalorder %s68, %s69
    %p80 = scmp.eq.s32.totalorder %s13, 0
    %p81 = por %p79, %p80
    %p82 = scmp.ne.s32.totalorder %s68, %s69
    %p83 = scmp.eq.s32.totalorder %s14, 1
    %p84 = por %p82, %p83
    %p86 = scmp.ne.s32.totalorder %s69, %s85
    %p87 = scmp.eq.s32.totalorder %s14, 0
    %p88 = por %p86, %p87
    %p89 = scmp.le.s32.totalorder 1, %s8
    %p90 = scmp.lt.s32.totalorder %s8, 3
    %p91 = pnand %p89, %p90
    %p92 = pneg %p91
    // Predicated region
    $region9: #{generator_forward.13} parent=5 // pred_check
      _
    $region10: #{generator_forward.13} parent=5 // pred_check_branch
      %94 = sbr.rel (%p91) target = $region12
    $region11: #{generator_forward.13} parent=5 // pred_region
      %s95 = ssub.s32 %s8, 1
      // Predicated region
      $region13: #{generator_forward.13} parent=11 // pred_check
        %p96 = pneg %p55
      $region14: #{generator_forward.13} parent=11 // pred_check_branch
        %98 = sbr.rel (%p96) target = $region16
      $region15: #{generator_forward.13} parent=11 // pred_region
        _
      $region16: #{generator_forward.13} parent=11 // pred_fallthru
        _
    $region12: #{generator_forward.13} parent=5 // pred_fallthru
      _
    %p99 = scmp.lt.s32.totalorder %s8, 2
    // Predicated region
    $region17: #{generator_forward.13} parent=5 // pred_check
      %p100 = pneg %p99
    $region18: #{generator_forward.13} parent=5 // pred_check_branch
      %102 = sbr.rel (%p100) target = $region20
    $region19: #{generator_forward.13} parent=5 // pred_region
      // Predicated region
      $region21: #{generator_forward.13} parent=19 // pred_check
        %p103 = pneg %p28
      $region22: #{generator_forward.13} parent=19 // pred_check_branch
        %105 = sbr.rel (%p103) target = $region24
      $region23: #{generator_forward.13} parent=19 // pred_region
        %p106 = scmp.lt.s32.totalorder %s8, 1
        %s107 = scalar_select %p106, %s8, 1
        %s108 = smul.addr %s107, 6
        %s109 = smul.addr %s108, 4
        %s110 = scalar_lea.vmem %s0, %s109
      $region24: #{generator_forward.13} parent=19 // pred_fallthru
        _
    $region20: #{generator_forward.13} parent=5 // pred_fallthru
      _
    %p111 = scmp.le.s32.totalorder 1, %s8
    %p112 = scmp.lt.s32.totalorder %s8, 3
    %p113 = pnand %p111, %p112
    %p114 = pneg %p113
    // Predicated region
    $region25: #{generator_forward.13} parent=5 // pred_check
      _
    $region26: #{generator_forward.13} parent=5 // pred_check_branch
      %116 = sbr.rel (%p113) target = $region28
    $region27: #{generator_forward.13} parent=5 // pred_region
      %s117 = ssub.s32 %s8, 1
      %p118 = scmp.lt.s32.totalorder %s13, 1
      %s119 = scalar_select %p118, %s13, 1
      %s120 = smul.addr %s119, 6
      %s121 = smul.addr %s120, 4
      %s122 = scalar_lea.vmem %s0, %s121
      %p123 = pneg %p34
      %p124 = pneg %p31
      %p125 = pneg %p55
      %p126 = pneg %p52
      %p127 = pneg %p81
      %p128 = pneg %p78
      %p129 = scmp.lt.s32.totalorder %s13, 1
      %s130 = scalar_select %p129, %s13, 1
      %s131 = smul.addr %s130, 2
      %s132 = smul.addr %s131, 4
      %s133 = scalar_lea.vmem %s2, %s132
      %p134 = scmp.lt.s32.totalorder %s13, 1
      %s135 = scalar_select %p134, %s13, 1
      %s136 = smul.addr %s135, 6
      %s137 = smul.addr %s136, 4
      %s138 = scalar_lea.vmem %s0, %s137
      %p139 = scmp.lt.s32.totalorder %s13, 1
      %s140 = scalar_select %p139, %s13, 1
      %s141 = smul.addr %s140, 2
      %s142 = smul.addr %s141, 4
      %s143 = scalar_lea.vmem %s2, %s142
      %v144 = vld [vmem:[%s138] sm:$0xff]
      %v145 = vld [vmem:[%s138 + $0x8] sm:$0xf]
      %v146 = vld [vmem:[%s138 + $0xc] sm:$0xff]
      %v147 = vld [vmem:[%s138 + $0x14] sm:$0xf]
      %v148 = vld [vmem:[%s1] sm:$0xf]
      %v149 = vld [vmem:[%s1 + $0x4] sm:$0xf]
      %v150 = vld [vmem:[%s1 + $0x8] sm:$0xf]
      %v151 = vld [vmem:[%s1 + $0xc] sm:$0xf]
      %v152 = vld [vmem:[%s1 + $0x10] sm:$0xf]
      %v153 = vld [vmem:[%s1 + $0x14] sm:$0xf]
      %v154 = vld [vmem:[%s1 + $0x18] sm:$0xf]
      %v155 = vld [vmem:[%s1 + $0x1c] sm:$0xf]
      %v156 = vld [vmem:[%s1 + $0x20] sm:$0xf]
      %v157 = vld [vmem:[%s1 + $0x24] sm:$0xf]
      %v158 = vld [vmem:[%s1 + $0x28] sm:$0xf]
      %v159 = vld [vmem:[%s1 + $0x2c] sm:$0xf]
      %v160 = vld [vmem:[%s1 + $0x30] sm:$0xf]
      %v161 = vld [vmem:[%s1 + $0x34] sm:$0xf]
      %v162 = vld [vmem:[%s1 + $0x38] sm:$0xf]
      %v163 = vld [vmem:[%s1 + $0x3c] sm:$0xf]
      %v164 = vld [vmem:[%s1 + $0x40] sm:$0xf]
      %v165 = vld [vmem:[%s1 + $0x44] sm:$0xf]
      %v166 = vld [vmem:[%s1 + $0x48] sm:$0xf]
      %v167 = vld [vmem:[%s1 + $0x4c] sm:$0xf]
      %v168 = vld [vmem:[%s1 + $0x50] sm:$0xf]
      %v169 = vld [vmem:[%s1 + $0x54] sm:$0xf]
      %v170 = vld [vmem:[%s1 + $0x58] sm:$0xf]
      %v171 = vld [vmem:[%s1 + $0x5c] sm:$0xf]
      %v172 = vld [vmem:[%s1 + $0x60] sm:$0xf]
      %v173 = vld [vmem:[%s1 + $0x64] sm:$0xf]
      %v174 = vld [vmem:[%s1 + $0x68] sm:$0xf]
      %v175 = vld [vmem:[%s1 + $0x6c] sm:$0xf]
      %v176 = vld [vmem:[%s1 + $0x70] sm:$0xf]
      %v177 = vld [vmem:[%s1 + $0x74] sm:$0xf]
      %v178 = vld [vmem:[%s1 + $0x78] sm:$0xf]
      %v179 = vld [vmem:[%s1 + $0x7c] sm:$0xf]
      %v180 = vld [vmem:[%s1 + $0x80] sm:$0xf]
      %v181 = vld [vmem:[%s1 + $0x84] sm:$0xf]
      %v182 = vld [vmem:[%s1 + $0x88] sm:$0xf]
      %v183 = vld [vmem:[%s1 + $0x8c] sm:$0xf]
      %v184 = vld [vmem:[%s1 + $0x90] sm:$0xf]
      %v185 = vld [vmem:[%s1 + $0x94] sm:$0xf]
      %v186 = vld [vmem:[%s1 + $0x98] sm:$0xf]
      %v187 = vld [vmem:[%s1 + $0x9c] sm:$0xf]
      %v188 = vld [vmem:[%s1 + $0xa0] sm:$0xf]
      %v189 = vld [vmem:[%s1 + $0xa4] sm:$0xf]
      %v190 = vld [vmem:[%s1 + $0xa8] sm:$0xf]
      %v191 = vld [vmem:[%s1 + $0xac] sm:$0xf]
      %v192 = vld [vmem:[%s1 + $0xb0] sm:$0xf]
      %v193 = vld [vmem:[%s1 + $0xb4] sm:$0xf]
      %v194 = vld [vmem:[%s1 + $0xb8] sm:$0xf]
      %v195 = vld [vmem:[%s1 + $0xbc] sm:$0xf]
      %v200 = vunpack.c.l.b16 %v144
      %v201 = vunpack.c.h.b16 %v144
      %v202 = vunpack.c.l.b16 %v145
      %v203 = vunpack.c.l.b16 %v146
      %v204 = vunpack.c.h.b16 %v146
      %v205 = vunpack.c.l.b16 %v147
      %v206 = vpack.c.b16 %v203, %v200
      %v207 = vpack.c.b16 %v204, %v201
      %v208 = vpack.c.b16 %v205, %v202
      %v260 = vunpack.c.l.b16 %v148
      %v261 = vunpack.c.l.b16 %v149
      %v262 = vunpack.c.l.b16 %v150
      %v263 = vunpack.c.l.b16 %v151
      %v264 = vunpack.c.l.b16 %v152
      %v265 = vunpack.c.l.b16 %v153
      %v266 = vunpack.c.l.b16 %v154
      %v267 = vunpack.c.l.b16 %v155
      %v268 = vunpack.c.l.b16 %v156
      %v269 = vunpack.c.l.b16 %v157
      %v270 = vunpack.c.l.b16 %v158
      %v271 = vunpack.c.l.b16 %v159
      %v272 = vunpack.c.l.b16 %v160
      %v273 = vunpack.c.l.b16 %v161
      %v274 = vunpack.c.l.b16 %v162
      %v275 = vunpack.c.l.b16 %v163
      %v276 = vunpack.c.l.b16 %v164
      %v277 = vunpack.c.l.b16 %v165
      %v278 = vunpack.c.l.b16 %v166
      %v279 = vunpack.c.l.b16 %v167
      %v280 = vunpack.c.l.b16 %v168
      %v281 = vunpack.c.l.b16 %v169
      %v282 = vunpack.c.l.b16 %v170
      %v283 = vunpack.c.l.b16 %v171
      %v284 = vunpack.c.l.b16 %v172
      %v285 = vunpack.c.l.b16 %v173
      %v286 = vunpack.c.l.b16 %v174
      %v287 = vunpack.c.l.b16 %v175
      %v288 = vunpack.c.l.b16 %v176
      %v289 = vunpack.c.l.b16 %v177
      %v290 = vunpack.c.l.b16 %v178
      %v291 = vunpack.c.l.b16 %v179
      %v292 = vunpack.c.l.b16 %v180
      %v293 = vunpack.c.l.b16 %v181
      %v294 = vunpack.c.l.b16 %v182
      %v295 = vunpack.c.l.b16 %v183
      %v296 = vunpack.c.l.b16 %v184
      %v297 = vunpack.c.l.b16 %v185
      %v298 = vunpack.c.l.b16 %v186
      %v299 = vunpack.c.l.b16 %v187
      %v300 = vunpack.c.l.b16 %v188
      %v301 = vunpack.c.l.b16 %v189
      %v302 = vunpack.c.l.b16 %v190
      %v303 = vunpack.c.l.b16 %v191
      %v304 = vunpack.c.l.b16 %v192
      %v305 = vunpack.c.l.b16 %v193
      %v306 = vunpack.c.l.b16 %v194
      %v307 = vunpack.c.l.b16 %v195
      %v308 = vpack.c.b16 %v261, %v260
      %v309 = vpack.c.b16 %v263, %v262
      %v310 = vpack.c.b16 %v265, %v264
      %v311 = vpack.c.b16 %v267, %v266
      %v312 = vpack.c.b16 %v269, %v268
      %v313 = vpack.c.b16 %v271, %v270
      %v314 = vpack.c.b16 %v273, %v272
      %v315 = vpack.c.b16 %v275, %v274
      %v316 = vpack.c.b16 %v277, %v276
      %v317 = vpack.c.b16 %v279, %v278
      %v318 = vpack.c.b16 %v281, %v280
      %v319 = vpack.c.b16 %v283, %v282
      %v320 = vpack.c.b16 %v285, %v284
      %v321 = vpack.c.b16 %v287, %v286
      %v322 = vpack.c.b16 %v289, %v288
      %v323 = vpack.c.b16 %v291, %v290
      %v324 = vpack.c.b16 %v293, %v292
      %v325 = vpack.c.b16 %v295, %v294
      %v326 = vpack.c.b16 %v297, %v296
      %v327 = vpack.c.b16 %v299, %v298
      %v328 = vpack.c.b16 %v301, %v300
      %v329 = vpack.c.b16 %v303, %v302
      %v330 = vpack.c.b16 %v305, %v304
      %v331 = vpack.c.b16 %v307, %v306
      %356 = vmatpush.bf16.msra.mxu0 %v315
      %357 = vmatpush.bf16.msra.mxu0 %v314
      %358 = vmatpush.bf16.msra.mxu0 %v313
      %359 = vmatpush.bf16.msra.mxu0 %v312
      %360 = vmatpush.bf16.msra.mxu0 %v311
      %361 = vmatpush.bf16.msra.mxu0 %v310
      %362 = vmatpush.bf16.msra.mxu0 %v309
      %363 = vmatpush.bf16.msra.mxu0 %v308
      %364 = vmatmul.bf16.gmra.mxu0 %v206
      %v365 = vpop.f32.mrf.mxu0
      %v366 = vadd.f32 0.0, %v365
      %v367 = vpop.f32.mrf.mxu0
      %v368 = vadd.f32 0.0, %v367
      %369 = vdwg.mxu0
      %370 = vmatpush.bf16.msra.mxu0 %v323
      %371 = vmatpush.bf16.msra.mxu0 %v322
      %372 = vmatpush.bf16.msra.mxu0 %v321
      %373 = vmatpush.bf16.msra.mxu0 %v320
      %374 = vmatpush.bf16.msra.mxu0 %v319
      %375 = vmatpush.bf16.msra.mxu0 %v318
      %376 = vmatpush.bf16.msra.mxu0 %v317
      %377 = vmatpush.bf16.msra.mxu0 %v316
      %378 = vmatmul.bf16.gmra.mxu0 %v207
      %v379 = vpop.f32.mrf.mxu0
      %v380 = vadd.f32 %v366, %v379
      %v381 = vpop.f32.mrf.mxu0
      %v382 = vadd.f32 %v368, %v381
      %383 = vdwg.mxu0
      %384 = vmatpush.bf16.msra.mxu0 %v331
      %385 = vmatpush.bf16.msra.mxu0 %v330
      %386 = vmatpush.bf16.msra.mxu0 %v329
      %387 = vmatpush.bf16.msra.mxu0 %v328
      %388 = vmatpush.bf16.msra.mxu0 %v327
      %389 = vmatpush.bf16.msra.mxu0 %v326
      %390 = vmatpush.bf16.msra.mxu0 %v325
      %391 = vmatpush.bf16.msra.mxu0 %v324
      %392 = vmatmul.bf16.gmra.mxu0 %v208
      %v393 = vpop.f32.mrf.mxu0
      %v394 = vadd.f32 %v380, %v393
      %v395 = vpop.f32.mrf.mxu0
      %v396 = vadd.f32 %v382, %v395
      %397 = vdwg.mxu0
      %v398 = vadd.f32 %v394, %v396
      %v399 = vrot.slane %v398, 4
      %v400 = vadd.f32 %v398, %v399
      %v401 = vrot.slane %v400, 2
      %v402 = vadd.f32 %v400, %v401
      %v403 = vrot.slane %v402, 1
      %v404 = vadd.f32 %v402, %v403
      %v405 = vmul.f32 %v404, 0.0625
      %v406 = vsub.f32 %v394, %v405
      %v407 = vsub.f32 %v396, %v405
      %v408 = vmul.f32 %v406, %v406
      %v409 = vmul.f32 %v407, %v407
      %v410 = vadd.f32 %v408, %v409
      %v411 = vrot.slane %v410, 4
      %v412 = vadd.f32 %v410, %v411
      %v413 = vrot.slane %v412, 2
      %v414 = vadd.f32 %v412, %v413
      %v415 = vrot.slane %v414, 1
      %v416 = vadd.f32 %v414, %v415
      %v417 = vmul.f32 %v416, 0.0625
      %v418 = vadd.f32 %v417, 1e-05
      %v419 = vrsqrt.pop %v418
      %v420 = vmul.f32 %v419, %v418
      %v421 = vmul.f32 %v420, %v419
      %v422 = vmul.f32 0.5, %v421
      %v423 = vsub.f32 1.5, %v422
      %v424 = vmul.f32 %v419, %v423
      %vm425 = vweird.f32 %v418
      %vm426 = vweird.f32 %v419
      %vm427 = vmor %vm425, %vm426
      %v428 = vsel %vm427, %v419, %v424
      %v429 = vmul.f32 %v406, %v428
      %v430 = vmul.f32 %v407, %v428
      %v431 = vmax.f32 %v429, 0.0
      %v432 = vmax.f32 %v430, 0.0
      %v433 = vpack.c.bf16 %v431, %v431
      %v434 = vpack.c.bf16 %v432, %v432
      %435 = vst [vmem:[%s143] sm:$0xf] %v433
      %436 = vst [vmem:[%s143 + $0x4] sm:$0xf] %v434
      %p437 = scmp.lt.s32.totalorder %s13, 1
      %s438 = scalar_select %p437, %s13, 1
      %s439 = smul.addr %s438, 2
      %s440 = smul.addr %s439, 4
      %s441 = scalar_lea.vmem %s2, %s440
      // Predicated region
      $region29: #{generator_forward.13} parent=27 // pred_check
        %p442 = pneg %p78
      $region30: #{generator_forward.13} parent=27 // pred_check_branch
        %444 = sbr.rel (%p442) target = $region32
      $region31: #{generator_forward.13} parent=27 // pred_region
        _
      $region32: #{generator_forward.13} parent=27 // pred_fallthru
        _
    $region28: #{generator_forward.13} parent=5 // pred_fallthru
      _
    %p445 = scmp.le.s32.totalorder 2, %s8
    // Predicated region
    $region33: #{generator_forward.13} parent=5 // pred_check
      %p446 = pneg %p445
    $region34: #{generator_forward.13} parent=5 // pred_check_branch
      %448 = sbr.rel (%p446) target = $region36
    $region35: #{generator_forward.13} parent=5 // pred_region
      %s449 = ssub.s32 %s8, 2
      // Predicated region
      $region37: #{generator_forward.13} parent=35 // pred_check
        %p450 = pneg %p84
      $region38: #{generator_forward.13} parent=35 // pred_check_branch
        %452 = sbr.rel (%p450) target = $region40
      $region39: #{generator_forward.13} parent=35 // pred_region
        %p453 = scmp.lt.s32.totalorder %s14, 1
        %s454 = scalar_select %p453, %s14, 1
        %s455 = smul.addr %s454, 2
        %s456 = smul.addr %s455, 4
        %s457 = scalar_lea.vmem %s2, %s456
      $region40: #{generator_forward.13} parent=35 // pred_fallthru
        _
    $region36: #{generator_forward.13} parent=5 // pred_fallthru
      _
  $region6: #{generator_forward.13} parent=0 // loop_footer
    %s12 = sadd.s32 1, %s8
  $region7: #{generator_forward.13} parent=0 // loop_footer_branch
    %7 = sbr.rel target = $region3
  $region8: #{generator_forward.13} parent=0 // loop_exit
    _

// kernel: generator_forward.14
$region0: #{generator_forward.14}
  #allocation0 [shape = 'u32[]', space=smem, size = 0x4, offset = 0x4, fixed_abs, tag = 'smem constant byte address 0x4 - core index']
  #allocation1 [shape = 'u32[72,128]{1,0:T(1,128)}', space=vmem, size = 0x9000, scoped, tag = 'internal scratch']
  %s0 = inlined_call_operand.vmem [shape: bf16[2,16,384], index: 0, kind: input, shape index: {}]
  %s1 = inlined_call_operand.vmem [shape: bf16[384,128], index: 1, kind: input, shape index: {}]
  %s2 = inlined_call_operand.vmem [shape: bf16[2,16,128], index: 2, kind: input, shape index: {}]
  %s3 = inlined_call_operand.vmem [shape: bf16[2,16,128], index: 3, kind: output, shape index: {}]
  %s4 = sld [smem:[#allocation0]]
  $region45: #{generator_forward.14} parent=0
    _
  %s6 = ssub.s32 1, %s4
  %s7 = scalar_select 0, %s6, %s4
  loop: start=0, step=1, limit=4
  $region2: #{generator_forward.14} parent=0 // loop_pre_header
    _
  $region3: #{generator_forward.14} parent=0 // loop_header
    %s9 = sphi 0, %s13
    %p10 = scmp.ge.s32.totalorder %s9, 4
    %s19 = sphi 0, %s21
    %s22 = sphi 0, %s19
    %s23 = sphi 0, %s22
    %s39 = sphi 0, %s23
    %s43 = sphi 0, %s43
    %s45 = sphi 0, %s43
    %s46 = sphi 0, %s45
    %s60 = sphi 0, %s46
    %s66 = sphi 0, %s68
    %s69 = sphi 0, %s66
    %s70 = sphi 0, %s69
    %s86 = sphi 0, %s70
    %s92 = sphi 0, %s94
    %s95 = sphi 0, %s92
    %s96 = sphi 0, %s95
    %s112 = sphi 0, %s96
  $region4: #{generator_forward.14} parent=0 // loop_header_branch
    %12 = sbr.rel (%p10) target = $region8
  $region5: #{generator_forward.14} parent=0 // loop_body
    %s14 = ssub.s32 %s9, 1
    %s15 = ssub.s32 %s9, 2
    %s16 = sadd.s32 %s9, 1
    %s17 = ssub.s32 %s9, %s16
    %p18 = scmp.eq.s32.totalorder %s17, 0
    %s20 = sadd.s32 %s19, 1
    %s21 = scalar_select %p18, %s19, %s20
    %p24 = pneg %p18
    %p25 = scmp.eq.s32.totalorder %s9, 1
    %p26 = por %p24, %p25
    %p27 = scmp.ne.s32.totalorder %s19, %s22
    %p28 = scmp.eq.s32.totalorder %s9, 0
    %p29 = por %p27, %p28
    %p30 = scmp.ne.s32.totalorder %s19, %s22
    %p31 = scmp.eq.s32.totalorder %s14, 1
    %p32 = por %p30, %p31
    %p33 = scmp.ne.s32.totalorder %s22, %s23
    %p34 = scmp.eq.s32.totalorder %s14, 0
    %p35 = por %p33, %p34
    %p36 = scmp.ne.s32.totalorder %s22, %s23
    %p37 = scmp.eq.s32.totalorder %s15, 1
    %p38 = por %p36, %p37
    %p40 = scmp.ne.s32.totalorder %s23, %s39
    %p41 = scmp.eq.s32.totalorder %s15, 0
    %p42 = por %p40, %p41
    %s44 = sadd.s32 %s43, 1
    %p47 = scmp.eq.s32.totalorder %s9, 1
    %p48 = scmp.ne.s32.totalorder %s43, %s45
    %p49 = scmp.eq.s32.totalorder %s9, 0
    %p50 = por %p48, %p49
    %p51 = scmp.ne.s32.totalorder %s43, %s45
    %p52 = scmp.eq.s32.totalorder %s14, 1
    %p53 = por %p51, %p52
    %p54 = scmp.ne.s32.totalorder %s45, %s46
    %p55 = scmp.eq.s32.totalorder %s14, 0
    %p56 = por %p54, %p55
    %p57 = scmp.ne.s32.totalorder %s45, %s46
    %p58 = scmp.eq.s32.totalorder %s15, 1
    %p59 = por %p57, %p58
    %p61 = scmp.ne.s32.totalorder %s46, %s60
    %p62 = scmp.eq.s32.totalorder %s15, 0
    %p63 = por %p61, %p62
    %s64 = ssub.s32 %s9, %s16
    %p65 = scmp.eq.s32.totalorder %s64, 0
    %s67 = sadd.s32 %s66, 1
    %s68 = scalar_select %p65, %s66, %s67
    %p71 = pneg %p65
    %p72 = scmp.eq.s32.totalorder %s9, 1
    %p73 = por %p71, %p72
    %p74 = scmp.ne.s32.totalorder %s66, %s69
    %p75 = scmp.eq.s32.totalorder %s9, 0
    %p76 = por %p74, %p75
    %p77 = scmp.ne.s32.totalorder %s66, %s69
    %p78 = scmp.eq.s32.totalorder %s14, 1
    %p79 = por %p77, %p78
    %p80 = scmp.ne.s32.totalorder %s69, %s70
    %p81 = scmp.eq.s32.totalorder %s14, 0
    %p82 = por %p80, %p81
    %p83 = scmp.ne.s32.totalorder %s69, %s70
    %p84 = scmp.eq.s32.totalorder %s15, 1
    %p85 = por %p83, %p84
    %p87 = scmp.ne.s32.totalorder %s70, %s86
    %p88 = scmp.eq.s32.totalorder %s15, 0
    %p89 = por %p87, %p88
    %s90 = ssub.s32 %s9, %s16
    %p91 = scmp.eq.s32.totalorder %s90, 0
    %s93 = sadd.s32 %s92, 1
    %s94 = scalar_select %p91, %s92, %s93
    %p97 = pneg %p91
    %p98 = scmp.eq.s32.totalorder %s9, 1
    %p99 = por %p97, %p98
    %p100 = scmp.ne.s32.totalorder %s92, %s95
    %p101 = scmp.eq.s32.totalorder %s9, 0
    %p102 = por %p100, %p101
    %p103 = scmp.ne.s32.totalorder %s92, %s95
    %p104 = scmp.eq.s32.totalorder %s14, 1
    %p105 = por %p103, %p104
    %p106 = scmp.ne.s32.totalorder %s95, %s96
    %p107 = scmp.eq.s32.totalorder %s14, 0
    %p108 = por %p106, %p107
    %p109 = scmp.ne.s32.totalorder %s95, %s96
    %p110 = scmp.eq.s32.totalorder %s15, 1
    %p111 = por %p109, %p110
    %p113 = scmp.ne.s32.totalorder %s96, %s112
    %p114 = scmp.eq.s32.totalorder %s15, 0
    %p115 = por %p113, %p114
    %p116 = scmp.le.s32.totalorder 1, %s9
    %p117 = scmp.lt.s32.totalorder %s9, 3
    %p118 = pnand %p116, %p117
    %p119 = pneg %p118
    // Predicated region
    $region9: #{generator_forward.14} parent=5 // pred_check
      _
    $region10: #{generator_forward.14} parent=5 // pred_check_branch
      %121 = sbr.rel (%p118) target = $region12
    $region11: #{generator_forward.14} parent=5 // pred_region
      %s122 = ssub.s32 %s9, 1
      // Predicated region
      $region13: #{generator_forward.14} parent=11 // pred_check
        %p123 = pneg %p56
      $region14: #{generator_forward.14} parent=11 // pred_check_branch
        %125 = sbr.rel (%p123) target = $region16
      $region15: #{generator_forward.14} parent=11 // pred_region
        _
      $region16: #{generator_forward.14} parent=11 // pred_fallthru
        _
    $region12: #{generator_forward.14} parent=5 // pred_fallthru
      _
    %p126 = scmp.lt.s32.totalorder %s9, 2
    // Predicated region
    $region17: #{generator_forward.14} parent=5 // pred_check
      %p127 = pneg %p126
    $region18: #{generator_forward.14} parent=5 // pred_check_branch
      %129 = sbr.rel (%p127) target = $region20
    $region19: #{generator_forward.14} parent=5 // pred_region
      // Predicated region
      $region21: #{generator_forward.14} parent=19 // pred_check
        %p130 = pneg %p29
      $region22: #{generator_forward.14} parent=19 // pred_check_branch
        %132 = sbr.rel (%p130) target = $region24
      $region23: #{generator_forward.14} parent=19 // pred_region
        %p133 = scmp.lt.s32.totalorder %s9, 1
        %s134 = scalar_select %p133, %s9, 1
        %s135 = smul.addr %s134, 6
        %s136 = smul.addr %s135, 4
        %s137 = scalar_lea.vmem %s0, %s136
      $region24: #{generator_forward.14} parent=19 // pred_fallthru
        _
      // Predicated region
      $region25: #{generator_forward.14} parent=19 // pred_check
        %p138 = pneg %p76
      $region26: #{generator_forward.14} parent=19 // pred_check_branch
        %140 = sbr.rel (%p138) target = $region28
      $region27: #{generator_forward.14} parent=19 // pred_region
        %p141 = scmp.lt.s32.totalorder %s9, 1
        %s142 = scalar_select %p141, %s9, 1
        %s143 = smul.addr %s142, 2
        %s144 = smul.addr %s143, 4
        %s145 = scalar_lea.vmem %s2, %s144
      $region28: #{generator_forward.14} parent=19 // pred_fallthru
        _
    $region20: #{generator_forward.14} parent=5 // pred_fallthru
      _
    %p146 = scmp.le.s32.totalorder 1, %s9
    %p147 = scmp.lt.s32.totalorder %s9, 3
    %p148 = pnand %p146, %p147
    %p149 = pneg %p148
    // Predicated region
    $region29: #{generator_forward.14} parent=5 // pred_check
      _
    $region30: #{generator_forward.14} parent=5 // pred_check_branch
      %151 = sbr.rel (%p148) target = $region32
    $region31: #{generator_forward.14} parent=5 // pred_region
      %s152 = ssub.s32 %s9, 1
      %p153 = scmp.lt.s32.totalorder %s14, 1
      %s154 = scalar_select %p153, %s14, 1
      %s155 = smul.addr %s154, 6
      %s156 = smul.addr %s155, 4
      %s157 = scalar_lea.vmem %s0, %s156
      %p158 = pneg %p35
      %p159 = pneg %p32
      %p160 = pneg %p56
      %p161 = pneg %p53
      %p162 = scmp.lt.s32.totalorder %s14, 1
      %s163 = scalar_select %p162, %s14, 1
      %s164 = smul.addr %s163, 2
      %s165 = smul.addr %s164, 4
      %s166 = scalar_lea.vmem %s2, %s165
      %p167 = pneg %p82
      %p168 = pneg %p79
      %p169 = pneg %p108
      %p170 = pneg %p105
      %p171 = scmp.lt.s32.totalorder %s14, 1
      %s172 = scalar_select %p171, %s14, 1
      %s173 = smul.addr %s172, 2
      %s174 = smul.addr %s173, 4
      %s175 = scalar_lea.vmem %s3, %s174
      %p176 = scmp.lt.s32.totalorder %s14, 1
      %s177 = scalar_select %p176, %s14, 1
      %s178 = smul.addr %s177, 6
      %s179 = smul.addr %s178, 4
      %s180 = scalar_lea.vmem %s0, %s179
      %p181 = scmp.lt.s32.totalorder %s14, 1
      %s182 = scalar_select %p181, %s14, 1
      %s183 = smul.addr %s182, 2
      %s184 = smul.addr %s183, 4
      %s185 = scalar_lea.vmem %s2, %s184
      %p186 = scmp.lt.s32.totalorder %s14, 1
      %s187 = scalar_select %p186, %s14, 1
      %s188 = smul.addr %s187, 2
      %s189 = smul.addr %s188, 4
      %s190 = scalar_lea.vmem %s3, %s189
      %v191 = vld [vmem:[%s180] sm:$0xff]
      %v192 = vld [vmem:[%s180 + $0x8] sm:$0xf]
      %v193 = vld [vmem:[%s180 + $0xc] sm:$0xff]
      %v194 = vld [vmem:[%s180 + $0x14] sm:$0xf]
      %v195 = vld [vmem:[%s1] sm:$0xf]
      %v196 = vld [vmem:[%s1 + $0x4] sm:$0xf]
      %v197 = vld [vmem:[%s1 + $0x8] sm:$0xf]
      %v198 = vld [vmem:[%s1 + $0xc] sm:$0xf]
      %v199 = vld [vmem:[%s1 + $0x10] sm:$0xf]
      %v200 = vld [vmem:[%s1 + $0x14] sm:$0xf]
      %v201 = vld [vmem:[%s1 + $0x18] sm:$0xf]
      %v202 = vld [vmem:[%s1 + $0x1c] sm:$0xf]
      %v203 = vld [vmem:[%s1 + $0x20] sm:$0xf]
      %v204 = vld [vmem:[%s1 + $0x24] sm:$0xf]
      %v205 = vld [vmem:[%s1 + $0x28] sm:$0xf]
      %v206 = vld [vmem:[%s1 + $0x2c] sm:$0xf]
      %v207 = vld [vmem:[%s1 + $0x30] sm:$0xf]
      %v208 = vld [vmem:[%s1 + $0x34] sm:$0xf]
      %v209 = vld [vmem:[%s1 + $0x38] sm:$0xf]
      %v210 = vld [vmem:[%s1 + $0x3c] sm:$0xf]
      %v211 = vld [vmem:[%s1 + $0x40] sm:$0xf]
      %v212 = vld [vmem:[%s1 + $0x44] sm:$0xf]
      %v213 = vld [vmem:[%s1 + $0x48] sm:$0xf]
      %v214 = vld [vmem:[%s1 + $0x4c] sm:$0xf]
      %v215 = vld [vmem:[%s1 + $0x50] sm:$0xf]
      %v216 = vld [vmem:[%s1 + $0x54] sm:$0xf]
      %v217 = vld [vmem:[%s1 + $0x58] sm:$0xf]
      %v218 = vld [vmem:[%s1 + $0x5c] sm:$0xf]
      %v219 = vld [vmem:[%s1 + $0x60] sm:$0xf]
      %v220 = vld [vmem:[%s1 + $0x64] sm:$0xf]
      %v221 = vld [vmem:[%s1 + $0x68] sm:$0xf]
      %v222 = vld [vmem:[%s1 + $0x6c] sm:$0xf]
      %v223 = vld [vmem:[%s1 + $0x70] sm:$0xf]
      %v224 = vld [vmem:[%s1 + $0x74] sm:$0xf]
      %v225 = vld [vmem:[%s1 + $0x78] sm:$0xf]
      %v226 = vld [vmem:[%s1 + $0x7c] sm:$0xf]
      %v227 = vld [vmem:[%s1 + $0x80] sm:$0xf]
      %v228 = vld [vmem:[%s1 + $0x84] sm:$0xf]
      %v229 = vld [vmem:[%s1 + $0x88] sm:$0xf]
      %v230 = vld [vmem:[%s1 + $0x8c] sm:$0xf]
      %v231 = vld [vmem:[%s1 + $0x90] sm:$0xf]
      %v232 = vld [vmem:[%s1 + $0x94] sm:$0xf]
      %v233 = vld [vmem:[%s1 + $0x98] sm:$0xf]
      %v234 = vld [vmem:[%s1 + $0x9c] sm:$0xf]
      %v235 = vld [vmem:[%s1 + $0xa0] sm:$0xf]
      %v236 = vld [vmem:[%s1 + $0xa4] sm:$0xf]
      %v237 = vld [vmem:[%s1 + $0xa8] sm:$0xf]
      %v238 = vld [vmem:[%s1 + $0xac] sm:$0xf]
      %v239 = vld [vmem:[%s1 + $0xb0] sm:$0xf]
      %v240 = vld [vmem:[%s1 + $0xb4] sm:$0xf]
      %v241 = vld [vmem:[%s1 + $0xb8] sm:$0xf]
      %v242 = vld [vmem:[%s1 + $0xbc] sm:$0xf]
      %v247 = vunpack.c.l.b16 %v191
      %v248 = vunpack.c.h.b16 %v191
      %v249 = vunpack.c.l.b16 %v192
      %v250 = vunpack.c.l.b16 %v193
      %v251 = vunpack.c.h.b16 %v193
      %v252 = vunpack.c.l.b16 %v194
      %v253 = vpack.c.b16 %v250, %v247
      %v254 = vpack.c.b16 %v251, %v248
      %v255 = vpack.c.b16 %v252, %v249
      %v307 = vunpack.c.l.b16 %v195
      %v308 = vunpack.c.l.b16 %v196
      %v309 = vunpack.c.l.b16 %v197
      %v310 = vunpack.c.l.b16 %v198
      %v311 = vunpack.c.l.b16 %v199
      %v312 = vunpack.c.l.b16 %v200
      %v313 = vunpack.c.l.b16 %v201
      %v314 = vunpack.c.l.b16 %v202
      %v315 = vunpack.c.l.b16 %v203
      %v316 = vunpack.c.l.b16 %v204
      %v317 = vunpack.c.l.b16 %v205
      %v318 = vunpack.c.l.b16 %v206
      %v319 = vunpack.c.l.b16 %v207
      %v320 = vunpack.c.l.b16 %v208
      %v321 = vunpack.c.l.b16 %v209
      %v322 = vunpack.c.l.b16 %v210
      %v323 = vunpack.c.l.b16 %v211
      %v324 = vunpack.c.l.b16 %v212
      %v325 = vunpack.c.l.b16 %v213
      %v326 = vunpack.c.l.b16 %v214
      %v327 = vunpack.c.l.b16 %v215
      %v328 = vunpack.c.l.b16 %v216
      %v329 = vunpack.c.l.b16 %v217
      %v330 = vunpack.c.l.b16 %v218
      %v331 = vunpack.c.l.b16 %v219
      %v332 = vunpack.c.l.b16 %v220
      %v333 = vunpack.c.l.b16 %v221
      %v334 = vunpack.c.l.b16 %v222
      %v335 = vunpack.c.l.b16 %v223
      %v336 = vunpack.c.l.b16 %v224
      %v337 = vunpack.c.l.b16 %v225
      %v338 = vunpack.c.l.b16 %v226
      %v339 = vunpack.c.l.b16 %v227
      %v340 = vunpack.c.l.b16 %v228
      %v341 = vunpack.c.l.b16 %v229
      %v342 = vunpack.c.l.b16 %v230
      %v343 = vunpack.c.l.b16 %v231
      %v344 = vunpack.c.l.b16 %v232
      %v345 = vunpack.c.l.b16 %v233
      %v346 = vunpack.c.l.b16 %v234
      %v347 = vunpack.c.l.b16 %v235
      %v348 = vunpack.c.l.b16 %v236
      %v349 = vunpack.c.l.b16 %v237
      %v350 = vunpack.c.l.b16 %v238
      %v351 = vunpack.c.l.b16 %v239
      %v352 = vunpack.c.l.b16 %v240
      %v353 = vunpack.c.l.b16 %v241
      %v354 = vunpack.c.l.b16 %v242
      %v355 = vpack.c.b16 %v308, %v307
      %v356 = vpack.c.b16 %v310, %v309
      %v357 = vpack.c.b16 %v312, %v311
      %v358 = vpack.c.b16 %v314, %v313
      %v359 = vpack.c.b16 %v316, %v315
      %v360 = vpack.c.b16 %v318, %v317
      %v361 = vpack.c.b16 %v320, %v319
      %v362 = vpack.c.b16 %v322, %v321
      %v363 = vpack.c.b16 %v324, %v323
      %v364 = vpack.c.b16 %v326, %v325
      %v365 = vpack.c.b16 %v328, %v327
      %v366 = vpack.c.b16 %v330, %v329
      %v367 = vpack.c.b16 %v332, %v331
      %v368 = vpack.c.b16 %v334, %v333
      %v369 = vpack.c.b16 %v336, %v335
      %v370 = vpack.c.b16 %v338, %v337
      %v371 = vpack.c.b16 %v340, %v339
      %v372 = vpack.c.b16 %v342, %v341
      %v373 = vpack.c.b16 %v344, %v343
      %v374 = vpack.c.b16 %v346, %v345
      %v375 = vpack.c.b16 %v348, %v347
      %v376 = vpack.c.b16 %v350, %v349
      %v377 = vpack.c.b16 %v352, %v351
      %v378 = vpack.c.b16 %v354, %v353
      %403 = vmatpush.bf16.msra.mxu0 %v362
      %404 = vmatpush.bf16.msra.mxu0 %v361
      %405 = vmatpush.bf16.msra.mxu0 %v360
      %406 = vmatpush.bf16.msra.mxu0 %v359
      %407 = vmatpush.bf16.msra.mxu0 %v358
      %408 = vmatpush.bf16.msra.mxu0 %v357
      %409 = vmatpush.bf16.msra.mxu0 %v356
      %410 = vmatpush.bf16.msra.mxu0 %v355
      %411 = vmatmul.bf16.gmra.mxu0 %v253
      %v412 = vpop.f32.mrf.mxu0
      %v413 = vadd.f32 0.0, %v412
      %v414 = vpop.f32.mrf.mxu0
      %v415 = vadd.f32 0.0, %v414
      %416 = vdwg.mxu0
      %417 = vmatpush.bf16.msra.mxu0 %v370
      %418 = vmatpush.bf16.msra.mxu0 %v369
      %419 = vmatpush.bf16.msra.mxu0 %v368
      %420 = vmatpush.bf16.msra.mxu0 %v367
      %421 = vmatpush.bf16.msra.mxu0 %v366
      %422 = vmatpush.bf16.msra.mxu0 %v365
      %423 = vmatpush.bf16.msra.mxu0 %v364
      %424 = vmatpush.bf16.msra.mxu0 %v363
      %425 = vmatmul.bf16.gmra.mxu0 %v254
      %v426 = vpop.f32.mrf.mxu0
      %v427 = vadd.f32 %v413, %v426
      %v428 = vpop.f32.mrf.mxu0
      %v429 = vadd.f32 %v415, %v428
      %430 = vdwg.mxu0
      %431 = vmatpush.bf16.msra.mxu0 %v378
      %432 = vmatpush.bf16.msra.mxu0 %v377
      %433 = vmatpush.bf16.msra.mxu0 %v376
      %434 = vmatpush.bf16.msra.mxu0 %v375
      %435 = vmatpush.bf16.msra.mxu0 %v374
      %436 = vmatpush.bf16.msra.mxu0 %v373
      %437 = vmatpush.bf16.msra.mxu0 %v372
      %438 = vmatpush.bf16.msra.mxu0 %v371
      %439 = vmatmul.bf16.gmra.mxu0 %v255
      %v440 = vpop.f32.mrf.mxu0
      %v441 = vadd.f32 %v427, %v440
      %v442 = vpop.f32.mrf.mxu0
      %v443 = vadd.f32 %v429, %v442
      %444 = vdwg.mxu0
      %v445 = vadd.f32 %v441, %v443
      %v446 = vrot.slane %v445, 4
      %v447 = vadd.f32 %v445, %v446
      %v448 = vrot.slane %v447, 2
      %v449 = vadd.f32 %v447, %v448
      %v450 = vrot.slane %v449, 1
      %v451 = vadd.f32 %v449, %v450
      %v452 = vmul.f32 %v451, 0.0625
      %v453 = vsub.f32 %v441, %v452
      %v454 = vsub.f32 %v443, %v452
      %v455 = vmul.f32 %v453, %v453
      %v456 = vmul.f32 %v454, %v454
      %v457 = vadd.f32 %v455, %v456
      %v458 = vrot.slane %v457, 4
      %v459 = vadd.f32 %v457, %v458
      %v460 = vrot.slane %v459, 2
      %v461 = vadd.f32 %v459, %v460
      %v462 = vrot.slane %v461, 1
      %v463 = vadd.f32 %v461, %v462
      %v464 = vmul.f32 %v463, 0.0625
      %v465 = vadd.f32 %v464, 1e-05
      %v466 = vrsqrt.pop %v465
      %v467 = vmul.f32 %v466, %v465
      %v468 = vmul.f32 %v467, %v466
      %v469 = vmul.f32 0.5, %v468
      %v470 = vsub.f32 1.5, %v469
      %v471 = vmul.f32 %v466, %v470
      %vm472 = vweird.f32 %v465
      %vm473 = vweird.f32 %v466
      %vm474 = vmor %vm472, %vm473
      %v475 = vsel %vm474, %v466, %v471
      %v476 = vmul.f32 %v453, %v475
      %v477 = vmul.f32 %v454, %v475
      %v478 = vld [vmem:[%s185] sm:$0xf]
      %v479 = vld [vmem:[%s185 + $0x4] sm:$0xf]
      %v480 = vunpack.c.l.bf16 %v478
      %v481 = vunpack.c.l.bf16 %v479
      %v482 = vadd.f32 %v476, %v480
      %v483 = vadd.f32 %v477, %v481
      %v484 = vpack.c.bf16 %v482, %v482
      %v485 = vpack.c.bf16 %v483, %v483
      %486 = vst [vmem:[%s190] sm:$0xf] %v484
      %487 = vst [vmem:[%s190 + $0x4] sm:$0xf] %v485
      %p488 = scmp.lt.s32.totalorder %s14, 1
      %s489 = scalar_select %p488, %s14, 1
      %s490 = smul.addr %s489, 2
      %s491 = smul.addr %s490, 4
      %s492 = scalar_lea.vmem %s3, %s491
      // Predicated region
      $region33: #{generator_forward.14} parent=31 // pred_check
        %p493 = pneg %p105
      $region34: #{generator_forward.14} parent=31 // pred_check_branch
        %495 = sbr.rel (%p493) target = $region36
      $region35: #{generator_forward.14} parent=31 // pred_region
        _
      $region36: #{generator_forward.14} parent=31 // pred_fallthru
        _
    $region32: #{generator_forward.14} parent=5 // pred_fallthru
      _
    %p496 = scmp.le.s32.totalorder 2, %s9
    // Predicated region
    $region37: #{generator_forward.14} parent=5 // pred_check
      %p497 = pneg %p496
    $region38: #{generator_forward.14} parent=5 // pred_check_branch
      %499 = sbr.rel (%p497) target = $region40
    $region39: #{generator_forward.14} parent=5 // pred_region
      %s500 = ssub.s32 %s9, 2
      // Predicated region
      $region41: #{generator_forward.14} parent=39 // pred_check
        %p501 = pneg %p111
      $region42: #{generator_forward.14} parent=39 // pred_check_branch
        %503 = sbr.rel (%p501) target = $region44
      $region43: #{generator_forward.14} parent=39 // pred_region
        %p504 = scmp.lt.s32.totalorder %s15, 1
        %s505 = scalar_select %p504, %s15, 1
        %s506 = smul.addr %s505, 2
        %s507 = smul.addr %s506, 4
        %s508 = scalar_lea.vmem %s3, %s507
      $region44: #{generator_forward.14} parent=39 // pred_fallthru
        _
    $region40: #{generator_forward.14} parent=5 // pred_fallthru
      _
  $region6: #{generator_forward.14} parent=0 // loop_footer
    %s13 = sadd.s32 1, %s9
  $region7: #{generator_forward.14} parent=0 // loop_footer_branch
    %8 = sbr.rel target = $region3
  $region8: #{generator_forward.14} parent=0 // loop_exit
    _

// kernel: generator_forward.17
$region0: #{generator_forward.17}
  #allocation0 [shape = 'u32[]', space=smem, size = 0x4, offset = 0x4, fixed_abs, tag = 'smem constant byte address 0x4 - core index']
  #allocation1 [shape = 'u32[72,128]{1,0:T(1,128)}', space=vmem, size = 0x9000, scoped, tag = 'internal scratch']
  %s0 = inlined_call_operand.vmem [shape: bf16[2,16,128], index: 0, kind: input, shape index: {}]
  %s1 = inlined_call_operand.vmem [shape: bf16[128,512], index: 1, kind: input, shape index: {}]
  %s2 = inlined_call_operand.vmem [shape: bf16[2,16,512], index: 2, kind: output, shape index: {}]
  %s3 = sld [smem:[#allocation0]]
  $region41: #{generator_forward.17} parent=0
    _
  %s5 = ssub.s32 1, %s3
  %s6 = scalar_select 0, %s5, %s3
  loop: start=0, step=1, limit=4
  $region2: #{generator_forward.17} parent=0 // loop_pre_header
    _
  $region3: #{generator_forward.17} parent=0 // loop_header
    %s8 = sphi 0, %s12
    %p9 = scmp.ge.s32.totalorder %s8, 4
    %s18 = sphi 0, %s20
    %s21 = sphi 0, %s18
    %s22 = sphi 0, %s21
    %s38 = sphi 0, %s22
    %s42 = sphi 0, %s42
    %s44 = sphi 0, %s42
    %s45 = sphi 0, %s44
    %s59 = sphi 0, %s45
    %s65 = sphi 0, %s67
    %s68 = sphi 0, %s65
    %s69 = sphi 0, %s68
    %s85 = sphi 0, %s69
  $region4: #{generator_forward.17} parent=0 // loop_header_branch
    %11 = sbr.rel (%p9) target = $region8
  $region5: #{generator_forward.17} parent=0 // loop_body
    %s13 = ssub.s32 %s8, 1
    %s14 = ssub.s32 %s8, 2
    %s15 = sadd.s32 %s8, 1
    %s16 = ssub.s32 %s8, %s15
    %p17 = scmp.eq.s32.totalorder %s16, 0
    %s19 = sadd.s32 %s18, 1
    %s20 = scalar_select %p17, %s18, %s19
    %p23 = pneg %p17
    %p24 = scmp.eq.s32.totalorder %s8, 1
    %p25 = por %p23, %p24
    %p26 = scmp.ne.s32.totalorder %s18, %s21
    %p27 = scmp.eq.s32.totalorder %s8, 0
    %p28 = por %p26, %p27
    %p29 = scmp.ne.s32.totalorder %s18, %s21
    %p30 = scmp.eq.s32.totalorder %s13, 1
    %p31 = por %p29, %p30
    %p32 = scmp.ne.s32.totalorder %s21, %s22
    %p33 = scmp.eq.s32.totalorder %s13, 0
    %p34 = por %p32, %p33
    %p35 = scmp.ne.s32.totalorder %s21, %s22
    %p36 = scmp.eq.s32.totalorder %s14, 1
    %p37 = por %p35, %p36
    %p39 = scmp.ne.s32.totalorder %s22, %s38
    %p40 = scmp.eq.s32.totalorder %s14, 0
    %p41 = por %p39, %p40
    %s43 = sadd.s32 %s42, 1
    %p46 = scmp.eq.s32.totalorder %s8, 1
    %p47 = scmp.ne.s32.totalorder %s42, %s44
    %p48 = scmp.eq.s32.totalorder %s8, 0
    %p49 = por %p47, %p48
    %p50 = scmp.ne.s32.totalorder %s42, %s44
    %p51 = scmp.eq.s32.totalorder %s13, 1
    %p52 = por %p50, %p51
    %p53 = scmp.ne.s32.totalorder %s44, %s45
    %p54 = scmp.eq.s32.totalorder %s13, 0
    %p55 = por %p53, %p54
    %p56 = scmp.ne.s32.totalorder %s44, %s45
    %p57 = scmp.eq.s32.totalorder %s14, 1
    %p58 = por %p56, %p57
    %p60 = scmp.ne.s32.totalorder %s45, %s59
    %p61 = scmp.eq.s32.totalorder %s14, 0
    %p62 = por %p60, %p61
    %s63 = ssub.s32 %s8, %s15
    %p64 = scmp.eq.s32.totalorder %s63, 0
    %s66 = sadd.s32 %s65, 1
    %s67 = scalar_select %p64, %s65, %s66
    %p70 = pneg %p64
    %p71 = scmp.eq.s32.totalorder %s8, 1
    %p72 = por %p70, %p71
    %p73 = scmp.ne.s32.totalorder %s65, %s68
    %p74 = scmp.eq.s32.totalorder %s8, 0
    %p75 = por %p73, %p74
    %p76 = scmp.ne.s32.totalorder %s65, %s68
    %p77 = scmp.eq.s32.totalorder %s13, 1
    %p78 = por %p76, %p77
    %p79 = scmp.ne.s32.totalorder %s68, %s69
    %p80 = scmp.eq.s32.totalorder %s13, 0
    %p81 = por %p79, %p80
    %p82 = scmp.ne.s32.totalorder %s68, %s69
    %p83 = scmp.eq.s32.totalorder %s14, 1
    %p84 = por %p82, %p83
    %p86 = scmp.ne.s32.totalorder %s69, %s85
    %p87 = scmp.eq.s32.totalorder %s14, 0
    %p88 = por %p86, %p87
    %p89 = scmp.le.s32.totalorder 1, %s8
    %p90 = scmp.lt.s32.totalorder %s8, 3
    %p91 = pnand %p89, %p90
    %p92 = pneg %p91
    // Predicated region
    $region9: #{generator_forward.17} parent=5 // pred_check
      _
    $region10: #{generator_forward.17} parent=5 // pred_check_branch
      %94 = sbr.rel (%p91) target = $region12
    $region11: #{generator_forward.17} parent=5 // pred_region
      %s95 = ssub.s32 %s8, 1
      // Predicated region
      $region13: #{generator_forward.17} parent=11 // pred_check
        %p96 = pneg %p55
      $region14: #{generator_forward.17} parent=11 // pred_check_branch
        %98 = sbr.rel (%p96) target = $region16
      $region15: #{generator_forward.17} parent=11 // pred_region
        _
      $region16: #{generator_forward.17} parent=11 // pred_fallthru
        _
    $region12: #{generator_forward.17} parent=5 // pred_fallthru
      _
    %p99 = scmp.lt.s32.totalorder %s8, 2
    // Predicated region
    $region17: #{generator_forward.17} parent=5 // pred_check
      %p100 = pneg %p99
    $region18: #{generator_forward.17} parent=5 // pred_check_branch
      %102 = sbr.rel (%p100) target = $region20
    $region19: #{generator_forward.17} parent=5 // pred_region
      // Predicated region
      $region21: #{generator_forward.17} parent=19 // pred_check
        %p103 = pneg %p28
      $region22: #{generator_forward.17} parent=19 // pred_check_branch
        %105 = sbr.rel (%p103) target = $region24
      $region23: #{generator_forward.17} parent=19 // pred_region
        %p106 = scmp.lt.s32.totalorder %s8, 1
        %s107 = scalar_select %p106, %s8, 1
        %s108 = smul.addr %s107, 2
        %s109 = smul.addr %s108, 4
        %s110 = scalar_lea.vmem %s0, %s109
      $region24: #{generator_forward.17} parent=19 // pred_fallthru
        _
    $region20: #{generator_forward.17} parent=5 // pred_fallthru
      _
    %p111 = scmp.le.s32.totalorder 1, %s8
    %p112 = scmp.lt.s32.totalorder %s8, 3
    %p113 = pnand %p111, %p112
    %p114 = pneg %p113
    // Predicated region
    $region25: #{generator_forward.17} parent=5 // pred_check
      _
    $region26: #{generator_forward.17} parent=5 // pred_check_branch
      %116 = sbr.rel (%p113) target = $region28
    $region27: #{generator_forward.17} parent=5 // pred_region
      %s117 = ssub.s32 %s8, 1
      %p118 = scmp.lt.s32.totalorder %s13, 1
      %s119 = scalar_select %p118, %s13, 1
      %s120 = smul.addr %s119, 2
      %s121 = smul.addr %s120, 4
      %s122 = scalar_lea.vmem %s0, %s121
      %p123 = pneg %p34
      %p124 = pneg %p31
      %p125 = pneg %p55
      %p126 = pneg %p52
      %p127 = pneg %p81
      %p128 = pneg %p78
      %p129 = scmp.lt.s32.totalorder %s13, 1
      %s130 = scalar_select %p129, %s13, 1
      %s131 = smul.addr %s130, 8
      %s132 = smul.addr %s131, 4
      %s133 = scalar_lea.vmem %s2, %s132
      %p134 = scmp.lt.s32.totalorder %s13, 1
      %s135 = scalar_select %p134, %s13, 1
      %s136 = smul.addr %s135, 2
      %s137 = smul.addr %s136, 4
      %s138 = scalar_lea.vmem %s0, %s137
      %p139 = scmp.lt.s32.totalorder %s13, 1
      %s140 = scalar_select %p139, %s13, 1
      %s141 = smul.addr %s140, 8
      %s142 = smul.addr %s141, 4
      %s143 = scalar_lea.vmem %s2, %s142
      %v144 = vld [vmem:[%s138] sm:$0xf]
      %v145 = vld [vmem:[%s138 + $0x4] sm:$0xf]
      %v146 = vld [vmem:[%s1] sm:$0xff]
      %v147 = vld [vmem:[%s1 + $0x8] sm:$0xff]
      %v148 = vld [vmem:[%s1 + $0x10] sm:$0xff]
      %v149 = vld [vmem:[%s1 + $0x18] sm:$0xff]
      %v150 = vld [vmem:[%s1 + $0x20] sm:$0xff]
      %v151 = vld [vmem:[%s1 + $0x28] sm:$0xff]
      %v152 = vld [vmem:[%s1 + $0x30] sm:$0xff]
      %v153 = vld [vmem:[%s1 + $0x38] sm:$0xff]
      %v154 = vld [vmem:[%s1 + $0x40] sm:$0xff]
      %v155 = vld [vmem:[%s1 + $0x48] sm:$0xff]
      %v156 = vld [vmem:[%s1 + $0x50] sm:$0xff]
      %v157 = vld [vmem:[%s1 + $0x58] sm:$0xff]
      %v158 = vld [vmem:[%s1 + $0x60] sm:$0xff]
      %v159 = vld [vmem:[%s1 + $0x68] sm:$0xff]
      %v160 = vld [vmem:[%s1 + $0x70] sm:$0xff]
      %v161 = vld [vmem:[%s1 + $0x78] sm:$0xff]
      %v162 = vld [vmem:[%s1 + $0x80] sm:$0xff]
      %v163 = vld [vmem:[%s1 + $0x88] sm:$0xff]
      %v164 = vld [vmem:[%s1 + $0x90] sm:$0xff]
      %v165 = vld [vmem:[%s1 + $0x98] sm:$0xff]
      %v166 = vld [vmem:[%s1 + $0xa0] sm:$0xff]
      %v167 = vld [vmem:[%s1 + $0xa8] sm:$0xff]
      %v168 = vld [vmem:[%s1 + $0xb0] sm:$0xff]
      %v169 = vld [vmem:[%s1 + $0xb8] sm:$0xff]
      %v170 = vld [vmem:[%s1 + $0xc0] sm:$0xff]
      %v171 = vld [vmem:[%s1 + $0xc8] sm:$0xff]
      %v172 = vld [vmem:[%s1 + $0xd0] sm:$0xff]
      %v173 = vld [vmem:[%s1 + $0xd8] sm:$0xff]
      %v174 = vld [vmem:[%s1 + $0xe0] sm:$0xff]
      %v175 = vld [vmem:[%s1 + $0xe8] sm:$0xff]
      %v176 = vld [vmem:[%s1 + $0xf0] sm:$0xff]
      %v177 = vld [vmem:[%s1 + $0xf8] sm:$0xff]
      %v180 = vunpack.c.l.b16 %v144
      %v181 = vunpack.c.l.b16 %v145
      %v182 = vpack.c.b16 %v181, %v180
      %v216 = vunpack.c.l.b16 %v146
      %v217 = vunpack.c.h.b16 %v146
      %v218 = vunpack.c.l.b16 %v147
      %v219 = vunpack.c.h.b16 %v147
      %v220 = vunpack.c.l.b16 %v148
      %v221 = vunpack.c.h.b16 %v148
      %v222 = vunpack.c.l.b16 %v149
      %v223 = vunpack.c.h.b16 %v149
      %v224 = vunpack.c.l.b16 %v150
      %v225 = vunpack.c.h.b16 %v150
      %v226 = vunpack.c.l.b16 %v151
      %v227 = vunpack.c.h.b16 %v151
      %v228 = vunpack.c.l.b16 %v152
      %v229 = vunpack.c.h.b16 %v152
      %v230 = vunpack.c.l.b16 %v153
      %v231 = vunpack.c.h.b16 %v153
      %v232 = vunpack.c.l.b16 %v154
      %v233 = vunpack.c.h.b16 %v154
      %v234 = vunpack.c.l.b16 %v155
      %v235 = vunpack.c.h.b16 %v155
      %v236 = vunpack.c.l.b16 %v156
      %v237 = vunpack.c.h.b16 %v156
      %v238 = vunpack.c.l.b16 %v157
      %v239 = vunpack.c.h.b16 %v157
      %v240 = vunpack.c.l.b16 %v158
      %v241 = vunpack.c.h.b16 %v158
      %v242 = vunpack.c.l.b16 %v159
      %v243 = vunpack.c.h.b16 %v159
      %v244 = vunpack.c.l.b16 %v160
      %v245 = vunpack.c.h.b16 %v160
      %v246 = vunpack.c.l.b16 %v161
      %v247 = vunpack.c.h.b16 %v161
      %v248 = vunpack.c.l.b16 %v162
      %v249 = vunpack.c.h.b16 %v162
      %v250 = vunpack.c.l.b16 %v163
      %v251 = vunpack.c.h.b16 %v163
      %v252 = vunpack.c.l.b16 %v164
      %v253 = vunpack.c.h.b16 %v164
      %v254 = vunpack.c.l.b16 %v165
      %v255 = vunpack.c.h.b16 %v165
      %v256 = vunpack.c.l.b16 %v166
      %v257 = vunpack.c.h.b16 %v166
      %v258 = vunpack.c.l.b16 %v167
      %v259 = vunpack.c.h.b16 %v167
      %v260 = vunpack.c.l.b16 %v168
      %v261 = vunpack.c.h.b16 %v168
      %v262 = vunpack.c.l.b16 %v169
      %v263 = vunpack.c.h.b16 %v169
      %v264 = vunpack.c.l.b16 %v170
      %v265 = vunpack.c.h.b16 %v170
      %v266 = vunpack.c.l.b16 %v171
      %v267 = vunpack.c.h.b16 %v171
      %v268 = vunpack.c.l.b16 %v172
      %v269 = vunpack.c.h.b16 %v172
      %v270 = vunpack.c.l.b16 %v173
      %v271 = vunpack.c.h.b16 %v173
      %v272 = vunpack.c.l.b16 %v174
      %v273 = vunpack.c.h.b16 %v174
      %v274 = vunpack.c.l.b16 %v175
      %v275 = vunpack.c.h.b16 %v175
      %v276 = vunpack.c.l.b16 %v176
      %v277 = vunpack.c.h.b16 %v176
      %v278 = vunpack.c.l.b16 %v177
      %v279 = vunpack.c.h.b16 %v177
      %v280 = vpack.c.b16 %v220, %v216
      %v281 = vpack.c.b16 %v221, %v217
      %v282 = vpack.c.b16 %v222, %v218
      %v283 = vpack.c.b16 %v223, %v219
      %v284 = vpack.c.b16 %v228, %v224
      %v285 = vpack.c.b16 %v229, %v225
      %v286 = vpack.c.b16 %v230, %v226
      %v287 = vpack.c.b16 %v231, %v227
      %v288 = vpack.c.b16 %v236, %v232
      %v289 = vpack.c.b16 %v237, %v233
      %v290 = vpack.c.b16 %v238, %v234
      %v291 = vpack.c.b16 %v239, %v235
      %v292 = vpack.c.b16 %v244, %v240
      %v293 = vpack.c.b16 %v245, %v241
      %v294 = vpack.c.b16 %v246, %v242
      %v295 = vpack.c.b16 %v247, %v243
      %v296 = vpack.c.b16 %v252, %v248
      %v297 = vpack.c.b16 %v253, %v249
      %v298 = vpack.c.b16 %v254, %v250
      %v299 = vpack.c.b16 %v255, %v251
      %v300 = vpack.c.b16 %v260, %v256
      %v301 = vpack.c.b16 %v261, %v257
      %v302 = vpack.c.b16 %v262, %v258
      %v303 = vpack.c.b16 %v263, %v259
      %v304 = vpack.c.b16 %v268, %v264
      %v305 = vpack.c.b16 %v269, %v265
      %v306 = vpack.c.b16 %v270, %v266
      %v307 = vpack.c.b16 %v271, %v267
      %v308 = vpack.c.b16 %v276, %v272
      %v309 = vpack.c.b16 %v277, %v273
      %v310 = vpack.c.b16 %v278, %v274
      %v311 = vpack.c.b16 %v279, %v275
      %344 = vmatpush.bf16.msra.mxu0 %v308
      %345 = vmatpush.bf16.msra.mxu0 %v304
      %346 = vmatpush.bf16.msra.mxu0 %v300
      %347 = vmatpush.bf16.msra.mxu0 %v296
      %348 = vmatpush.bf16.msra.mxu0 %v292
      %349 = vmatpush.bf16.msra.mxu0 %v288
      %350 = vmatpush.bf16.msra.mxu0 %v284
      %351 = vmatpush.bf16.msra.mxu0 %v280
      %352 = vmatmul.bf16.gmra.mxu0 %v182
      %v353 = vpop.f32.mrf.mxu0
      %v354 = vadd.f32 0.0, %v353
      %v355 = vpop.f32.mrf.mxu0
      %v356 = vadd.f32 0.0, %v355
      %357 = vdwg.mxu0
      %358 = vmatpush.bf16.msra.mxu0 %v309
      %359 = vmatpush.bf16.msra.mxu0 %v305
      %360 = vmatpush.bf16.msra.mxu0 %v301
      %361 = vmatpush.bf16.msra.mxu0 %v297
      %362 = vmatpush.bf16.msra.mxu0 %v293
      %363 = vmatpush.bf16.msra.mxu0 %v289
      %364 = vmatpush.bf16.msra.mxu0 %v285
      %365 = vmatpush.bf16.msra.mxu0 %v281
      %366 = vmatmul.bf16.gmra.mxu0 %v182
      %v367 = vpop.f32.mrf.mxu0
      %v368 = vadd.f32 0.0, %v367
      %v369 = vpop.f32.mrf.mxu0
      %v370 = vadd.f32 0.0, %v369
      %371 = vdwg.mxu0
      %372 = vmatpush.bf16.msra.mxu0 %v310
      %373 = vmatpush.bf16.msra.mxu0 %v306
      %374 = vmatpush.bf16.msra.mxu0 %v302
      %375 = vmatpush.bf16.msra.mxu0 %v298
      %376 = vmatpush.bf16.msra.mxu0 %v294
      %377 = vmatpush.bf16.msra.mxu0 %v290
      %378 = vmatpush.bf16.msra.mxu0 %v286
      %379 = vmatpush.bf16.msra.mxu0 %v282
      %380 = vmatmul.bf16.gmra.mxu0 %v182
      %v381 = vpop.f32.mrf.mxu0
      %v382 = vadd.f32 0.0, %v381
      %v383 = vpop.f32.mrf.mxu0
      %v384 = vadd.f32 0.0, %v383
      %385 = vdwg.mxu0
      %386 = vmatpush.bf16.msra.mxu0 %v311
      %387 = vmatpush.bf16.msra.mxu0 %v307
      %388 = vmatpush.bf16.msra.mxu0 %v303
      %389 = vmatpush.bf16.msra.mxu0 %v299
      %390 = vmatpush.bf16.msra.mxu0 %v295
      %391 = vmatpush.bf16.msra.mxu0 %v291
      %392 = vmatpush.bf16.msra.mxu0 %v287
      %393 = vmatpush.bf16.msra.mxu0 %v283
      %394 = vmatmul.bf16.gmra.mxu0 %v182
      %v395 = vpop.f32.mrf.mxu0
      %v396 = vadd.f32 0.0, %v395
      %v397 = vpop.f32.mrf.mxu0
      %v398 = vadd.f32 0.0, %v397
      %399 = vdwg.mxu0
      %v400 = vadd.f32 %v354, %v356
      %v401 = vrot.slane %v400, 4
      %v402 = vadd.f32 %v400, %v401
      %v403 = vrot.slane %v402, 2
      %v404 = vadd.f32 %v402, %v403
      %v405 = vrot.slane %v404, 1
      %v406 = vadd.f32 %v404, %v405
      %v407 = vadd.f32 %v368, %v370
      %v408 = vrot.slane %v407, 4
      %v409 = vadd.f32 %v407, %v408
      %v410 = vrot.slane %v409, 2
      %v411 = vadd.f32 %v409, %v410
      %v412 = vrot.slane %v411, 1
      %v413 = vadd.f32 %v411, %v412
      %v414 = vadd.f32 %v382, %v384
      %v415 = vrot.slane %v414, 4
      %v416 = vadd.f32 %v414, %v415
      %v417 = vrot.slane %v416, 2
      %v418 = vadd.f32 %v416, %v417
      %v419 = vrot.slane %v418, 1
      %v420 = vadd.f32 %v418, %v419
      %v421 = vadd.f32 %v396, %v398
      %v422 = vrot.slane %v421, 4
      %v423 = vadd.f32 %v421, %v422
      %v424 = vrot.slane %v423, 2
      %v425 = vadd.f32 %v423, %v424
      %v426 = vrot.slane %v425, 1
      %v427 = vadd.f32 %v425, %v426
      %v428 = vadd.f32 %v406, %v413
      %v429 = vadd.f32 %v428, %v420
      %v430 = vadd.f32 %v429, %v427
      %v431 = vmul.f32 %v430, 0.015625
      %v432 = vperm.slane %v431, 0
      %v433 = vsub.f32 %v354, %v432
      %v434 = vsub.f32 %v368, %v432
      %v435 = vsub.f32 %v382, %v432
      %v436 = vsub.f32 %v396, %v432
      %v437 = vsub.f32 %v356, %v432
      %v438 = vsub.f32 %v370, %v432
      %v439 = vsub.f32 %v384, %v432
      %v440 = vsub.f32 %v398, %v432
      %v441 = vmul.f32 %v433, %v433
      %v442 = vmul.f32 %v434, %v434
      %v443 = vmul.f32 %v435, %v435
      %v444 = vmul.f32 %v436, %v436
      %v445 = vmul.f32 %v437, %v437
      %v446 = vmul.f32 %v438, %v438
      %v447 = vmul.f32 %v439, %v439
      %v448 = vmul.f32 %v440, %v440
      %v449 = vadd.f32 %v441, %v445
      %v450 = vrot.slane %v449, 4
      %v451 = vadd.f32 %v449, %v450
      %v452 = vrot.slane %v451, 2
      %v453 = vadd.f32 %v451, %v452
      %v454 = vrot.slane %v453, 1
      %v455 = vadd.f32 %v453, %v454
      %v456 = vadd.f32 %v442, %v446
      %v457 = vrot.slane %v456, 4
      %v458 = vadd.f32 %v456, %v457
      %v459 = vrot.slane %v458, 2
      %v460 = vadd.f32 %v458, %v459
      %v461 = vrot.slane %v460, 1
      %v462 = vadd.f32 %v460, %v461
      %v463 = vadd.f32 %v443, %v447
      %v464 = vrot.slane %v463, 4
      %v465 = vadd.f32 %v463, %v464
      %v466 = vrot.slane %v465, 2
      %v467 = vadd.f32 %v465, %v466
      %v468 = vrot.slane %v467, 1
      %v469 = vadd.f32 %v467, %v468
      %v470 = vadd.f32 %v444, %v448
      %v471 = vrot.slane %v470, 4
      %v472 = vadd.f32 %v470, %v471
      %v473 = vrot.slane %v472, 2
      %v474 = vadd.f32 %v472, %v473
      %v475 = vrot.slane %v474, 1
      %v476 = vadd.f32 %v474, %v475
      %v477 = vadd.f32 %v455, %v462
      %v478 = vadd.f32 %v477, %v469
      %v479 = vadd.f32 %v478, %v476
      %v480 = vmul.f32 %v479, 0.015625
      %v481 = vadd.f32 %v480, 1e-05
      %v482 = vrsqrt.pop %v481
      %v483 = vmul.f32 %v482, %v481
      %v484 = vmul.f32 %v483, %v482
      %v485 = vmul.f32 0.5, %v484
      %v486 = vsub.f32 1.5, %v485
      %v487 = vmul.f32 %v482, %v486
      %vm488 = vweird.f32 %v481
      %vm489 = vweird.f32 %v482
      %vm490 = vmor %vm488, %vm489
      %v491 = vsel %vm490, %v482, %v487
      %v492 = vperm.slane %v491, 0
      %v493 = vmul.f32 %v433, %v492
      %v494 = vmul.f32 %v434, %v492
      %v495 = vmul.f32 %v435, %v492
      %v496 = vmul.f32 %v436, %v492
      %v497 = vmul.f32 %v437, %v492
      %v498 = vmul.f32 %v438, %v492
      %v499 = vmul.f32 %v439, %v492
      %v500 = vmul.f32 %v440, %v492
      %v501 = vmax.f32 %v493, 0.0
      %v502 = vmax.f32 %v494, 0.0
      %v503 = vmax.f32 %v495, 0.0
      %v504 = vmax.f32 %v496, 0.0
      %v505 = vmax.f32 %v497, 0.0
      %v506 = vmax.f32 %v498, 0.0
      %v507 = vmax.f32 %v499, 0.0
      %v508 = vmax.f32 %v500, 0.0
      %v509 = vpack.c.bf16 %v502, %v501
      %v510 = vpack.c.bf16 %v504, %v503
      %v511 = vpack.c.bf16 %v506, %v505
      %v512 = vpack.c.bf16 %v508, %v507
      %513 = vst [vmem:[%s143] sm:$0xff] %v509
      %514 = vst [vmem:[%s143 + $0x8] sm:$0xff] %v510
      %515 = vst [vmem:[%s143 + $0x10] sm:$0xff] %v511
      %516 = vst [vmem:[%s143 + $0x18] sm:$0xff] %v512
      %p517 = scmp.lt.s32.totalorder %s13, 1
      %s518 = scalar_select %p517, %s13, 1
      %s519 = smul.addr %s518, 8
      %s520 = smul.addr %s519, 4
      %s521 = scalar_lea.vmem %s2, %s520
      // Predicated region
      $region29: #{generator_forward.17} parent=27 // pred_check
        %p522 = pneg %p78
      $region30: #{generator_forward.17} parent=27 // pred_check_branch
        %524 = sbr.rel (%p522) target = $region32
      $region31: #{generator_forward.17} parent=27 // pred_region
        _
      $region32: #{generator_forward.17} parent=27 // pred_fallthru
        _
    $region28: #{generator_forward.17} parent=5 // pred_fallthru
      _
    %p525 = scmp.le.s32.totalorder 2, %s8
    // Predicated region
    $region33: #{generator_forward.17} parent=5 // pred_check
      %p526 = pneg %p525
    $region34: #{generator_forward.17} parent=5 // pred_check_branch
      %528 = sbr.rel (%p526) target = $region36
    $region35: #{generator_forward.17} parent=5 // pred_region
      %s529 = ssub.s32 %s8, 2
      // Predicated region
      $region37: #{generator_forward.17} parent=35 // pred_check
        %p530 = pneg %p84
      $region38: #{generator_forward.17} parent=35 // pred_check_branch
        %532 = sbr.rel (%p530) target = $region40
      $region39: #{generator_forward.17} parent=35 // pred_region
        %p533 = scmp.lt.s32.totalorder %s14, 1
        %s534 = scalar_select %p533, %s14, 1
        %s535 = smul.addr %s534, 8
        %s536 = smul.addr %s535, 4
        %s537 = scalar_lea.vmem %s2, %s536
      $region40: #{generator_forward.17} parent=35 // pred_fallthru
        _
    $region36: #{generator_forward.17} parent=5 // pred_fallthru
      _
  $region6: #{generator_forward.17} parent=0 // loop_footer
    %s12 = sadd.s32 1, %s8
  $region7: #{generator_forward.17} parent=0 // loop_footer_branch
    %7 = sbr.rel target = $region3
  $region8: #{generator_forward.17} parent=0 // loop_exit
    _

// kernel: generator_forward.18
$region0: #{generator_forward.18}
  #allocation0 [shape = 'u32[]', space=smem, size = 0x4, offset = 0x4, fixed_abs, tag = 'smem constant byte address 0x4 - core index']
  #allocation1 [shape = 'u32[72,128]{1,0:T(1,128)}', space=vmem, size = 0x9000, scoped, tag = 'internal scratch']
  %s0 = inlined_call_operand.vmem [shape: bf16[2,64,128], index: 0, kind: input, shape index: {}]
  %s1 = inlined_call_operand.vmem [shape: bf16[128,512], index: 1, kind: input, shape index: {}]
  %s2 = inlined_call_operand.vmem [shape: bf16[2,64,512], index: 2, kind: output, shape index: {}]
  %s3 = sld [smem:[#allocation0]]
  $region41: #{generator_forward.18} parent=0
    _
  %s5 = ssub.s32 1, %s3
  %s6 = scalar_select 0, %s5, %s3
  loop: start=0, step=1, limit=4
  $region2: #{generator_forward.18} parent=0 // loop_pre_header
    _
  $region3: #{generator_forward.18} parent=0 // loop_header
    %s8 = sphi 0, %s12
    %p9 = scmp.ge.s32.totalorder %s8, 4
    %s18 = sphi 0, %s20
    %s21 = sphi 0, %s18
    %s22 = sphi 0, %s21
    %s38 = sphi 0, %s22
    %s42 = sphi 0, %s42
    %s44 = sphi 0, %s42
    %s45 = sphi 0, %s44
    %s59 = sphi 0, %s45
    %s65 = sphi 0, %s67
    %s68 = sphi 0, %s65
    %s69 = sphi 0, %s68
    %s85 = sphi 0, %s69
  $region4: #{generator_forward.18} parent=0 // loop_header_branch
    %11 = sbr.rel (%p9) target = $region8
  $region5: #{generator_forward.18} parent=0 // loop_body
    %s13 = ssub.s32 %s8, 1
    %s14 = ssub.s32 %s8, 2
    %s15 = sadd.s32 %s8, 1
    %s16 = ssub.s32 %s8, %s15
    %p17 = scmp.eq.s32.totalorder %s16, 0
    %s19 = sadd.s32 %s18, 1
    %s20 = scalar_select %p17, %s18, %s19
    %p23 = pneg %p17
    %p24 = scmp.eq.s32.totalorder %s8, 1
    %p25 = por %p23, %p24
    %p26 = scmp.ne.s32.totalorder %s18, %s21
    %p27 = scmp.eq.s32.totalorder %s8, 0
    %p28 = por %p26, %p27
    %p29 = scmp.ne.s32.totalorder %s18, %s21
    %p30 = scmp.eq.s32.totalorder %s13, 1
    %p31 = por %p29, %p30
    %p32 = scmp.ne.s32.totalorder %s21, %s22
    %p33 = scmp.eq.s32.totalorder %s13, 0
    %p34 = por %p32, %p33
    %p35 = scmp.ne.s32.totalorder %s21, %s22
    %p36 = scmp.eq.s32.totalorder %s14, 1
    %p37 = por %p35, %p36
    %p39 = scmp.ne.s32.totalorder %s22, %s38
    %p40 = scmp.eq.s32.totalorder %s14, 0
    %p41 = por %p39, %p40
    %s43 = sadd.s32 %s42, 1
    %p46 = scmp.eq.s32.totalorder %s8, 1
    %p47 = scmp.ne.s32.totalorder %s42, %s44
    %p48 = scmp.eq.s32.totalorder %s8, 0
    %p49 = por %p47, %p48
    %p50 = scmp.ne.s32.totalorder %s42, %s44
    %p51 = scmp.eq.s32.totalorder %s13, 1
    %p52 = por %p50, %p51
    %p53 = scmp.ne.s32.totalorder %s44, %s45
    %p54 = scmp.eq.s32.totalorder %s13, 0
    %p55 = por %p53, %p54
    %p56 = scmp.ne.s32.totalorder %s44, %s45
    %p57 = scmp.eq.s32.totalorder %s14, 1
    %p58 = por %p56, %p57
    %p60 = scmp.ne.s32.totalorder %s45, %s59
    %p61 = scmp.eq.s32.totalorder %s14, 0
    %p62 = por %p60, %p61
    %s63 = ssub.s32 %s8, %s15
    %p64 = scmp.eq.s32.totalorder %s63, 0
    %s66 = sadd.s32 %s65, 1
    %s67 = scalar_select %p64, %s65, %s66
    %p70 = pneg %p64
    %p71 = scmp.eq.s32.totalorder %s8, 1
    %p72 = por %p70, %p71
    %p73 = scmp.ne.s32.totalorder %s65, %s68
    %p74 = scmp.eq.s32.totalorder %s8, 0
    %p75 = por %p73, %p74
    %p76 = scmp.ne.s32.totalorder %s65, %s68
    %p77 = scmp.eq.s32.totalorder %s13, 1
    %p78 = por %p76, %p77
    %p79 = scmp.ne.s32.totalorder %s68, %s69
    %p80 = scmp.eq.s32.totalorder %s13, 0
    %p81 = por %p79, %p80
    %p82 = scmp.ne.s32.totalorder %s68, %s69
    %p83 = scmp.eq.s32.totalorder %s14, 1
    %p84 = por %p82, %p83
    %p86 = scmp.ne.s32.totalorder %s69, %s85
    %p87 = scmp.eq.s32.totalorder %s14, 0
    %p88 = por %p86, %p87
    %p89 = scmp.le.s32.totalorder 1, %s8
    %p90 = scmp.lt.s32.totalorder %s8, 3
    %p91 = pnand %p89, %p90
    %p92 = pneg %p91
    // Predicated region
    $region9: #{generator_forward.18} parent=5 // pred_check
      _
    $region10: #{generator_forward.18} parent=5 // pred_check_branch
      %94 = sbr.rel (%p91) target = $region12
    $region11: #{generator_forward.18} parent=5 // pred_region
      %s95 = ssub.s32 %s8, 1
      // Predicated region
      $region13: #{generator_forward.18} parent=11 // pred_check
        %p96 = pneg %p55
      $region14: #{generator_forward.18} parent=11 // pred_check_branch
        %98 = sbr.rel (%p96) target = $region16
      $region15: #{generator_forward.18} parent=11 // pred_region
        _
      $region16: #{generator_forward.18} parent=11 // pred_fallthru
        _
    $region12: #{generator_forward.18} parent=5 // pred_fallthru
      _
    %p99 = scmp.lt.s32.totalorder %s8, 2
    // Predicated region
    $region17: #{generator_forward.18} parent=5 // pred_check
      %p100 = pneg %p99
    $region18: #{generator_forward.18} parent=5 // pred_check_branch
      %102 = sbr.rel (%p100) target = $region20
    $region19: #{generator_forward.18} parent=5 // pred_region
      // Predicated region
      $region21: #{generator_forward.18} parent=19 // pred_check
        %p103 = pneg %p28
      $region22: #{generator_forward.18} parent=19 // pred_check_branch
        %105 = sbr.rel (%p103) target = $region24
      $region23: #{generator_forward.18} parent=19 // pred_region
        %p106 = scmp.lt.s32.totalorder %s8, 1
        %s107 = scalar_select %p106, %s8, 1
        %s108 = smul.addr %s107, 8
        %s109 = smul.addr %s108, 4
        %s110 = scalar_lea.vmem %s0, %s109
      $region24: #{generator_forward.18} parent=19 // pred_fallthru
        _
    $region20: #{generator_forward.18} parent=5 // pred_fallthru
      _
    %p111 = scmp.le.s32.totalorder 1, %s8
    %p112 = scmp.lt.s32.totalorder %s8, 3
    %p113 = pnand %p111, %p112
    %p114 = pneg %p113
    // Predicated region
    $region25: #{generator_forward.18} parent=5 // pred_check
      _
    $region26: #{generator_forward.18} parent=5 // pred_check_branch
      %116 = sbr.rel (%p113) target = $region28
    $region27: #{generator_forward.18} parent=5 // pred_region
      %s117 = ssub.s32 %s8, 1
      %p118 = scmp.lt.s32.totalorder %s13, 1
      %s119 = scalar_select %p118, %s13, 1
      %s120 = smul.addr %s119, 8
      %s121 = smul.addr %s120, 4
      %s122 = scalar_lea.vmem %s0, %s121
      %p123 = pneg %p34
      %p124 = pneg %p31
      %p125 = pneg %p55
      %p126 = pneg %p52
      %p127 = pneg %p81
      %p128 = pneg %p78
      %p129 = scmp.lt.s32.totalorder %s13, 1
      %s130 = scalar_select %p129, %s13, 1
      %s131 = smul.addr %s130, 32
      %s132 = smul.addr %s131, 4
      %s133 = scalar_lea.vmem %s2, %s132
      %p134 = scmp.lt.s32.totalorder %s13, 1
      %s135 = scalar_select %p134, %s13, 1
      %s136 = smul.addr %s135, 8
      %s137 = smul.addr %s136, 4
      %s138 = scalar_lea.vmem %s0, %s137
      %p139 = scmp.lt.s32.totalorder %s13, 1
      %s140 = scalar_select %p139, %s13, 1
      %s141 = smul.addr %s140, 32
      %s142 = smul.addr %s141, 4
      %s143 = scalar_lea.vmem %s2, %s142
      %v144 = vld [vmem:[%s138] sm:$0xf]
      %v145 = vld [vmem:[%s138 + $0x4] sm:$0xf]
      %v146 = vld [vmem:[%s138 + $0x8] sm:$0xf]
      %v147 = vld [vmem:[%s138 + $0xc] sm:$0xf]
      %v148 = vld [vmem:[%s138 + $0x10] sm:$0xf]
      %v149 = vld [vmem:[%s138 + $0x14] sm:$0xf]
      %v150 = vld [vmem:[%s138 + $0x18] sm:$0xf]
      %v151 = vld [vmem:[%s138 + $0x1c] sm:$0xf]
      %v152 = vld [vmem:[%s1] sm:$0xff]
      %v153 = vld [vmem:[%s1 + $0x8] sm:$0xff]
      %v154 = vld [vmem:[%s1 + $0x10] sm:$0xff]
      %v155 = vld [vmem:[%s1 + $0x18] sm:$0xff]
      %v156 = vld [vmem:[%s1 + $0x20] sm:$0xff]
      %v157 = vld [vmem:[%s1 + $0x28] sm:$0xff]
      %v158 = vld [vmem:[%s1 + $0x30] sm:$0xff]
      %v159 = vld [vmem:[%s1 + $0x38] sm:$0xff]
      %v160 = vld [vmem:[%s1 + $0x40] sm:$0xff]
      %v161 = vld [vmem:[%s1 + $0x48] sm:$0xff]
      %v162 = vld [vmem:[%s1 + $0x50] sm:$0xff]
      %v163 = vld [vmem:[%s1 + $0x58] sm:$0xff]
      %v164 = vld [vmem:[%s1 + $0x60] sm:$0xff]
      %v165 = vld [vmem:[%s1 + $0x68] sm:$0xff]
      %v166 = vld [vmem:[%s1 + $0x70] sm:$0xff]
      %v167 = vld [vmem:[%s1 + $0x78] sm:$0xff]
      %v168 = vld [vmem:[%s1 + $0x80] sm:$0xff]
      %v169 = vld [vmem:[%s1 + $0x88] sm:$0xff]
      %v170 = vld [vmem:[%s1 + $0x90] sm:$0xff]
      %v171 = vld [vmem:[%s1 + $0x98] sm:$0xff]
      %v172 = vld [vmem:[%s1 + $0xa0] sm:$0xff]
      %v173 = vld [vmem:[%s1 + $0xa8] sm:$0xff]
      %v174 = vld [vmem:[%s1 + $0xb0] sm:$0xff]
      %v175 = vld [vmem:[%s1 + $0xb8] sm:$0xff]
      %v176 = vld [vmem:[%s1 + $0xc0] sm:$0xff]
      %v177 = vld [vmem:[%s1 + $0xc8] sm:$0xff]
      %v178 = vld [vmem:[%s1 + $0xd0] sm:$0xff]
      %v179 = vld [vmem:[%s1 + $0xd8] sm:$0xff]
      %v180 = vld [vmem:[%s1 + $0xe0] sm:$0xff]
      %v181 = vld [vmem:[%s1 + $0xe8] sm:$0xff]
      %v182 = vld [vmem:[%s1 + $0xf0] sm:$0xff]
      %v183 = vld [vmem:[%s1 + $0xf8] sm:$0xff]
      %v192 = vunpack.c.l.b16 %v144
      %v193 = vunpack.c.l.b16 %v145
      %v194 = vunpack.c.l.b16 %v146
      %v195 = vunpack.c.l.b16 %v147
      %v196 = vunpack.c.l.b16 %v148
      %v197 = vunpack.c.l.b16 %v149
      %v198 = vunpack.c.l.b16 %v150
      %v199 = vunpack.c.l.b16 %v151
      %v200 = vpack.c.b16 %v193, %v192
      %v201 = vpack.c.b16 %v195, %v194
      %v202 = vpack.c.b16 %v197, %v196
      %v203 = vpack.c.b16 %v199, %v198
      %v240 = vunpack.c.l.b16 %v152
      %v241 = vunpack.c.h.b16 %v152
      %v242 = vunpack.c.l.b16 %v153
      %v243 = vunpack.c.h.b16 %v153
      %v244 = vunpack.c.l.b16 %v154
      %v245 = vunpack.c.h.b16 %v154
      %v246 = vunpack.c.l.b16 %v155
      %v247 = vunpack.c.h.b16 %v155
      %v248 = vunpack.c.l.b16 %v156
      %v249 = vunpack.c.h.b16 %v156
      %v250 = vunpack.c.l.b16 %v157
      %v251 = vunpack.c.h.b16 %v157
      %v252 = vunpack.c.l.b16 %v158
      %v253 = vunpack.c.h.b16 %v158
      %v254 = vunpack.c.l.b16 %v159
      %v255 = vunpack.c.h.b16 %v159
      %v256 = vunpack.c.l.b16 %v160
      %v257 = vunpack.c.h.b16 %v160
      %v258 = vunpack.c.l.b16 %v161
      %v259 = vunpack.c.h.b16 %v161
      %v260 = vunpack.c.l.b16 %v162
      %v261 = vunpack.c.h.b16 %v162
      %v262 = vunpack.c.l.b16 %v163
      %v263 = vunpack.c.h.b16 %v163
      %v264 = vunpack.c.l.b16 %v164
      %v265 = vunpack.c.h.b16 %v164
      %v266 = vunpack.c.l.b16 %v165
      %v267 = vunpack.c.h.b16 %v165
      %v268 = vunpack.c.l.b16 %v166
      %v269 = vunpack.c.h.b16 %v166
      %v270 = vunpack.c.l.b16 %v167
      %v271 = vunpack.c.h.b16 %v167
      %v272 = vunpack.c.l.b16 %v168
      %v273 = vunpack.c.h.b16 %v168
      %v274 = vunpack.c.l.b16 %v169
      %v275 = vunpack.c.h.b16 %v169
      %v276 = vunpack.c.l.b16 %v170
      %v277 = vunpack.c.h.b16 %v170
      %v278 = vunpack.c.l.b16 %v171
      %v279 = vunpack.c.h.b16 %v171
      %v280 = vunpack.c.l.b16 %v172
      %v281 = vunpack.c.h.b16 %v172
      %v282 = vunpack.c.l.b16 %v173
      %v283 = vunpack.c.h.b16 %v173
      %v284 = vunpack.c.l.b16 %v174
      %v285 = vunpack.c.h.b16 %v174
      %v286 = vunpack.c.l.b16 %v175
      %v287 = vunpack.c.h.b16 %v175
      %v288 = vunpack.c.l.b16 %v176
      %v289 = vunpack.c.h.b16 %v176
      %v290 = vunpack.c.l.b16 %v177
      %v291 = vunpack.c.h.b16 %v177
      %v292 = vunpack.c.l.b16 %v178
      %v293 = vunpack.c.h.b16 %v178
      %v294 = vunpack.c.l.b16 %v179
      %v295 = vunpack.c.h.b16 %v179
      %v296 = vunpack.c.l.b16 %v180
      %v297 = vunpack.c.h.b16 %v180
      %v298 = vunpack.c.l.b16 %v181
      %v299 = vunpack.c.h.b16 %v181
      %v300 = vunpack.c.l.b16 %v182
      %v301 = vunpack.c.h.b16 %v182
      %v302 = vunpack.c.l.b16 %v183
      %v303 = vunpack.c.h.b16 %v183
      %v304 = vpack.c.b16 %v244, %v240
      %v305 = vpack.c.b16 %v245, %v241
      %v306 = vpack.c.b16 %v246, %v242
      %v307 = vpack.c.b16 %v247, %v243
      %v308 = vpack.c.b16 %v252, %v248
      %v309 = vpack.c.b16 %v253, %v249
      %v310 = vpack.c.b16 %v254, %v250
      %v311 = vpack.c.b16 %v255, %v251
      %v312 = vpack.c.b16 %v260, %v256
      %v313 = vpack.c.b16 %v261, %v257
      %v314 = vpack.c.b16 %v262, %v258
      %v315 = vpack.c.b16 %v263, %v259
      %v316 = vpack.c.b16 %v268, %v264
      %v317 = vpack.c.b16 %v269, %v265
      %v318 = vpack.c.b16 %v270, %v266
      %v319 = vpack.c.b16 %v271, %v267
      %v320 = vpack.c.b16 %v276, %v272
      %v321 = vpack.c.b16 %v277, %v273
      %v322 = vpack.c.b16 %v278, %v274
      %v323 = vpack.c.b16 %v279, %v275
      %v324 = vpack.c.b16 %v284, %v280
      %v325 = vpack.c.b16 %v285, %v281
      %v326 = vpack.c.b16 %v286, %v282
      %v327 = vpack.c.b16 %v287, %v283
      %v328 = vpack.c.b16 %v292, %v288
      %v329 = vpack.c.b16 %v293, %v289
      %v330 = vpack.c.b16 %v294, %v290
      %v331 = vpack.c.b16 %v295, %v291
      %v332 = vpack.c.b16 %v300, %v296
      %v333 = vpack.c.b16 %v301, %v297
      %v334 = vpack.c.b16 %v302, %v298
      %v335 = vpack.c.b16 %v303, %v299
      %368 = vmatpush.bf16.msra.mxu0 %v332
      %369 = vmatpush.bf16.msra.mxu0 %v328
      %370 = vmatpush.bf16.msra.mxu0 %v324
      %371 = vmatpush.bf16.msra.mxu0 %v320
      %372 = vmatpush.bf16.msra.mxu0 %v316
      %373 = vmatpush.bf16.msra.mxu0 %v312
      %374 = vmatpush.bf16.msra.mxu0 %v308
      %375 = vmatpush.bf16.msra.mxu0 %v304
      %376 = vmatmul.bf16.gmra.mxu0 %v200
      %v377 = vpop.f32.mrf.mxu0
      %v378 = vadd.f32 0.0, %v377
      %v379 = vpop.f32.mrf.mxu0
      %v380 = vadd.f32 0.0, %v379
      %381 = vmatmul.bf16.gmra.mxu0 %v201
      %v382 = vpop.f32.mrf.mxu0
      %v383 = vadd.f32 0.0, %v382
      %v384 = vpop.f32.mrf.mxu0
      %v385 = vadd.f32 0.0, %v384
      %386 = vmatmul.bf16.gmra.mxu0 %v202
      %v387 = vpop.f32.mrf.mxu0
      %v388 = vadd.f32 0.0, %v387
      %v389 = vpop.f32.mrf.mxu0
      %v390 = vadd.f32 0.0, %v389
      %391 = vmatmul.bf16.gmra.mxu0 %v203
      %v392 = vpop.f32.mrf.mxu0
      %v393 = vadd.f32 0.0, %v392
      %v394 = vpop.f32.mrf.mxu0
      %v395 = vadd.f32 0.0, %v394
      %396 = vdwg.mxu0
      %397 = vmatpush.bf16.msra.mxu0 %v333
      %398 = vmatpush.bf16.msra.mxu0 %v329
      %399 = vmatpush.bf16.msra.mxu0 %v325
      %400 = vmatpush.bf16.msra.mxu0 %v321
      %401 = vmatpush.bf16.msra.mxu0 %v317
      %402 = vmatpush.bf16.msra.mxu0 %v313
      %403 = vmatpush.bf16.msra.mxu0 %v309
      %404 = vmatpush.bf16.msra.mxu0 %v305
      %405 = vmatmul.bf16.gmra.mxu0 %v200
      %v406 = vpop.f32.mrf.mxu0
      %v407 = vadd.f32 0.0, %v406
      %v408 = vpop.f32.mrf.mxu0
      %v409 = vadd.f32 0.0, %v408
      %410 = vmatmul.bf16.gmra.mxu0 %v201
      %v411 = vpop.f32.mrf.mxu0
      %v412 = vadd.f32 0.0, %v411
      %v413 = vpop.f32.mrf.mxu0
      %v414 = vadd.f32 0.0, %v413
      %415 = vmatmul.bf16.gmra.mxu0 %v202
      %v416 = vpop.f32.mrf.mxu0
      %v417 = vadd.f32 0.0, %v416
      %v418 = vpop.f32.mrf.mxu0
      %v419 = vadd.f32 0.0, %v418
      %420 = vmatmul.bf16.gmra.mxu0 %v203
      %v421 = vpop.f32.mrf.mxu0
      %v422 = vadd.f32 0.0, %v421
      %v423 = vpop.f32.mrf.mxu0
      %v424 = vadd.f32 0.0, %v423
      %425 = vdwg.mxu0
      %426 = vmatpush.bf16.msra.mxu0 %v334
      %427 = vmatpush.bf16.msra.mxu0 %v330
      %428 = vmatpush.bf16.msra.mxu0 %v326
      %429 = vmatpush.bf16.msra.mxu0 %v322
      %430 = vmatpush.bf16.msra.mxu0 %v318
      %431 = vmatpush.bf16.msra.mxu0 %v314
      %432 = vmatpush.bf16.msra.mxu0 %v310
      %433 = vmatpush.bf16.msra.mxu0 %v306
      %434 = vmatmul.bf16.gmra.mxu0 %v200
      %v435 = vpop.f32.mrf.mxu0
      %v436 = vadd.f32 0.0, %v435
      %v437 = vpop.f32.mrf.mxu0
      %v438 = vadd.f32 0.0, %v437
      %439 = vmatmul.bf16.gmra.mxu0 %v201
      %v440 = vpop.f32.mrf.mxu0
      %v441 = vadd.f32 0.0, %v440
      %v442 = vpop.f32.mrf.mxu0
      %v443 = vadd.f32 0.0, %v442
      %444 = vmatmul.bf16.gmra.mxu0 %v202
      %v445 = vpop.f32.mrf.mxu0
      %v446 = vadd.f32 0.0, %v445
      %v447 = vpop.f32.mrf.mxu0
      %v448 = vadd.f32 0.0, %v447
      %449 = vmatmul.bf16.gmra.mxu0 %v203
      %v450 = vpop.f32.mrf.mxu0
      %v451 = vadd.f32 0.0, %v450
      %v452 = vpop.f32.mrf.mxu0
      %v453 = vadd.f32 0.0, %v452
      %454 = vdwg.mxu0
      %455 = vmatpush.bf16.msra.mxu0 %v335
      %456 = vmatpush.bf16.msra.mxu0 %v331
      %457 = vmatpush.bf16.msra.mxu0 %v327
      %458 = vmatpush.bf16.msra.mxu0 %v323
      %459 = vmatpush.bf16.msra.mxu0 %v319
      %460 = vmatpush.bf16.msra.mxu0 %v315
      %461 = vmatpush.bf16.msra.mxu0 %v311
      %462 = vmatpush.bf16.msra.mxu0 %v307
      %463 = vmatmul.bf16.gmra.mxu0 %v200
      %v464 = vpop.f32.mrf.mxu0
      %v465 = vadd.f32 0.0, %v464
      %v466 = vpop.f32.mrf.mxu0
      %v467 = vadd.f32 0.0, %v466
      %468 = vmatmul.bf16.gmra.mxu0 %v201
      %v469 = vpop.f32.mrf.mxu0
      %v470 = vadd.f32 0.0, %v469
      %v471 = vpop.f32.mrf.mxu0
      %v472 = vadd.f32 0.0, %v471
      %473 = vmatmul.bf16.gmra.mxu0 %v202
      %v474 = vpop.f32.mrf.mxu0
      %v475 = vadd.f32 0.0, %v474
      %v476 = vpop.f32.mrf.mxu0
      %v477 = vadd.f32 0.0, %v476
      %478 = vmatmul.bf16.gmra.mxu0 %v203
      %v479 = vpop.f32.mrf.mxu0
      %v480 = vadd.f32 0.0, %v479
      %v481 = vpop.f32.mrf.mxu0
      %v482 = vadd.f32 0.0, %v481
      %483 = vdwg.mxu0
      %v484 = vadd.f32 %v378, %v380
      %v485 = vadd.f32 %v484, %v383
      %v486 = vadd.f32 %v485, %v385
      %v487 = vadd.f32 %v486, %v388
      %v488 = vadd.f32 %v487, %v390
      %v489 = vadd.f32 %v488, %v393
      %v490 = vadd.f32 %v489, %v395
      %v491 = vrot.slane %v490, 4
      %v492 = vadd.f32 %v490, %v491
      %v493 = vrot.slane %v492, 2
      %v494 = vadd.f32 %v492, %v493
      %v495 = vrot.slane %v494, 1
      %v496 = vadd.f32 %v494, %v495
      %v497 = vadd.f32 %v407, %v409
      %v498 = vadd.f32 %v497, %v412
      %v499 = vadd.f32 %v498, %v414
      %v500 = vadd.f32 %v499, %v417
      %v501 = vadd.f32 %v500, %v419
      %v502 = vadd.f32 %v501, %v422
      %v503 = vadd.f32 %v502, %v424
      %v504 = vrot.slane %v503, 4
      %v505 = vadd.f32 %v503, %v504
      %v506 = vrot.slane %v505, 2
      %v507 = vadd.f32 %v505, %v506
      %v508 = vrot.slane %v507, 1
      %v509 = vadd.f32 %v507, %v508
      %v510 = vadd.f32 %v436, %v438
      %v511 = vadd.f32 %v510, %v441
      %v512 = vadd.f32 %v511, %v443
      %v513 = vadd.f32 %v512, %v446
      %v514 = vadd.f32 %v513, %v448
      %v515 = vadd.f32 %v514, %v451
      %v516 = vadd.f32 %v515, %v453
      %v517 = vrot.slane %v516, 4
      %v518 = vadd.f32 %v516, %v517
      %v519 = vrot.slane %v518, 2
      %v520 = vadd.f32 %v518, %v519
      %v521 = vrot.slane %v520, 1
      %v522 = vadd.f32 %v520, %v521
      %v523 = vadd.f32 %v465, %v467
      %v524 = vadd.f32 %v523, %v470
      %v525 = vadd.f32 %v524, %v472
      %v526 = vadd.f32 %v525, %v475
      %v527 = vadd.f32 %v526, %v477
      %v528 = vadd.f32 %v527, %v480
      %v529 = vadd.f32 %v528, %v482
      %v530 = vrot.slane %v529, 4
      %v531 = vadd.f32 %v529, %v530
      %v532 = vrot.slane %v531, 2
      %v533 = vadd.f32 %v531, %v532
      %v534 = vrot.slane %v533, 1
      %v535 = vadd.f32 %v533, %v534
      %v536 = vadd.f32 %v496, %v509
      %v537 = vadd.f32 %v536, %v522
      %v538 = vadd.f32 %v537, %v535
      %v539 = vmul.f32 %v538, 0.00390625
      %v540 = vperm.slane %v539, 0
      %v541 = vsub.f32 %v378, %v540
      %v542 = vsub.f32 %v407, %v540
      %v543 = vsub.f32 %v436, %v540
      %v544 = vsub.f32 %v465, %v540
      %v545 = vsub.f32 %v380, %v540
      %v546 = vsub.f32 %v409, %v540
      %v547 = vsub.f32 %v438, %v540
      %v548 = vsub.f32 %v467, %v540
      %v549 = vsub.f32 %v383, %v540
      %v550 = vsub.f32 %v412, %v540
      %v551 = vsub.f32 %v441, %v540
      %v552 = vsub.f32 %v470, %v540
      %v553 = vsub.f32 %v385, %v540
      %v554 = vsub.f32 %v414, %v540
      %v555 = vsub.f32 %v443, %v540
      %v556 = vsub.f32 %v472, %v540
      %v557 = vsub.f32 %v388, %v540
      %v558 = vsub.f32 %v417, %v540
      %v559 = vsub.f32 %v446, %v540
      %v560 = vsub.f32 %v475, %v540
      %v561 = vsub.f32 %v390, %v540
      %v562 = vsub.f32 %v419, %v540
      %v563 = vsub.f32 %v448, %v540
      %v564 = vsub.f32 %v477, %v540
      %v565 = vsub.f32 %v393, %v540
      %v566 = vsub.f32 %v422, %v540
      %v567 = vsub.f32 %v451, %v540
      %v568 = vsub.f32 %v480, %v540
      %v569 = vsub.f32 %v395, %v540
      %v570 = vsub.f32 %v424, %v540
      %v571 = vsub.f32 %v453, %v540
      %v572 = vsub.f32 %v482, %v540
      %v573 = vmul.f32 %v541, %v541
      %v574 = vmul.f32 %v542, %v542
      %v575 = vmul.f32 %v543, %v543
      %v576 = vmul.f32 %v544, %v544
      %v577 = vmul.f32 %v545, %v545
      %v578 = vmul.f32 %v546, %v546
      %v579 = vmul.f32 %v547, %v547
      %v580 = vmul.f32 %v548, %v548
      %v581 = vmul.f32 %v549, %v549
      %v582 = vmul.f32 %v550, %v550
      %v583 = vmul.f32 %v551, %v551
      %v584 = vmul.f32 %v552, %v552
      %v585 = vmul.f32 %v553, %v553
      %v586 = vmul.f32 %v554, %v554
      %v587 = vmul.f32 %v555, %v555
      %v588 = vmul.f32 %v556, %v556
      %v589 = vmul.f32 %v557, %v557
      %v590 = vmul.f32 %v558, %v558
      %v591 = vmul.f32 %v559, %v559
      %v592 = vmul.f32 %v560, %v560
      %v593 = vmul.f32 %v561, %v561
      %v594 = vmul.f32 %v562, %v562
      %v595 = vmul.f32 %v563, %v563
      %v596 = vmul.f32 %v564, %v564
      %v597 = vmul.f32 %v565, %v565
      %v598 = vmul.f32 %v566, %v566
      %v599 = vmul.f32 %v567, %v567
      %v600 = vmul.f32 %v568, %v568
      %v601 = vmul.f32 %v569, %v569
      %v602 = vmul.f32 %v570, %v570
      %v603 = vmul.f32 %v571, %v571
      %v604 = vmul.f32 %v572, %v572
      %v605 = vadd.f32 %v573, %v577
      %v606 = vadd.f32 %v605, %v581
      %v607 = vadd.f32 %v606, %v585
      %v608 = vadd.f32 %v607, %v589
      %v609 = vadd.f32 %v608, %v593
      %v610 = vadd.f32 %v609, %v597
      %v611 = vadd.f32 %v610, %v601
      %v612 = vrot.slane %v611, 4
      %v613 = vadd.f32 %v611, %v612
      %v614 = vrot.slane %v613, 2
      %v615 = vadd.f32 %v613, %v614
      %v616 = vrot.slane %v615, 1
      %v617 = vadd.f32 %v615, %v616
      %v618 = vadd.f32 %v574, %v578
      %v619 = vadd.f32 %v618, %v582
      %v620 = vadd.f32 %v619, %v586
      %v621 = vadd.f32 %v620, %v590
      %v622 = vadd.f32 %v621, %v594
      %v623 = vadd.f32 %v622, %v598
      %v624 = vadd.f32 %v623, %v602
      %v625 = vrot.slane %v624, 4
      %v626 = vadd.f32 %v624, %v625
      %v627 = vrot.slane %v626, 2
      %v628 = vadd.f32 %v626, %v627
      %v629 = vrot.slane %v628, 1
      %v630 = vadd.f32 %v628, %v629
      %v631 = vadd.f32 %v575, %v579
      %v632 = vadd.f32 %v631, %v583
      %v633 = vadd.f32 %v632, %v587
      %v634 = vadd.f32 %v633, %v591
      %v635 = vadd.f32 %v634, %v595
      %v636 = vadd.f32 %v635, %v599
      %v637 = vadd.f32 %v636, %v603
      %v638 = vrot.slane %v637, 4
      %v639 = vadd.f32 %v637, %v638
      %v640 = vrot.slane %v639, 2
      %v641 = vadd.f32 %v639, %v640
      %v642 = vrot.slane %v641, 1
      %v643 = vadd.f32 %v641, %v642
      %v644 = vadd.f32 %v576, %v580
      %v645 = vadd.f32 %v644, %v584
      %v646 = vadd.f32 %v645, %v588
      %v647 = vadd.f32 %v646, %v592
      %v648 = vadd.f32 %v647, %v596
      %v649 = vadd.f32 %v648, %v600
      %v650 = vadd.f32 %v649, %v604
      %v651 = vrot.slane %v650, 4
      %v652 = vadd.f32 %v650, %v651
      %v653 = vrot.slane %v652, 2
      %v654 = vadd.f32 %v652, %v653
      %v655 = vrot.slane %v654, 1
      %v656 = vadd.f32 %v654, %v655
      %v657 = vadd.f32 %v617, %v630
      %v658 = vadd.f32 %v657, %v643
      %v659 = vadd.f32 %v658, %v656
      %v660 = vmul.f32 %v659, 0.00390625
      %v661 = vadd.f32 %v660, 1e-05
      %v662 = vrsqrt.pop %v661
      %v663 = vmul.f32 %v662, %v661
      %v664 = vmul.f32 %v663, %v662
      %v665 = vmul.f32 0.5, %v664
      %v666 = vsub.f32 1.5, %v665
      %v667 = vmul.f32 %v662, %v666
      %vm668 = vweird.f32 %v661
      %vm669 = vweird.f32 %v662
      %vm670 = vmor %vm668, %vm669
      %v671 = vsel %vm670, %v662, %v667
      %v672 = vperm.slane %v671, 0
      %v673 = vmul.f32 %v541, %v672
      %v674 = vmul.f32 %v542, %v672
      %v675 = vmul.f32 %v543, %v672
      %v676 = vmul.f32 %v544, %v672
      %v677 = vmul.f32 %v545, %v672
      %v678 = vmul.f32 %v546, %v672
      %v679 = vmul.f32 %v547, %v672
      %v680 = vmul.f32 %v548, %v672
      %v681 = vmul.f32 %v549, %v672
      %v682 = vmul.f32 %v550, %v672
      %v683 = vmul.f32 %v551, %v672
      %v684 = vmul.f32 %v552, %v672
      %v685 = vmul.f32 %v553, %v672
      %v686 = vmul.f32 %v554, %v672
      %v687 = vmul.f32 %v555, %v672
      %v688 = vmul.f32 %v556, %v672
      %v689 = vmul.f32 %v557, %v672
      %v690 = vmul.f32 %v558, %v672
      %v691 = vmul.f32 %v559, %v672
      %v692 = vmul.f32 %v560, %v672
      %v693 = vmul.f32 %v561, %v672
      %v694 = vmul.f32 %v562, %v672
      %v695 = vmul.f32 %v563, %v672
      %v696 = vmul.f32 %v564, %v672
      %v697 = vmul.f32 %v565, %v672
      %v698 = vmul.f32 %v566, %v672
      %v699 = vmul.f32 %v567, %v672
      %v700 = vmul.f32 %v568, %v672
      %v701 = vmul.f32 %v569, %v672
      %v702 = vmul.f32 %v570, %v672
      %v703 = vmul.f32 %v571, %v672
      %v704 = vmul.f32 %v572, %v672
      %v705 = vmax.f32 %v673, 0.0
      %v706 = vmax.f32 %v674, 0.0
      %v707 = vmax.f32 %v675, 0.0
      %v708 = vmax.f32 %v676, 0.0
      %v709 = vmax.f32 %v677, 0.0
      %v710 = vmax.f32 %v678, 0.0
      %v711 = vmax.f32 %v679, 0.0
      %v712 = vmax.f32 %v680, 0.0
      %v713 = vmax.f32 %v681, 0.0
      %v714 = vmax.f32 %v682, 0.0
      %v715 = vmax.f32 %v683, 0.0
      %v716 = vmax.f32 %v684, 0.0
      %v717 = vmax.f32 %v685, 0.0
      %v718 = vmax.f32 %v686, 0.0
      %v719 = vmax.f32 %v687, 0.0
      %v720 = vmax.f32 %v688, 0.0
      %v721 = vmax.f32 %v689, 0.0
      %v722 = vmax.f32 %v690, 0.0
      %v723 = vmax.f32 %v691, 0.0
      %v724 = vmax.f32 %v692, 0.0
      %v725 = vmax.f32 %v693, 0.0
      %v726 = vmax.f32 %v694, 0.0
      %v727 = vmax.f32 %v695, 0.0
      %v728 = vmax.f32 %v696, 0.0
      %v729 = vmax.f32 %v697, 0.0
      %v730 = vmax.f32 %v698, 0.0
      %v731 = vmax.f32 %v699, 0.0
      %v732 = vmax.f32 %v700, 0.0
      %v733 = vmax.f32 %v701, 0.0
      %v734 = vmax.f32 %v702, 0.0
      %v735 = vmax.f32 %v703, 0.0
      %v736 = vmax.f32 %v704, 0.0
      %v737 = vpack.c.bf16 %v706, %v705
      %v738 = vpack.c.bf16 %v708, %v707
      %v739 = vpack.c.bf16 %v710, %v709
      %v740 = vpack.c.bf16 %v712, %v711
      %v741 = vpack.c.bf16 %v714, %v713
      %v742 = vpack.c.bf16 %v716, %v715
      %v743 = vpack.c.bf16 %v718, %v717
      %v744 = vpack.c.bf16 %v720, %v719
      %v745 = vpack.c.bf16 %v722, %v721
      %v746 = vpack.c.bf16 %v724, %v723
      %v747 = vpack.c.bf16 %v726, %v725
      %v748 = vpack.c.bf16 %v728, %v727
      %v749 = vpack.c.bf16 %v730, %v729
      %v750 = vpack.c.bf16 %v732, %v731
      %v751 = vpack.c.bf16 %v734, %v733
      %v752 = vpack.c.bf16 %v736, %v735
      %753 = vst [vmem:[%s143] sm:$0xff] %v737
      %754 = vst [vmem:[%s143 + $0x8] sm:$0xff] %v738
      %755 = vst [vmem:[%s143 + $0x10] sm:$0xff] %v739
      %756 = vst [vmem:[%s143 + $0x18] sm:$0xff] %v740
      %757 = vst [vmem:[%s143 + $0x20] sm:$0xff] %v741
      %758 = vst [vmem:[%s143 + $0x28] sm:$0xff] %v742
      %759 = vst [vmem:[%s143 + $0x30] sm:$0xff] %v743
      %760 = vst [vmem:[%s143 + $0x38] sm:$0xff] %v744
      %761 = vst [vmem:[%s143 + $0x40] sm:$0xff] %v745
      %762 = vst [vmem:[%s143 + $0x48] sm:$0xff] %v746
      %763 = vst [vmem:[%s143 + $0x50] sm:$0xff] %v747
      %764 = vst [vmem:[%s143 + $0x58] sm:$0xff] %v748
      %765 = vst [vmem:[%s143 + $0x60] sm:$0xff] %v749
      %766 = vst [vmem:[%s143 + $0x68] sm:$0xff] %v750
      %767 = vst [vmem:[%s143 + $0x70] sm:$0xff] %v751
      %768 = vst [vmem:[%s143 + $0x78] sm:$0xff] %v752
      %p769 = scmp.lt.s32.totalorder %s13, 1
      %s770 = scalar_select %p769, %s13, 1
      %s771 = smul.addr %s770, 32
      %s772 = smul.addr %s771, 4
      %s773 = scalar_lea.vmem %s2, %s772
      // Predicated region
      $region29: #{generator_forward.18} parent=27 // pred_check
        %p774 = pneg %p78
      $region30: #{generator_forward.18} parent=27 // pred_check_branch
        %776 = sbr.rel (%p774) target = $region32
      $region31: #{generator_forward.18} parent=27 // pred_region
        _
      $region32: #{generator_forward.18} parent=27 // pred_fallthru
        _
    $region28: #{generator_forward.18} parent=5 // pred_fallthru
      _
    %p777 = scmp.le.s32.totalorder 2, %s8
    // Predicated region
    $region33: #{generator_forward.18} parent=5 // pred_check
      %p778 = pneg %p777
    $region34: #{generator_forward.18} parent=5 // pred_check_branch
      %780 = sbr.rel (%p778) target = $region36
    $region35: #{generator_forward.18} parent=5 // pred_region
      %s781 = ssub.s32 %s8, 2
      // Predicated region
      $region37: #{generator_forward.18} parent=35 // pred_check
        %p782 = pneg %p84
      $region38: #{generator_forward.18} parent=35 // pred_check_branch
        %784 = sbr.rel (%p782) target = $region40
      $region39: #{generator_forward.18} parent=35 // pred_region
        %p785 = scmp.lt.s32.totalorder %s14, 1
        %s786 = scalar_select %p785, %s14, 1
        %s787 = smul.addr %s786, 32
        %s788 = smul.addr %s787, 4
        %s789 = scalar_lea.vmem %s2, %s788
      $region40: #{generator_forward.18} parent=35 // pred_fallthru
        _
    $region36: #{generator_forward.18} parent=5 // pred_fallthru
      _
  $region6: #{generator_forward.18} parent=0 // loop_footer
    %s12 = sadd.s32 1, %s8
  $region7: #{generator_forward.18} parent=0 // loop_footer_branch
    %7 = sbr.rel target = $region3
  $region8: #{generator_forward.18} parent=0 // loop_exit
    _

// kernel: generator_forward.19
$region0: #{generator_forward.19}
  #allocation0 [shape = 'u32[]', space=smem, size = 0x4, offset = 0x4, fixed_abs, tag = 'smem constant byte address 0x4 - core index']
  #allocation1 [shape = 'u32[72,128]{1,0:T(1,128)}', space=vmem, size = 0x9000, scoped, tag = 'internal scratch']
  %s0 = inlined_call_operand.vmem [shape: bf16[2,256,512], index: 0, kind: input, shape index: {}]
  %s1 = inlined_call_operand.vmem [shape: bf16[512,128], index: 1, kind: input, shape index: {}]
  %s2 = inlined_call_operand.vmem [shape: f32[1,128], index: 2, kind: input, shape index: {}]
  %s3 = inlined_call_operand.vmem [shape: f32[2,8,256], index: 3, kind: output, shape index: {}]
  %s4 = sld [smem:[#allocation0]]
  $region45: #{generator_forward.19} parent=0
    _
  %s6 = ssub.s32 1, %s4
  %s7 = scalar_select 0, %s6, %s4
  loop: start=0, step=1, limit=4
  $region2: #{generator_forward.19} parent=0 // loop_pre_header
    _
  $region3: #{generator_forward.19} parent=0 // loop_header
    %s9 = sphi 0, %s13
    %p10 = scmp.ge.s32.totalorder %s9, 4
    %s19 = sphi 0, %s21
    %s22 = sphi 0, %s19
    %s23 = sphi 0, %s22
    %s39 = sphi 0, %s23
    %s43 = sphi 0, %s43
    %s45 = sphi 0, %s43
    %s46 = sphi 0, %s45
    %s60 = sphi 0, %s46
    %s64 = sphi 0, %s64
    %s66 = sphi 0, %s64
    %s67 = sphi 0, %s66
    %s81 = sphi 0, %s67
    %s87 = sphi 0, %s89
    %s90 = sphi 0, %s87
    %s91 = sphi 0, %s90
    %s107 = sphi 0, %s91
  $region4: #{generator_forward.19} parent=0 // loop_header_branch
    %12 = sbr.rel (%p10) target = $region8
  $region5: #{generator_forward.19} parent=0 // loop_body
    %s14 = ssub.s32 %s9, 1
    %s15 = ssub.s32 %s9, 2
    %s16 = sadd.s32 %s9, 1
    %s17 = ssub.s32 %s9, %s16
    %p18 = scmp.eq.s32.totalorder %s17, 0
    %s20 = sadd.s32 %s19, 1
    %s21 = scalar_select %p18, %s19, %s20
    %p24 = pneg %p18
    %p25 = scmp.eq.s32.totalorder %s9, 1
    %p26 = por %p24, %p25
    %p27 = scmp.ne.s32.totalorder %s19, %s22
    %p28 = scmp.eq.s32.totalorder %s9, 0
    %p29 = por %p27, %p28
    %p30 = scmp.ne.s32.totalorder %s19, %s22
    %p31 = scmp.eq.s32.totalorder %s14, 1
    %p32 = por %p30, %p31
    %p33 = scmp.ne.s32.totalorder %s22, %s23
    %p34 = scmp.eq.s32.totalorder %s14, 0
    %p35 = por %p33, %p34
    %p36 = scmp.ne.s32.totalorder %s22, %s23
    %p37 = scmp.eq.s32.totalorder %s15, 1
    %p38 = por %p36, %p37
    %p40 = scmp.ne.s32.totalorder %s23, %s39
    %p41 = scmp.eq.s32.totalorder %s15, 0
    %p42 = por %p40, %p41
    %s44 = sadd.s32 %s43, 1
    %p47 = scmp.eq.s32.totalorder %s9, 1
    %p48 = scmp.ne.s32.totalorder %s43, %s45
    %p49 = scmp.eq.s32.totalorder %s9, 0
    %p50 = por %p48, %p49
    %p51 = scmp.ne.s32.totalorder %s43, %s45
    %p52 = scmp.eq.s32.totalorder %s14, 1
    %p53 = por %p51, %p52
    %p54 = scmp.ne.s32.totalorder %s45, %s46
    %p55 = scmp.eq.s32.totalorder %s14, 0
    %p56 = por %p54, %p55
    %p57 = scmp.ne.s32.totalorder %s45, %s46
    %p58 = scmp.eq.s32.totalorder %s15, 1
    %p59 = por %p57, %p58
    %p61 = scmp.ne.s32.totalorder %s46, %s60
    %p62 = scmp.eq.s32.totalorder %s15, 0
    %p63 = por %p61, %p62
    %s65 = sadd.s32 %s64, 1
    %p68 = scmp.eq.s32.totalorder %s9, 1
    %p69 = scmp.ne.s32.totalorder %s64, %s66
    %p70 = scmp.eq.s32.totalorder %s9, 0
    %p71 = por %p69, %p70
    %p72 = scmp.ne.s32.totalorder %s64, %s66
    %p73 = scmp.eq.s32.totalorder %s14, 1
    %p74 = por %p72, %p73
    %p75 = scmp.ne.s32.totalorder %s66, %s67
    %p76 = scmp.eq.s32.totalorder %s14, 0
    %p77 = por %p75, %p76
    %p78 = scmp.ne.s32.totalorder %s66, %s67
    %p79 = scmp.eq.s32.totalorder %s15, 1
    %p80 = por %p78, %p79
    %p82 = scmp.ne.s32.totalorder %s67, %s81
    %p83 = scmp.eq.s32.totalorder %s15, 0
    %p84 = por %p82, %p83
    %s85 = ssub.s32 %s9, %s16
    %p86 = scmp.eq.s32.totalorder %s85, 0
    %s88 = sadd.s32 %s87, 1
    %s89 = scalar_select %p86, %s87, %s88
    %p92 = pneg %p86
    %p93 = scmp.eq.s32.totalorder %s9, 1
    %p94 = por %p92, %p93
    %p95 = scmp.ne.s32.totalorder %s87, %s90
    %p96 = scmp.eq.s32.totalorder %s9, 0
    %p97 = por %p95, %p96
    %p98 = scmp.ne.s32.totalorder %s87, %s90
    %p99 = scmp.eq.s32.totalorder %s14, 1
    %p100 = por %p98, %p99
    %p101 = scmp.ne.s32.totalorder %s90, %s91
    %p102 = scmp.eq.s32.totalorder %s14, 0
    %p103 = por %p101, %p102
    %p104 = scmp.ne.s32.totalorder %s90, %s91
    %p105 = scmp.eq.s32.totalorder %s15, 1
    %p106 = por %p104, %p105
    %p108 = scmp.ne.s32.totalorder %s91, %s107
    %p109 = scmp.eq.s32.totalorder %s15, 0
    %p110 = por %p108, %p109
    %p111 = scmp.le.s32.totalorder 1, %s9
    %p112 = scmp.lt.s32.totalorder %s9, 3
    %p113 = pnand %p111, %p112
    %p114 = pneg %p113
    // Predicated region
    $region9: #{generator_forward.19} parent=5 // pred_check
      _
    $region10: #{generator_forward.19} parent=5 // pred_check_branch
      %116 = sbr.rel (%p113) target = $region12
    $region11: #{generator_forward.19} parent=5 // pred_region
      %s117 = ssub.s32 %s9, 1
      // Predicated region
      $region13: #{generator_forward.19} parent=11 // pred_check
        %p118 = pneg %p56
      $region14: #{generator_forward.19} parent=11 // pred_check_branch
        %120 = sbr.rel (%p118) target = $region16
      $region15: #{generator_forward.19} parent=11 // pred_region
        _
      $region16: #{generator_forward.19} parent=11 // pred_fallthru
        _
      // Predicated region
      $region17: #{generator_forward.19} parent=11 // pred_check
        %p121 = pneg %p77
      $region18: #{generator_forward.19} parent=11 // pred_check_branch
        %123 = sbr.rel (%p121) target = $region20
      $region19: #{generator_forward.19} parent=11 // pred_region
        _
      $region20: #{generator_forward.19} parent=11 // pred_fallthru
        _
    $region12: #{generator_forward.19} parent=5 // pred_fallthru
      _
    %p124 = scmp.lt.s32.totalorder %s9, 2
    // Predicated region
    $region21: #{generator_forward.19} parent=5 // pred_check
      %p125 = pneg %p124
    $region22: #{generator_forward.19} parent=5 // pred_check_branch
      %127 = sbr.rel (%p125) target = $region24
    $region23: #{generator_forward.19} parent=5 // pred_region
      // Predicated region
      $region25: #{generator_forward.19} parent=23 // pred_check
        %p128 = pneg %p29
      $region26: #{generator_forward.19} parent=23 // pred_check_branch
        %130 = sbr.rel (%p128) target = $region28
      $region27: #{generator_forward.19} parent=23 // pred_region
        %p131 = scmp.lt.s32.totalorder %s9, 1
        %s132 = scalar_select %p131, %s9, 1
        %s133 = smul.addr %s132, 128
        %s134 = smul.addr %s133, 4
        %s135 = scalar_lea.vmem %s0, %s134
      $region28: #{generator_forward.19} parent=23 // pred_fallthru
        _
    $region24: #{generator_forward.19} parent=5 // pred_fallthru
      _
    %p136 = scmp.le.s32.totalorder 1, %s9
    %p137 = scmp.lt.s32.totalorder %s9, 3
    %p138 = pnand %p136, %p137
    %p139 = pneg %p138
    // Predicated region
    $region29: #{generator_forward.19} parent=5 // pred_check
      _
    $region30: #{generator_forward.19} parent=5 // pred_check_branch
      %141 = sbr.rel (%p138) target = $region32
    $region31: #{generator_forward.19} parent=5 // pred_region
      %s142 = ssub.s32 %s9, 1
      %p143 = scmp.lt.s32.totalorder %s14, 1
      %s144 = scalar_select %p143, %s14, 1
      %s145 = smul.addr %s144, 128
      %s146 = smul.addr %s145, 4
      %s147 = scalar_lea.vmem %s0, %s146
      %p148 = pneg %p35
      %p149 = pneg %p32
      %p150 = pneg %p56
      %p151 = pneg %p53
      %p152 = pneg %p77
      %p153 = pneg %p74
      %p154 = pneg %p103
      %p155 = pneg %p100
      %p156 = scmp.lt.s32.totalorder %s14, 1
      %s157 = scalar_select %p156, %s14, 1
      %s158 = smul.addr %s157, 2
      %s159 = smul.addr %s158, 8
      %s160 = scalar_lea.vmem %s3, %s159
      %p161 = scmp.lt.s32.totalorder %s14, 1
      %s162 = scalar_select %p161, %s14, 1
      %s163 = smul.addr %s162, 128
      %s164 = smul.addr %s163, 4
      %s165 = scalar_lea.vmem %s0, %s164
      %p166 = scmp.lt.s32.totalorder %s14, 1
      %s167 = scalar_select %p166, %s14, 1
      %s168 = smul.addr %s167, 2
      %s169 = smul.addr %s168, 8
      %s170 = scalar_lea.vmem %s3, %s169
      %v171 = vld [vmem:[%s165] sm:$0xff]
      %v172 = vld [vmem:[%s165 + $0x8] sm:$0xff]
      %v173 = vld [vmem:[%s165 + $0x10] sm:$0xff]
      %v174 = vld [vmem:[%s165 + $0x18] sm:$0xff]
      %v175 = vld [vmem:[%s165 + $0x20] sm:$0xff]
      %v176 = vld [vmem:[%s165 + $0x28] sm:$0xff]
      %v177 = vld [vmem:[%s165 + $0x30] sm:$0xff]
      %v178 = vld [vmem:[%s165 + $0x38] sm:$0xff]
      %v179 = vld [vmem:[%s165 + $0x40] sm:$0xff]
      %v180 = vld [vmem:[%s165 + $0x48] sm:$0xff]
      %v181 = vld [vmem:[%s165 + $0x50] sm:$0xff]
      %v182 = vld [vmem:[%s165 + $0x58] sm:$0xff]
      %v183 = vld [vmem:[%s165 + $0x60] sm:$0xff]
      %v184 = vld [vmem:[%s165 + $0x68] sm:$0xff]
      %v185 = vld [vmem:[%s165 + $0x70] sm:$0xff]
      %v186 = vld [vmem:[%s165 + $0x78] sm:$0xff]
      %v187 = vld [vmem:[%s165 + $0x80] sm:$0xff]
      %v188 = vld [vmem:[%s165 + $0x88] sm:$0xff]
      %v189 = vld [vmem:[%s165 + $0x90] sm:$0xff]
      %v190 = vld [vmem:[%s165 + $0x98] sm:$0xff]
      %v191 = vld [vmem:[%s165 + $0xa0] sm:$0xff]
      %v192 = vld [vmem:[%s165 + $0xa8] sm:$0xff]
      %v193 = vld [vmem:[%s165 + $0xb0] sm:$0xff]
      %v194 = vld [vmem:[%s165 + $0xb8] sm:$0xff]
      %v195 = vld [vmem:[%s165 + $0xc0] sm:$0xff]
      %v196 = vld [vmem:[%s165 + $0xc8] sm:$0xff]
      %v197 = vld [vmem:[%s165 + $0xd0] sm:$0xff]
      %v198 = vld [vmem:[%s165 + $0xd8] sm:$0xff]
      %v199 = vld [vmem:[%s165 + $0xe0] sm:$0xff]
      %v200 = vld [vmem:[%s165 + $0xe8] sm:$0xff]
      %v201 = vld [vmem:[%s165 + $0xf0] sm:$0xff]
      %v202 = vld [vmem:[%s165 + $0xf8] sm:$0xff]
      %v203 = vld [vmem:[%s165 + $0x100] sm:$0xff]
      %v204 = vld [vmem:[%s165 + $0x108] sm:$0xff]
      %v205 = vld [vmem:[%s165 + $0x110] sm:$0xff]
      %v206 = vld [vmem:[%s165 + $0x118] sm:$0xff]
      %v207 = vld [vmem:[%s165 + $0x120] sm:$0xff]
      %v208 = vld [vmem:[%s165 + $0x128] sm:$0xff]
      %v209 = vld [vmem:[%s165 + $0x130] sm:$0xff]
      %v210 = vld [vmem:[%s165 + $0x138] sm:$0xff]
      %v211 = vld [vmem:[%s165 + $0x140] sm:$0xff]
      %v212 = vld [vmem:[%s165 + $0x148] sm:$0xff]
      %v213 = vld [vmem:[%s165 + $0x150] sm:$0xff]
      %v214 = vld [vmem:[%s165 + $0x158] sm:$0xff]
      %v215 = vld [vmem:[%s165 + $0x160] sm:$0xff]
      %v216 = vld [vmem:[%s165 + $0x168] sm:$0xff]
      %v217 = vld [vmem:[%s165 + $0x170] sm:$0xff]
      %v218 = vld [vmem:[%s165 + $0x178] sm:$0xff]
      %v219 = vld [vmem:[%s165 + $0x180] sm:$0xff]
      %v220 = vld [vmem:[%s165 + $0x188] sm:$0xff]
      %v221 = vld [vmem:[%s165 + $0x190] sm:$0xff]
      %v222 = vld [vmem:[%s165 + $0x198] sm:$0xff]
      %v223 = vld [vmem:[%s165 + $0x1a0] sm:$0xff]
      %v224 = vld [vmem:[%s165 + $0x1a8] sm:$0xff]
      %v225 = vld [vmem:[%s165 + $0x1b0] sm:$0xff]
      %v226 = vld [vmem:[%s165 + $0x1b8] sm:$0xff]
      %v227 = vld [vmem:[%s165 + $0x1c0] sm:$0xff]
      %v228 = vld [vmem:[%s165 + $0x1c8] sm:$0xff]
      %v229 = vld [vmem:[%s165 + $0x1d0] sm:$0xff]
      %v230 = vld [vmem:[%s165 + $0x1d8] sm:$0xff]
      %v231 = vld [vmem:[%s165 + $0x1e0] sm:$0xff]
      %v232 = vld [vmem:[%s165 + $0x1e8] sm:$0xff]
      %v233 = vld [vmem:[%s165 + $0x1f0] sm:$0xff]
      %v234 = vld [vmem:[%s165 + $0x1f8] sm:$0xff]
      %v235 = vld [vmem:[%s1] sm:$0xf]
      %v236 = vld [vmem:[%s1 + $0x4] sm:$0xf]
      %v237 = vld [vmem:[%s1 + $0x8] sm:$0xf]
      %v238 = vld [vmem:[%s1 + $0xc] sm:$0xf]
      %v239 = vld [vmem:[%s1 + $0x10] sm:$0xf]
      %v240 = vld [vmem:[%s1 + $0x14] sm:$0xf]
      %v241 = vld [vmem:[%s1 + $0x18] sm:$0xf]
      %v242 = vld [vmem:[%s1 + $0x1c] sm:$0xf]
      %v243 = vld [vmem:[%s1 + $0x20] sm:$0xf]
      %v244 = vld [vmem:[%s1 + $0x24] sm:$0xf]
      %v245 = vld [vmem:[%s1 + $0x28] sm:$0xf]
      %v246 = vld [vmem:[%s1 + $0x2c] sm:$0xf]
      %v247 = vld [vmem:[%s1 + $0x30] sm:$0xf]
      %v248 = vld [vmem:[%s1 + $0x34] sm:$0xf]
      %v249 = vld [vmem:[%s1 + $0x38] sm:$0xf]
      %v250 = vld [vmem:[%s1 + $0x3c] sm:$0xf]
      %v251 = vld [vmem:[%s1 + $0x40] sm:$0xf]
      %v252 = vld [vmem:[%s1 + $0x44] sm:$0xf]
      %v253 = vld [vmem:[%s1 + $0x48] sm:$0xf]
      %v254 = vld [vmem:[%s1 + $0x4c] sm:$0xf]
      %v255 = vld [vmem:[%s1 + $0x50] sm:$0xf]
      %v256 = vld [vmem:[%s1 + $0x54] sm:$0xf]
      %v257 = vld [vmem:[%s1 + $0x58] sm:$0xf]
      %v258 = vld [vmem:[%s1 + $0x5c] sm:$0xf]
      %v259 = vld [vmem:[%s1 + $0x60] sm:$0xf]
      %v260 = vld [vmem:[%s1 + $0x64] sm:$0xf]
      %v261 = vld [vmem:[%s1 + $0x68] sm:$0xf]
      %v262 = vld [vmem:[%s1 + $0x6c] sm:$0xf]
      %v263 = vld [vmem:[%s1 + $0x70] sm:$0xf]
      %v264 = vld [vmem:[%s1 + $0x74] sm:$0xf]
      %v265 = vld [vmem:[%s1 + $0x78] sm:$0xf]
      %v266 = vld [vmem:[%s1 + $0x7c] sm:$0xf]
      %v267 = vld [vmem:[%s1 + $0x80] sm:$0xf]
      %v268 = vld [vmem:[%s1 + $0x84] sm:$0xf]
      %v269 = vld [vmem:[%s1 + $0x88] sm:$0xf]
      %v270 = vld [vmem:[%s1 + $0x8c] sm:$0xf]
      %v271 = vld [vmem:[%s1 + $0x90] sm:$0xf]
      %v272 = vld [vmem:[%s1 + $0x94] sm:$0xf]
      %v273 = vld [vmem:[%s1 + $0x98] sm:$0xf]
      %v274 = vld [vmem:[%s1 + $0x9c] sm:$0xf]
      %v275 = vld [vmem:[%s1 + $0xa0] sm:$0xf]
      %v276 = vld [vmem:[%s1 + $0xa4] sm:$0xf]
      %v277 = vld [vmem:[%s1 + $0xa8] sm:$0xf]
      %v278 = vld [vmem:[%s1 + $0xac] sm:$0xf]
      %v279 = vld [vmem:[%s1 + $0xb0] sm:$0xf]
      %v280 = vld [vmem:[%s1 + $0xb4] sm:$0xf]
      %v281 = vld [vmem:[%s1 + $0xb8] sm:$0xf]
      %v282 = vld [vmem:[%s1 + $0xbc] sm:$0xf]
      %v283 = vld [vmem:[%s1 + $0xc0] sm:$0xf]
      %v284 = vld [vmem:[%s1 + $0xc4] sm:$0xf]
      %v285 = vld [vmem:[%s1 + $0xc8] sm:$0xf]
      %v286 = vld [vmem:[%s1 + $0xcc] sm:$0xf]
      %v287 = vld [vmem:[%s1 + $0xd0] sm:$0xf]
      %v288 = vld [vmem:[%s1 + $0xd4] sm:$0xf]
      %v289 = vld [vmem:[%s1 + $0xd8] sm:$0xf]
      %v290 = vld [vmem:[%s1 + $0xdc] sm:$0xf]
      %v291 = vld [vmem:[%s1 + $0xe0] sm:$0xf]
      %v292 = vld [vmem:[%s1 + $0xe4] sm:$0xf]
      %v293 = vld [vmem:[%s1 + $0xe8] sm:$0xf]
      %v294 = vld [vmem:[%s1 + $0xec] sm:$0xf]
      %v295 = vld [vmem:[%s1 + $0xf0] sm:$0xf]
      %v296 = vld [vmem:[%s1 + $0xf4] sm:$0xf]
      %v297 = vld [vmem:[%s1 + $0xf8] sm:$0xf]
      %v298 = vld [vmem:[%s1 + $0xfc] sm:$0xf]
      %v299 = vld [vmem:[%s2] sm:$0x1]
      %v301 = vperm.slane %v299, 0
      %v367 = vunpack.c.l.b16 %v171
      %v368 = vunpack.c.h.b16 %v171
      %v369 = vunpack.c.l.b16 %v172
      %v370 = vunpack.c.h.b16 %v172
      %v371 = vunpack.c.l.b16 %v173
      %v372 = vunpack.c.h.b16 %v173
      %v373 = vunpack.c.l.b16 %v174
      %v374 = vunpack.c.h.b16 %v174
      %v375 = vunpack.c.l.b16 %v175
      %v376 = vunpack.c.h.b16 %v175
      %v377 = vunpack.c.l.b16 %v176
      %v378 = vunpack.c.h.b16 %v176
      %v379 = vunpack.c.l.b16 %v177
      %v380 = vunpack.c.h.b16 %v177
      %v381 = vunpack.c.l.b16 %v178
      %v382 = vunpack.c.h.b16 %v178
      %v383 = vunpack.c.l.b16 %v179
      %v384 = vunpack.c.h.b16 %v179
      %v385 = vunpack.c.l.b16 %v180
      %v386 = vunpack.c.h.b16 %v180
      %v387 = vunpack.c.l.b16 %v181
      %v388 = vunpack.c.h.b16 %v181
      %v389 = vunpack.c.l.b16 %v182
      %v390 = vunpack.c.h.b16 %v182
      %v391 = vunpack.c.l.b16 %v183
      %v392 = vunpack.c.h.b16 %v183
      %v393 = vunpack.c.l.b16 %v184
      %v394 = vunpack.c.h.b16 %v184
      %v395 = vunpack.c.l.b16 %v185
      %v396 = vunpack.c.h.b16 %v185
      %v397 = vunpack.c.l.b16 %v186
      %v398 = vunpack.c.h.b16 %v186
      %v399 = vunpack.c.l.b16 %v187
      %v400 = vunpack.c.h.b16 %v187
      %v401 = vunpack.c.l.b16 %v188
      %v402 = vunpack.c.h.b16 %v188
      %v403 = vunpack.c.l.b16 %v189
      %v404 = vunpack.c.h.b16 %v189
      %v405 = vunpack.c.l.b16 %v190
      %v406 = vunpack.c.h.b16 %v190
      %v407 = vunpack.c.l.b16 %v191
      %v408 = vunpack.c.h.b16 %v191
      %v409 = vunpack.c.l.b16 %v192
      %v410 = vunpack.c.h.b16 %v192
      %v411 = vunpack.c.l.b16 %v193
      %v412 = vunpack.c.h.b16 %v193
      %v413 = vunpack.c.l.b16 %v194
      %v414 = vunpack.c.h.b16 %v194
      %v415 = vunpack.c.l.b16 %v195
      %v416 = vunpack.c.h.b16 %v195
      %v417 = vunpack.c.l.b16 %v196
      %v418 = vunpack.c.h.b16 %v196
      %v419 = vunpack.c.l.b16 %v197
      %v420 = vunpack.c.h.b16 %v197
      %v421 = vunpack.c.l.b16 %v198
      %v422 = vunpack.c.h.b16 %v198
      %v423 = vunpack.c.l.b16 %v199
      %v424 = vunpack.c.h.b16 %v199
      %v425 = vunpack.c.l.b16 %v200
      %v426 = vunpack.c.h.b16 %v200
      %v427 = vunpack.c.l.b16 %v201
      %v428 = vunpack.c.h.b16 %v201
      %v429 = vunpack.c.l.b16 %v202
      %v430 = vunpack.c.h.b16 %v202
      %v431 = vunpack.c.l.b16 %v203
      %v432 = vunpack.c.h.b16 %v203
      %v433 = vunpack.c.l.b16 %v204
      %v434 = vunpack.c.h.b16 %v204
      %v435 = vunpack.c.l.b16 %v205
      %v436 = vunpack.c.h.b16 %v205
      %v437 = vunpack.c.l.b16 %v206
      %v438 = vunpack.c.h.b16 %v206
      %v439 = vunpack.c.l.b16 %v207
      %v440 = vunpack.c.h.b16 %v207
      %v441 = vunpack.c.l.b16 %v208
      %v442 = vunpack.c.h.b16 %v208
      %v443 = vunpack.c.l.b16 %v209
      %v444 = vunpack.c.h.b16 %v209
      %v445 = vunpack.c.l.b16 %v210
      %v446 = vunpack.c.h.b16 %v210
      %v447 = vunpack.c.l.b16 %v211
      %v448 = vunpack.c.h.b16 %v211
      %v449 = vunpack.c.l.b16 %v212
      %v450 = vunpack.c.h.b16 %v212
      %v451 = vunpack.c.l.b16 %v213
      %v452 = vunpack.c.h.b16 %v213
      %v453 = vunpack.c.l.b16 %v214
      %v454 = vunpack.c.h.b16 %v214
      %v455 = vunpack.c.l.b16 %v215
      %v456 = vunpack.c.h.b16 %v215
      %v457 = vunpack.c.l.b16 %v216
      %v458 = vunpack.c.h.b16 %v216
      %v459 = vunpack.c.l.b16 %v217
      %v460 = vunpack.c.h.b16 %v217
      %v461 = vunpack.c.l.b16 %v218
      %v462 = vunpack.c.h.b16 %v218
      %v463 = vunpack.c.l.b16 %v219
      %v464 = vunpack.c.h.b16 %v219
      %v465 = vunpack.c.l.b16 %v220
      %v466 = vunpack.c.h.b16 %v220
      %v467 = vunpack.c.l.b16 %v221
      %v468 = vunpack.c.h.b16 %v221
      %v469 = vunpack.c.l.b16 %v222
      %v470 = vunpack.c.h.b16 %v222
      %v471 = vunpack.c.l.b16 %v223
      %v472 = vunpack.c.h.b16 %v223
      %v473 = vunpack.c.l.b16 %v224
      %v474 = vunpack.c.h.b16 %v224
      %v475 = vunpack.c.l.b16 %v225
      %v476 = vunpack.c.h.b16 %v225
      %v477 = vunpack.c.l.b16 %v226
      %v478 = vunpack.c.h.b16 %v226
      %v479 = vunpack.c.l.b16 %v227
      %v480 = vunpack.c.h.b16 %v227
      %v481 = vunpack.c.l.b16 %v228
      %v482 = vunpack.c.h.b16 %v228
      %v483 = vunpack.c.l.b16 %v229
      %v484 = vunpack.c.h.b16 %v229
      %v485 = vunpack.c.l.b16 %v230
      %v486 = vunpack.c.h.b16 %v230
      %v487 = vunpack.c.l.b16 %v231
      %v488 = vunpack.c.h.b16 %v231
      %v489 = vunpack.c.l.b16 %v232
      %v490 = vunpack.c.h.b16 %v232
      %v491 = vunpack.c.l.b16 %v233
      %v492 = vunpack.c.h.b16 %v233
      %v493 = vunpack.c.l.b16 %v234
      %v494 = vunpack.c.h.b16 %v234
      %v495 = vpack.c.b16 %v371, %v367
      %v496 = vpack.c.b16 %v372, %v368
      %v497 = vpack.c.b16 %v373, %v369
      %v498 = vpack.c.b16 %v374, %v370
      %v499 = vpack.c.b16 %v379, %v375
      %v500 = vpack.c.b16 %v380, %v376
      %v501 = vpack.c.b16 %v381, %v377
      %v502 = vpack.c.b16 %v382, %v378
      %v503 = vpack.c.b16 %v387, %v383
      %v504 = vpack.c.b16 %v388, %v384
      %v505 = vpack.c.b16 %v389, %v385
      %v506 = vpack.c.b16 %v390, %v386
      %v507 = vpack.c.b16 %v395, %v391
      %v508 = vpack.c.b16 %v396, %v392
      %v509 = vpack.c.b16 %v397, %v393
      %v510 = vpack.c.b16 %v398, %v394
      %v511 = vpack.c.b16 %v403, %v399
      %v512 = vpack.c.b16 %v404, %v400
      %v513 = vpack.c.b16 %v405, %v401
      %v514 = vpack.c.b16 %v406, %v402
      %v515 = vpack.c.b16 %v411, %v407
      %v516 = vpack.c.b16 %v412, %v408
      %v517 = vpack.c.b16 %v413, %v409
      %v518 = vpack.c.b16 %v414, %v410
      %v519 = vpack.c.b16 %v419, %v415
      %v520 = vpack.c.b16 %v420, %v416
      %v521 = vpack.c.b16 %v421, %v417
      %v522 = vpack.c.b16 %v422, %v418
      %v523 = vpack.c.b16 %v427, %v423
      %v524 = vpack.c.b16 %v428, %v424
      %v525 = vpack.c.b16 %v429, %v425
      %v526 = vpack.c.b16 %v430, %v426
      %v527 = vpack.c.b16 %v435, %v431
      %v528 = vpack.c.b16 %v436, %v432
      %v529 = vpack.c.b16 %v437, %v433
      %v530 = vpack.c.b16 %v438, %v434
      %v531 = vpack.c.b16 %v443, %v439
      %v532 = vpack.c.b16 %v444, %v440
      %v533 = vpack.c.b16 %v445, %v441
      %v534 = vpack.c.b16 %v446, %v442
      %v535 = vpack.c.b16 %v451, %v447
      %v536 = vpack.c.b16 %v452, %v448
      %v537 = vpack.c.b16 %v453, %v449
      %v538 = vpack.c.b16 %v454, %v450
      %v539 = vpack.c.b16 %v459, %v455
      %v540 = vpack.c.b16 %v460, %v456
      %v541 = vpack.c.b16 %v461, %v457
      %v542 = vpack.c.b16 %v462, %v458
      %v543 = vpack.c.b16 %v467, %v463
      %v544 = vpack.c.b16 %v468, %v464
      %v545 = vpack.c.b16 %v469, %v465
      %v546 = vpack.c.b16 %v470, %v466
      %v547 = vpack.c.b16 %v475, %v471
      %v548 = vpack.c.b16 %v476, %v472
      %v549 = vpack.c.b16 %v477, %v473
      %v550 = vpack.c.b16 %v478, %v474
      %v551 = vpack.c.b16 %v483, %v479
      %v552 = vpack.c.b16 %v484, %v480
      %v553 = vpack.c.b16 %v485, %v481
      %v554 = vpack.c.b16 %v486, %v482
      %v555 = vpack.c.b16 %v491, %v487
      %v556 = vpack.c.b16 %v492, %v488
      %v557 = vpack.c.b16 %v493, %v489
      %v558 = vpack.c.b16 %v494, %v490
      %v687 = vunpack.c.l.b16 %v235
      %v688 = vunpack.c.l.b16 %v236
      %v689 = vunpack.c.l.b16 %v237
      %v690 = vunpack.c.l.b16 %v238
      %v691 = vunpack.c.l.b16 %v239
      %v692 = vunpack.c.l.b16 %v240
      %v693 = vunpack.c.l.b16 %v241
      %v694 = vunpack.c.l.b16 %v242
      %v695 = vunpack.c.l.b16 %v243
      %v696 = vunpack.c.l.b16 %v244
      %v697 = vunpack.c.l.b16 %v245
      %v698 = vunpack.c.l.b16 %v246
      %v699 = vunpack.c.l.b16 %v247
      %v700 = vunpack.c.l.b16 %v248
      %v701 = vunpack.c.l.b16 %v249
      %v702 = vunpack.c.l.b16 %v250
      %v703 = vunpack.c.l.b16 %v251
      %v704 = vunpack.c.l.b16 %v252
      %v705 = vunpack.c.l.b16 %v253
      %v706 = vunpack.c.l.b16 %v254
      %v707 = vunpack.c.l.b16 %v255
      %v708 = vunpack.c.l.b16 %v256
      %v709 = vunpack.c.l.b16 %v257
      %v710 = vunpack.c.l.b16 %v258
      %v711 = vunpack.c.l.b16 %v259
      %v712 = vunpack.c.l.b16 %v260
      %v713 = vunpack.c.l.b16 %v261
      %v714 = vunpack.c.l.b16 %v262
      %v715 = vunpack.c.l.b16 %v263
      %v716 = vunpack.c.l.b16 %v264
      %v717 = vunpack.c.l.b16 %v265
      %v718 = vunpack.c.l.b16 %v266
      %v719 = vunpack.c.l.b16 %v267
      %v720 = vunpack.c.l.b16 %v268
      %v721 = vunpack.c.l.b16 %v269
      %v722 = vunpack.c.l.b16 %v270
      %v723 = vunpack.c.l.b16 %v271
      %v724 = vunpack.c.l.b16 %v272
      %v725 = vunpack.c.l.b16 %v273
      %v726 = vunpack.c.l.b16 %v274
      %v727 = vunpack.c.l.b16 %v275
      %v728 = vunpack.c.l.b16 %v276
      %v729 = vunpack.c.l.b16 %v277
      %v730 = vunpack.c.l.b16 %v278
      %v731 = vunpack.c.l.b16 %v279
      %v732 = vunpack.c.l.b16 %v280
      %v733 = vunpack.c.l.b16 %v281
      %v734 = vunpack.c.l.b16 %v282
      %v735 = vunpack.c.l.b16 %v283
      %v736 = vunpack.c.l.b16 %v284
      %v737 = vunpack.c.l.b16 %v285
      %v738 = vunpack.c.l.b16 %v286
      %v739 = vunpack.c.l.b16 %v287
      %v740 = vunpack.c.l.b16 %v288
      %v741 = vunpack.c.l.b16 %v289
      %v742 = vunpack.c.l.b16 %v290
      %v743 = vunpack.c.l.b16 %v291
      %v744 = vunpack.c.l.b16 %v292
      %v745 = vunpack.c.l.b16 %v293
      %v746 = vunpack.c.l.b16 %v294
      %v747 = vunpack.c.l.b16 %v295
      %v748 = vunpack.c.l.b16 %v296
      %v749 = vunpack.c.l.b16 %v297
      %v750 = vunpack.c.l.b16 %v298
      %v751 = vpack.c.b16 %v688, %v687
      %v752 = vpack.c.b16 %v690, %v689
      %v753 = vpack.c.b16 %v692, %v691
      %v754 = vpack.c.b16 %v694, %v693
      %v755 = vpack.c.b16 %v696, %v695
      %v756 = vpack.c.b16 %v698, %v697
      %v757 = vpack.c.b16 %v700, %v699
      %v758 = vpack.c.b16 %v702, %v701
      %v759 = vpack.c.b16 %v704, %v703
      %v760 = vpack.c.b16 %v706, %v705
      %v761 = vpack.c.b16 %v708, %v707
      %v762 = vpack.c.b16 %v710, %v709
      %v763 = vpack.c.b16 %v712, %v711
      %v764 = vpack.c.b16 %v714, %v713
      %v765 = vpack.c.b16 %v716, %v715
      %v766 = vpack.c.b16 %v718, %v717
      %v767 = vpack.c.b16 %v720, %v719
      %v768 = vpack.c.b16 %v722, %v721
      %v769 = vpack.c.b16 %v724, %v723
      %v770 = vpack.c.b16 %v726, %v725
      %v771 = vpack.c.b16 %v728, %v727
      %v772 = vpack.c.b16 %v730, %v729
      %v773 = vpack.c.b16 %v732, %v731
      %v774 = vpack.c.b16 %v734, %v733
      %v775 = vpack.c.b16 %v736, %v735
      %v776 = vpack.c.b16 %v738, %v737
      %v777 = vpack.c.b16 %v740, %v739
      %v778 = vpack.c.b16 %v742, %v741
      %v779 = vpack.c.b16 %v744, %v743
      %v780 = vpack.c.b16 %v746, %v745
      %v781 = vpack.c.b16 %v748, %v747
      %v782 = vpack.c.b16 %v750, %v749
      %815 = vmatpush.bf16.msra.mxu0 %v758
      %816 = vmatpush.bf16.msra.mxu0 %v757
      %817 = vmatpush.bf16.msra.mxu0 %v756
      %818 = vmatpush.bf16.msra.mxu0 %v755
      %819 = vmatpush.bf16.msra.mxu0 %v754
      %820 = vmatpush.bf16.msra.mxu0 %v753
      %821 = vmatpush.bf16.msra.mxu0 %v752
      %822 = vmatpush.bf16.msra.mxu0 %v751
      %823 = vmatmul.bf16.gmra.mxu0 %v495
      %v824 = vpop.f32.mrf.mxu0
      %v825 = vadd.f32 %v301, %v824
      %v826 = vpop.f32.mrf.mxu0
      %v827 = vadd.f32 %v301, %v826
      %828 = vmatmul.bf16.gmra.mxu0 %v499
      %v829 = vpop.f32.mrf.mxu0
      %v830 = vadd.f32 %v301, %v829
      %v831 = vpop.f32.mrf.mxu0
      %v832 = vadd.f32 %v301, %v831
      %833 = vmatmul.bf16.gmra.mxu0 %v503
      %v834 = vpop.f32.mrf.mxu0
      %v835 = vadd.f32 %v301, %v834
      %v836 = vpop.f32.mrf.mxu0
      %v837 = vadd.f32 %v301, %v836
      %838 = vmatmul.bf16.gmra.mxu0 %v507
      %v839 = vpop.f32.mrf.mxu0
      %v840 = vadd.f32 %v301, %v839
      %v841 = vpop.f32.mrf.mxu0
      %v842 = vadd.f32 %v301, %v841
      %843 = vmatmul.bf16.gmra.mxu0 %v511
      %v844 = vpop.f32.mrf.mxu0
      %v845 = vadd.f32 %v301, %v844
      %v846 = vpop.f32.mrf.mxu0
      %v847 = vadd.f32 %v301, %v846
      %848 = vmatmul.bf16.gmra.mxu0 %v515
      %v849 = vpop.f32.mrf.mxu0
      %v850 = vadd.f32 %v301, %v849
      %v851 = vpop.f32.mrf.mxu0
      %v852 = vadd.f32 %v301, %v851
      %853 = vmatmul.bf16.gmra.mxu0 %v519
      %v854 = vpop.f32.mrf.mxu0
      %v855 = vadd.f32 %v301, %v854
      %v856 = vpop.f32.mrf.mxu0
      %v857 = vadd.f32 %v301, %v856
      %858 = vmatmul.bf16.gmra.mxu0 %v523
      %v859 = vpop.f32.mrf.mxu0
      %v860 = vadd.f32 %v301, %v859
      %v861 = vpop.f32.mrf.mxu0
      %v862 = vadd.f32 %v301, %v861
      %863 = vmatmul.bf16.gmra.mxu0 %v527
      %v864 = vpop.f32.mrf.mxu0
      %v865 = vadd.f32 %v301, %v864
      %v866 = vpop.f32.mrf.mxu0
      %v867 = vadd.f32 %v301, %v866
      %868 = vmatmul.bf16.gmra.mxu0 %v531
      %v869 = vpop.f32.mrf.mxu0
      %v870 = vadd.f32 %v301, %v869
      %v871 = vpop.f32.mrf.mxu0
      %v872 = vadd.f32 %v301, %v871
      %873 = vmatmul.bf16.gmra.mxu0 %v535
      %v874 = vpop.f32.mrf.mxu0
      %v875 = vadd.f32 %v301, %v874
      %v876 = vpop.f32.mrf.mxu0
      %v877 = vadd.f32 %v301, %v876
      %878 = vmatmul.bf16.gmra.mxu0 %v539
      %v879 = vpop.f32.mrf.mxu0
      %v880 = vadd.f32 %v301, %v879
      %v881 = vpop.f32.mrf.mxu0
      %v882 = vadd.f32 %v301, %v881
      %883 = vmatmul.bf16.gmra.mxu0 %v543
      %v884 = vpop.f32.mrf.mxu0
      %v885 = vadd.f32 %v301, %v884
      %v886 = vpop.f32.mrf.mxu0
      %v887 = vadd.f32 %v301, %v886
      %888 = vmatmul.bf16.gmra.mxu0 %v547
      %v889 = vpop.f32.mrf.mxu0
      %v890 = vadd.f32 %v301, %v889
      %v891 = vpop.f32.mrf.mxu0
      %v892 = vadd.f32 %v301, %v891
      %893 = vmatmul.bf16.gmra.mxu0 %v551
      %v894 = vpop.f32.mrf.mxu0
      %v895 = vadd.f32 %v301, %v894
      %v896 = vpop.f32.mrf.mxu0
      %v897 = vadd.f32 %v301, %v896
      %898 = vmatmul.bf16.gmra.mxu0 %v555
      %v899 = vpop.f32.mrf.mxu0
      %v900 = vadd.f32 %v301, %v899
      %v901 = vpop.f32.mrf.mxu0
      %v902 = vadd.f32 %v301, %v901
      %903 = vdwg.mxu0
      %904 = vmatpush.bf16.msra.mxu0 %v766
      %905 = vmatpush.bf16.msra.mxu0 %v765
      %906 = vmatpush.bf16.msra.mxu0 %v764
      %907 = vmatpush.bf16.msra.mxu0 %v763
      %908 = vmatpush.bf16.msra.mxu0 %v762
      %909 = vmatpush.bf16.msra.mxu0 %v761
      %910 = vmatpush.bf16.msra.mxu0 %v760
      %911 = vmatpush.bf16.msra.mxu0 %v759
      %912 = vmatmul.bf16.gmra.mxu0 %v496
      %v913 = vpop.f32.mrf.mxu0
      %v914 = vadd.f32 %v825, %v913
      %v915 = vpop.f32.mrf.mxu0
      %v916 = vadd.f32 %v827, %v915
      %917 = vmatmul.bf16.gmra.mxu0 %v500
      %v918 = vpop.f32.mrf.mxu0
      %v919 = vadd.f32 %v830, %v918
      %v920 = vpop.f32.mrf.mxu0
      %v921 = vadd.f32 %v832, %v920
      %922 = vmatmul.bf16.gmra.mxu0 %v504
      %v923 = vpop.f32.mrf.mxu0
      %v924 = vadd.f32 %v835, %v923
      %v925 = vpop.f32.mrf.mxu0
      %v926 = vadd.f32 %v837, %v925
      %927 = vmatmul.bf16.gmra.mxu0 %v508
      %v928 = vpop.f32.mrf.mxu0
      %v929 = vadd.f32 %v840, %v928
      %v930 = vpop.f32.mrf.mxu0
      %v931 = vadd.f32 %v842, %v930
      %932 = vmatmul.bf16.gmra.mxu0 %v512
      %v933 = vpop.f32.mrf.mxu0
      %v934 = vadd.f32 %v845, %v933
      %v935 = vpop.f32.mrf.mxu0
      %v936 = vadd.f32 %v847, %v935
      %937 = vmatmul.bf16.gmra.mxu0 %v516
      %v938 = vpop.f32.mrf.mxu0
      %v939 = vadd.f32 %v850, %v938
      %v940 = vpop.f32.mrf.mxu0
      %v941 = vadd.f32 %v852, %v940
      %942 = vmatmul.bf16.gmra.mxu0 %v520
      %v943 = vpop.f32.mrf.mxu0
      %v944 = vadd.f32 %v855, %v943
      %v945 = vpop.f32.mrf.mxu0
      %v946 = vadd.f32 %v857, %v945
      %947 = vmatmul.bf16.gmra.mxu0 %v524
      %v948 = vpop.f32.mrf.mxu0
      %v949 = vadd.f32 %v860, %v948
      %v950 = vpop.f32.mrf.mxu0
      %v951 = vadd.f32 %v862, %v950
      %952 = vmatmul.bf16.gmra.mxu0 %v528
      %v953 = vpop.f32.mrf.mxu0
      %v954 = vadd.f32 %v865, %v953
      %v955 = vpop.f32.mrf.mxu0
      %v956 = vadd.f32 %v867, %v955
      %957 = vmatmul.bf16.gmra.mxu0 %v532
      %v958 = vpop.f32.mrf.mxu0
      %v959 = vadd.f32 %v870, %v958
      %v960 = vpop.f32.mrf.mxu0
      %v961 = vadd.f32 %v872, %v960
      %962 = vmatmul.bf16.gmra.mxu0 %v536
      %v963 = vpop.f32.mrf.mxu0
      %v964 = vadd.f32 %v875, %v963
      %v965 = vpop.f32.mrf.mxu0
      %v966 = vadd.f32 %v877, %v965
      %967 = vmatmul.bf16.gmra.mxu0 %v540
      %v968 = vpop.f32.mrf.mxu0
      %v969 = vadd.f32 %v880, %v968
      %v970 = vpop.f32.mrf.mxu0
      %v971 = vadd.f32 %v882, %v970
      %972 = vmatmul.bf16.gmra.mxu0 %v544
      %v973 = vpop.f32.mrf.mxu0
      %v974 = vadd.f32 %v885, %v973
      %v975 = vpop.f32.mrf.mxu0
      %v976 = vadd.f32 %v887, %v975
      %977 = vmatmul.bf16.gmra.mxu0 %v548
      %v978 = vpop.f32.mrf.mxu0
      %v979 = vadd.f32 %v890, %v978
      %v980 = vpop.f32.mrf.mxu0
      %v981 = vadd.f32 %v892, %v980
      %982 = vmatmul.bf16.gmra.mxu0 %v552
      %v983 = vpop.f32.mrf.mxu0
      %v984 = vadd.f32 %v895, %v983
      %v985 = vpop.f32.mrf.mxu0
      %v986 = vadd.f32 %v897, %v985
      %987 = vmatmul.bf16.gmra.mxu0 %v556
      %v988 = vpop.f32.mrf.mxu0
      %v989 = vadd.f32 %v900, %v988
      %v990 = vpop.f32.mrf.mxu0
      %v991 = vadd.f32 %v902, %v990
      %992 = vdwg.mxu0
      %993 = vmatpush.bf16.msra.mxu0 %v774
      %994 = vmatpush.bf16.msra.mxu0 %v773
      %995 = vmatpush.bf16.msra.mxu0 %v772
      %996 = vmatpush.bf16.msra.mxu0 %v771
      %997 = vmatpush.bf16.msra.mxu0 %v770
      %998 = vmatpush.bf16.msra.mxu0 %v769
      %999 = vmatpush.bf16.msra.mxu0 %v768
      %1000 = vmatpush.bf16.msra.mxu0 %v767
      %1001 = vmatmul.bf16.gmra.mxu0 %v497
      %v1002 = vpop.f32.mrf.mxu0
      %v1003 = vadd.f32 %v914, %v1002
      %v1004 = vpop.f32.mrf.mxu0
      %v1005 = vadd.f32 %v916, %v1004
      %1006 = vmatmul.bf16.gmra.mxu0 %v501
      %v1007 = vpop.f32.mrf.mxu0
      %v1008 = vadd.f32 %v919, %v1007
      %v1009 = vpop.f32.mrf.mxu0
      %v1010 = vadd.f32 %v921, %v1009
      %1011 = vmatmul.bf16.gmra.mxu0 %v505
      %v1012 = vpop.f32.mrf.mxu0
      %v1013 = vadd.f32 %v924, %v1012
      %v1014 = vpop.f32.mrf.mxu0
      %v1015 = vadd.f32 %v926, %v1014
      %1016 = vmatmul.bf16.gmra.mxu0 %v509
      %v1017 = vpop.f32.mrf.mxu0
      %v1018 = vadd.f32 %v929, %v1017
      %v1019 = vpop.f32.mrf.mxu0
      %v1020 = vadd.f32 %v931, %v1019
      %1021 = vmatmul.bf16.gmra.mxu0 %v513
      %v1022 = vpop.f32.mrf.mxu0
      %v1023 = vadd.f32 %v934, %v1022
      %v1024 = vpop.f32.mrf.mxu0
      %v1025 = vadd.f32 %v936, %v1024
      %1026 = vmatmul.bf16.gmra.mxu0 %v517
      %v1027 = vpop.f32.mrf.mxu0
      %v1028 = vadd.f32 %v939, %v1027
      %v1029 = vpop.f32.mrf.mxu0
      %v1030 = vadd.f32 %v941, %v1029
      %1031 = vmatmul.bf16.gmra.mxu0 %v521
      %v1032 = vpop.f32.mrf.mxu0
      %v1033 = vadd.f32 %v944, %v1032
      %v1034 = vpop.f32.mrf.mxu0
      %v1035 = vadd.f32 %v946, %v1034
      %1036 = vmatmul.bf16.gmra.mxu0 %v525
      %v1037 = vpop.f32.mrf.mxu0
      %v1038 = vadd.f32 %v949, %v1037
      %v1039 = vpop.f32.mrf.mxu0
      %v1040 = vadd.f32 %v951, %v1039
      %1041 = vmatmul.bf16.gmra.mxu0 %v529
      %v1042 = vpop.f32.mrf.mxu0
      %v1043 = vadd.f32 %v954, %v1042
      %v1044 = vpop.f32.mrf.mxu0
      %v1045 = vadd.f32 %v956, %v1044
      %1046 = vmatmul.bf16.gmra.mxu0 %v533
      %v1047 = vpop.f32.mrf.mxu0
      %v1048 = vadd.f32 %v959, %v1047
      %v1049 = vpop.f32.mrf.mxu0
      %v1050 = vadd.f32 %v961, %v1049
      %1051 = vmatmul.bf16.gmra.mxu0 %v537
      %v1052 = vpop.f32.mrf.mxu0
      %v1053 = vadd.f32 %v964, %v1052
      %v1054 = vpop.f32.mrf.mxu0
      %v1055 = vadd.f32 %v966, %v1054
      %1056 = vmatmul.bf16.gmra.mxu0 %v541
      %v1057 = vpop.f32.mrf.mxu0
      %v1058 = vadd.f32 %v969, %v1057
      %v1059 = vpop.f32.mrf.mxu0
      %v1060 = vadd.f32 %v971, %v1059
      %1061 = vmatmul.bf16.gmra.mxu0 %v545
      %v1062 = vpop.f32.mrf.mxu0
      %v1063 = vadd.f32 %v974, %v1062
      %v1064 = vpop.f32.mrf.mxu0
      %v1065 = vadd.f32 %v976, %v1064
      %1066 = vmatmul.bf16.gmra.mxu0 %v549
      %v1067 = vpop.f32.mrf.mxu0
      %v1068 = vadd.f32 %v979, %v1067
      %v1069 = vpop.f32.mrf.mxu0
      %v1070 = vadd.f32 %v981, %v1069
      %1071 = vmatmul.bf16.gmra.mxu0 %v553
      %v1072 = vpop.f32.mrf.mxu0
      %v1073 = vadd.f32 %v984, %v1072
      %v1074 = vpop.f32.mrf.mxu0
      %v1075 = vadd.f32 %v986, %v1074
      %1076 = vmatmul.bf16.gmra.mxu0 %v557
      %v1077 = vpop.f32.mrf.mxu0
      %v1078 = vadd.f32 %v989, %v1077
      %v1079 = vpop.f32.mrf.mxu0
      %v1080 = vadd.f32 %v991, %v1079
      %1081 = vdwg.mxu0
      %1082 = vmatpush.bf16.msra.mxu0 %v782
      %1083 = vmatpush.bf16.msra.mxu0 %v781
      %1084 = vmatpush.bf16.msra.mxu0 %v780
      %1085 = vmatpush.bf16.msra.mxu0 %v779
      %1086 = vmatpush.bf16.msra.mxu0 %v778
      %1087 = vmatpush.bf16.msra.mxu0 %v777
      %1088 = vmatpush.bf16.msra.mxu0 %v776
      %1089 = vmatpush.bf16.msra.mxu0 %v775
      %1090 = vmatmul.bf16.gmra.mxu0 %v498
      %v1091 = vpop.f32.mrf.mxu0
      %v1092 = vadd.f32 %v1003, %v1091
      %v1093 = vpop.f32.mrf.mxu0
      %v1094 = vadd.f32 %v1005, %v1093
      %1095 = vmatmul.bf16.gmra.mxu0 %v502
      %v1096 = vpop.f32.mrf.mxu0
      %v1097 = vadd.f32 %v1008, %v1096
      %v1098 = vpop.f32.mrf.mxu0
      %v1099 = vadd.f32 %v1010, %v1098
      %1100 = vmatmul.bf16.gmra.mxu0 %v506
      %v1101 = vpop.f32.mrf.mxu0
      %v1102 = vadd.f32 %v1013, %v1101
      %v1103 = vpop.f32.mrf.mxu0
      %v1104 = vadd.f32 %v1015, %v1103
      %1105 = vmatmul.bf16.gmra.mxu0 %v510
      %v1106 = vpop.f32.mrf.mxu0
      %v1107 = vadd.f32 %v1018, %v1106
      %v1108 = vpop.f32.mrf.mxu0
      %v1109 = vadd.f32 %v1020, %v1108
      %1110 = vmatmul.bf16.gmra.mxu0 %v514
      %v1111 = vpop.f32.mrf.mxu0
      %v1112 = vadd.f32 %v1023, %v1111
      %v1113 = vpop.f32.mrf.mxu0
      %v1114 = vadd.f32 %v1025, %v1113
      %1115 = vmatmul.bf16.gmra.mxu0 %v518
      %v1116 = vpop.f32.mrf.mxu0
      %v1117 = vadd.f32 %v1028, %v1116
      %v1118 = vpop.f32.mrf.mxu0
      %v1119 = vadd.f32 %v1030, %v1118
      %1120 = vmatmul.bf16.gmra.mxu0 %v522
      %v1121 = vpop.f32.mrf.mxu0
      %v1122 = vadd.f32 %v1033, %v1121
      %v1123 = vpop.f32.mrf.mxu0
      %v1124 = vadd.f32 %v1035, %v1123
      %1125 = vmatmul.bf16.gmra.mxu0 %v526
      %v1126 = vpop.f32.mrf.mxu0
      %v1127 = vadd.f32 %v1038, %v1126
      %v1128 = vpop.f32.mrf.mxu0
      %v1129 = vadd.f32 %v1040, %v1128
      %1130 = vmatmul.bf16.gmra.mxu0 %v530
      %v1131 = vpop.f32.mrf.mxu0
      %v1132 = vadd.f32 %v1043, %v1131
      %v1133 = vpop.f32.mrf.mxu0
      %v1134 = vadd.f32 %v1045, %v1133
      %1135 = vmatmul.bf16.gmra.mxu0 %v534
      %v1136 = vpop.f32.mrf.mxu0
      %v1137 = vadd.f32 %v1048, %v1136
      %v1138 = vpop.f32.mrf.mxu0
      %v1139 = vadd.f32 %v1050, %v1138
      %1140 = vmatmul.bf16.gmra.mxu0 %v538
      %v1141 = vpop.f32.mrf.mxu0
      %v1142 = vadd.f32 %v1053, %v1141
      %v1143 = vpop.f32.mrf.mxu0
      %v1144 = vadd.f32 %v1055, %v1143
      %1145 = vmatmul.bf16.gmra.mxu0 %v542
      %v1146 = vpop.f32.mrf.mxu0
      %v1147 = vadd.f32 %v1058, %v1146
      %v1148 = vpop.f32.mrf.mxu0
      %v1149 = vadd.f32 %v1060, %v1148
      %1150 = vmatmul.bf16.gmra.mxu0 %v546
      %v1151 = vpop.f32.mrf.mxu0
      %v1152 = vadd.f32 %v1063, %v1151
      %v1153 = vpop.f32.mrf.mxu0
      %v1154 = vadd.f32 %v1065, %v1153
      %1155 = vmatmul.bf16.gmra.mxu0 %v550
      %v1156 = vpop.f32.mrf.mxu0
      %v1157 = vadd.f32 %v1068, %v1156
      %v1158 = vpop.f32.mrf.mxu0
      %v1159 = vadd.f32 %v1070, %v1158
      %1160 = vmatmul.bf16.gmra.mxu0 %v554
      %v1161 = vpop.f32.mrf.mxu0
      %v1162 = vadd.f32 %v1073, %v1161
      %v1163 = vpop.f32.mrf.mxu0
      %v1164 = vadd.f32 %v1075, %v1163
      %1165 = vmatmul.bf16.gmra.mxu0 %v558
      %v1166 = vpop.f32.mrf.mxu0
      %v1167 = vadd.f32 %v1078, %v1166
      %v1168 = vpop.f32.mrf.mxu0
      %v1169 = vadd.f32 %v1080, %v1168
      %1170 = vdwg.mxu0
      %1171 = vxpose.xlu0.b32.start [1/16] %v1092, 128
      %1172 = vxpose.xlu0.b32.cont [2/16] %v1094, 128
      %1173 = vxpose.xlu0.b32.cont [3/16] %v1097, 128
      %1174 = vxpose.xlu0.b32.cont [4/16] %v1099, 128
      %1175 = vxpose.xlu0.b32.cont [5/16] %v1102, 128
      %1176 = vxpose.xlu0.b32.cont [6/16] %v1104, 128
      %1177 = vxpose.xlu0.b32.cont [7/16] %v1107, 128
      %1178 = vxpose.xlu0.b32.cont [8/16] %v1109, 128
      %1179 = vxpose.xlu0.b32.cont [9/16] %v1112, 128
      %1180 = vxpose.xlu0.b32.cont [10/16] %v1114, 128
      %1181 = vxpose.xlu0.b32.cont [11/16] %v1117, 128
      %1182 = vxpose.xlu0.b32.cont [12/16] %v1119, 128
      %1183 = vxpose.xlu0.b32.cont [13/16] %v1122, 128
      %1184 = vxpose.xlu0.b32.cont [14/16] %v1124, 128
      %1185 = vxpose.xlu0.b32.cont [15/16] %v1127, 128
      %1186 = vxpose.xlu0.b32.end [16/16] %v1129, 128
      %v1187 = vpop.trf.xlu0
      %v1188 = vpop.trf.xlu0
      %v1189 = vpop.trf.xlu0
      %v1190 = vpop.trf.xlu0
      %v1191 = vpop.trf.xlu0
      %v1192 = vpop.trf.xlu0
      %v1193 = vpop.trf.xlu0
      %v1194 = vpop.trf.xlu0
      %v1195 = vpop.trf.xlu0
      %v1196 = vpop.trf.xlu0
      %v1197 = vpop.trf.xlu0
      %v1198 = vpop.trf.xlu0
      %v1199 = vpop.trf.xlu0
      %v1200 = vpop.trf.xlu0
      %v1201 = vpop.trf.xlu0
      %v1202 = vpop.trf.xlu0
      %1203 = vxpose.xlu0.b32.start [1/16] %v1132, 128
      %1204 = vxpose.xlu0.b32.cont [2/16] %v1134, 128
      %1205 = vxpose.xlu0.b32.cont [3/16] %v1137, 128
      %1206 = vxpose.xlu0.b32.cont [4/16] %v1139, 128
      %1207 = vxpose.xlu0.b32.cont [5/16] %v1142, 128
      %1208 = vxpose.xlu0.b32.cont [6/16] %v1144, 128
      %1209 = vxpose.xlu0.b32.cont [7/16] %v1147, 128
      %1210 = vxpose.xlu0.b32.cont [8/16] %v1149, 128
      %1211 = vxpose.xlu0.b32.cont [9/16] %v1152, 128
      %1212 = vxpose.xlu0.b32.cont [10/16] %v1154, 128
      %1213 = vxpose.xlu0.b32.cont [11/16] %v1157, 128
      %1214 = vxpose.xlu0.b32.cont [12/16] %v1159, 128
      %1215 = vxpose.xlu0.b32.cont [13/16] %v1162, 128
      %1216 = vxpose.xlu0.b32.cont [14/16] %v1164, 128
      %1217 = vxpose.xlu0.b32.cont [15/16] %v1167, 128
      %1218 = vxpose.xlu0.b32.end [16/16] %v1169, 128
      %v1219 = vpop.trf.xlu0
      %v1220 = vpop.trf.xlu0
      %v1221 = vpop.trf.xlu0
      %v1222 = vpop.trf.xlu0
      %v1223 = vpop.trf.xlu0
      %v1224 = vpop.trf.xlu0
      %v1225 = vpop.trf.xlu0
      %v1226 = vpop.trf.xlu0
      %v1227 = vpop.trf.xlu0
      %v1228 = vpop.trf.xlu0
      %v1229 = vpop.trf.xlu0
      %v1230 = vpop.trf.xlu0
      %v1231 = vpop.trf.xlu0
      %v1232 = vpop.trf.xlu0
      %v1233 = vpop.trf.xlu0
      %v1234 = vpop.trf.xlu0
      %v1235 = vtanh.pop %v1187
      %v1236 = vtanh.pop %v1219
      %1237 = vst [vmem:[%s170] sm:$0xff] %v1235
      %1238 = vst [vmem:[%s170 + $0x8] sm:$0xff] %v1236
      %p1239 = scmp.lt.s32.totalorder %s14, 1
      %s1240 = scalar_select %p1239, %s14, 1
      %s1241 = smul.addr %s1240, 2
      %s1242 = smul.addr %s1241, 8
      %s1243 = scalar_lea.vmem %s3, %s1242
      // Predicated region
      $region33: #{generator_forward.19} parent=31 // pred_check
        %p1244 = pneg %p100
      $region34: #{generator_forward.19} parent=31 // pred_check_branch
        %1246 = sbr.rel (%p1244) target = $region36
      $region35: #{generator_forward.19} parent=31 // pred_region
        _
      $region36: #{generator_forward.19} parent=31 // pred_fallthru
        _
    $region32: #{generator_forward.19} parent=5 // pred_fallthru
      _
    %p1247 = scmp.le.s32.totalorder 2, %s9
    // Predicated region
    $region37: #{generator_forward.19} parent=5 // pred_check
      %p1248 = pneg %p1247
    $region38: #{generator_forward.19} parent=5 // pred_check_branch
      %1250 = sbr.rel (%p1248) target = $region40
    $region39: #{generator_forward.19} parent=5 // pred_region
      %s1251 = ssub.s32 %s9, 2
      // Predicated region
      $region41: #{generator_forward.19} parent=39 // pred_check
        %p1252 = pneg %p106
      $region42: #{generator_forward.19} parent=39 // pred_check_branch
        %1254 = sbr.rel (%p1252) target = $region44
      $region43: #{generator_forward.19} parent=39 // pred_region
        %p1255 = scmp.lt.s32.totalorder %s15, 1
        %s1256 = scalar_select %p1255, %s15, 1
        %s1257 = smul.addr %s1256, 2
        %s1258 = smul.addr %s1257, 8
        %s1259 = scalar_lea.vmem %s3, %s1258
      $region44: #{generator_forward.19} parent=39 // pred_fallthru
        _
    $region40: #{generator_forward.19} parent=5 // pred_fallthru
      _
  $region6: #{generator_forward.19} parent=0 // loop_footer
    %s13 = sadd.s32 1, %s9
  $region7: #{generator_forward.19} parent=0 // loop_footer_branch
    %8 = sbr.rel target = $region3
  $region8: #{generator_forward.19} parent=0 // loop_exit
    _

</llo_original>
